<compile_context>
chip_gen: v5e
topology: v5e:2x2
jax: 0.10.0
libtpu: 0.0.40
codegen_flags: <defaults>
</compile_context>

<pallas_src>
import numpy as np

import jax
import jax.numpy as jnp
from jax.experimental import pallas as pl
from jax.experimental.pallas import tpu as pltpu


# ------------------------------ fused kernel --------------------------------

def _make_kernel(K, P2):
    """Builds the fused LeNet forward kernel (K = conv kernel size, P2 = pool2 side)."""

    def dot(a, b):
        return jnp.dot(a, b, preferred_element_type=jnp.float32,
                       precision=jax.lax.Precision.HIGHEST)

    def sigmoid(z):
        # Exact sigmoid on the (otherwise idle) EUP slot; no approx reciprocal,
        # no exp overflow for large |z|.
        return 0.5 * jnp.tanh(0.5 * z) + 0.5

    def kernel(xs_ref,             # (Cin*K*H0, N*H0)   im2row'd input (kj pre-shifted)
               w1b_ref, b1_ref,    # (C1*H1, Cin*K*H0), (C1*H1, 1)   banded conv1
               e1_ref, o1_ref,     # (C1*P1, C1*H1)     pool1 even/odd row selectors
               se_ref, so_ref,     # (K, N*H0, N*P1)    pool1 col selectors (+kj shift)
               w2b_ref, b2_ref,    # (K, C2*H2, C1*P1), (C2*H2, 1)   banded conv2
               e2_ref, o2_ref,     # (C2*P2, C2*H2)     pool2 even/odd row selectors
               ce_ref, co_ref,     # (P2, N*P1, N)      pool2 col selectors
               w1f_ref, fb1_ref,   # (P2, L1, C2*P2), (L1, 1)   fc1 w/ flatten folded in
               w2t_ref, fb2_ref,   # (NC, L1), (NC, 1)  fc2
               out_ref):           # (NC, N)            log-probs, classes on sublanes
        # ---- conv1 + sigmoid: one banded MXU matmul over (ci, kj, input-row) ----
        a1 = sigmoid(dot(w1b_ref[...], xs_ref[...]) + b1_ref[...])      # (C1*H1, N*H0)

        # ---- pool1 row-pair max (even/odd row-select matmuls) ----
        rm1 = jnp.maximum(dot(e1_ref[...], a1), dot(o1_ref[...], a1))   # (C1*P1, N*H0)

        # ---- pool1 column max (kj shift folded into selectors) + conv2 as K
        #      channel/row-contraction matmuls against host-banded weights ----
        pre2 = b2_ref[...]                                              # (C2*H2, 1) bcast
        for kj in range(K):
            pk = jnp.maximum(dot(rm1, se_ref[kj]), dot(rm1, so_ref[kj]))  # (C1*P1, N*P1)
            pre2 = pre2 + dot(w2b_ref[kj], pk)                            # (C2*H2, N*P1)
        a2 = sigmoid(pre2)

        # ---- pool2 row-pair max ----
        rm2 = jnp.maximum(dot(e2_ref[...], a2), dot(o2_ref[...], a2))   # (C2*P2, N*P1)

        # ---- pool2 column max + flatten + fc1 (flatten order folded into w1f) ----
        pre_h = fb1_ref[...]                                            # (L1, 1) bcast
        for q2 in range(P2):
            v = jnp.maximum(dot(rm2, ce_ref[q2]), dot(rm2, co_ref[q2]))   # (C2*P2, N)
            pre_h = pre_h + dot(w1f_ref[q2], v)                           # (L1, N)
        h1 = sigmoid(pre_h)                                             # (L1, N)

        # ---- fc2 + log_softmax over classes (class dim on sublanes) ----
        logits = dot(w2t_ref[...], h1) + fb2_ref[...]                   # (NC, N)
        z = logits - jnp.max(logits, axis=0, keepdims=True)
        out_ref[...] = z - jnp.log(jnp.sum(jnp.exp(z), axis=0, keepdims=True))

    return kernel


# --------------------------- host-side preparation ---------------------------

def _select_matrix(shape, rows, cols):
    m = np.zeros(shape, np.float32)
    m[rows, cols] = 1.0
    return jnp.asarray(m)


def _build_static_mats(N, C1, C2, K, H0, H1, P1, H2, P2):
    """0/1 pooling-selection matrices (data/weight independent)."""
    # pool1 even/odd row selectors: row c*P1+r picks conv1 row c*H1 + 2r (+1).
    c = np.repeat(np.arange(C1), P1)
    r = np.tile(np.arange(P1), C1)
    rows = c * P1 + r
    E1 = _select_matrix((C1 * P1, C1 * H1), rows, c * H1 + 2 * r)
    O1 = _select_matrix((C1 * P1, C1 * H1), rows, c * H1 + 2 * r + 1)

    # pool1 column selectors with the conv2 kj-shift folded in:
    # (rm1 @ SE[kj])[c*P1+r, n*P1+w] = rm1[c*P1+r, n*H0 + 2*(w+kj)].
    SE = np.zeros((K, N * H0, N * P1), np.float32)
    SO = np.zeros((K, N * H0, N * P1), np.float32)
    for kj in range(K):
        for n in range(N):
            for w in range(P1):
                if w + kj <= P1 - 1:
                    SE[kj, n * H0 + 2 * (w + kj),     n * P1 + w] = 1.0
                    SO[kj, n * H0 + 2 * (w + kj) + 1, n * P1 + w] = 1.0

    # pool2 even/odd row selectors.
    co = np.repeat(np.arange(C2), P2)
    r2 = np.tile(np.arange(P2), C2)
    rows2 = co * P2 + r2
    E2 = _select_matrix((C2 * P2, C2 * H2), rows2, co * H2 + 2 * r2)
    O2 = _select_matrix((C2 * P2, C2 * H2), rows2, co * H2 + 2 * r2 + 1)

    # pool2 column selectors: (rm2 @ CE[q2])[., n] = rm2[., n*P1 + 2*q2 (+1)].
    CE = np.zeros((P2, N * P1, N), np.float32)
    CO = np.zeros((P2, N * P1, N), np.float32)
    for q2 in range(P2):
        for n in range(N):
            CE[q2, n * P1 + 2 * q2,     n] = 1.0
            CO[q2, n * P1 + 2 * q2 + 1, n] = 1.0

    return E1, O1, jnp.asarray(SE), jnp.asarray(SO), E2, O2, jnp.asarray(CE), jnp.asarray(CO)


def _band_conv1(w1, H1, K, H0):
    """W1b[co*H1+i, (ci*K+kj)*H0+h] = w1[co, ci, h-i, kj] for 0 <= h-i < K."""
    C1, Cin = w1.shape[0], w1.shape[1]
    i = np.arange(H1)[:, None]
    h = np.arange(H0)[None, :]
    d = h - i
    valid = (d >= 0) & (d < K)
    dcl = np.clip(d, 0, K - 1)
    g = w1[:, :, dcl, :]                                   # (C1, Cin, H1, H0, K)
    g = g * jnp.asarray(valid.astype(np.float32))[None, None, :, :, None]
    g = jnp.transpose(g, (0, 2, 1, 4, 3))                  # (C1, H1, Cin, K, H0)
    return g.reshape(C1 * H1, Cin * K * H0)


def _band_conv2(w2, H2, K, P1):
    """W2b[kj, co*H2+i, c*P1+h] = w2[co, c, h-i, kj] for 0 <= h-i < K."""
    C2, C1 = w2.shape[0], w2.shape[1]
    i = np.arange(H2)[:, None]
    h = np.arange(P1)[None, :]
    d = h - i
    valid = (d >= 0) & (d < K)
    dcl = np.clip(d, 0, K - 1)
    g = w2[:, :, dcl, :]                                   # (C2, C1, H2, P1, K)
    g = g * jnp.asarray(valid.astype(np.float32))[None, None, :, :, None]
    g = jnp.transpose(g, (4, 0, 2, 1, 3))                  # (kj, C2, H2, C1, P1)
    return g.reshape(K, C2 * H2, C1 * P1)


def _fold_fc1(fc1_w, C2, P2, L1):
    """W1f[q2, l, co*P2+r2] = fc1_w[co*P2*P2 + r2*P2 + q2, l]  (flatten = (c,h,w))."""
    w = fc1_w.reshape(C2, P2, P2, L1)                      # [co, r2, q2, l]
    w = jnp.transpose(w, (2, 3, 0, 1))                     # [q2, l, co, r2]
    return w.reshape(P2, L1, C2 * P2)


def _prep_x(x, K, H0, N):
    """xs[(ci*K+kj)*H0 + h, n*H0 + j] = x[n, ci, h, j+kj]  (0 beyond the edge)."""
    xp = jnp.pad(x, ((0, 0), (0, 0), (0, 0), (0, K - 1)))
    cols = []
    for kj in range(K):
        s = xp[:, :, :, kj:kj + H0]                        # (N, Cin, H0, H0)
        cols.append(jnp.transpose(s, (1, 2, 0, 3)))        # (Cin, H0, N, H0)
    xs = jnp.stack(cols, axis=1)                           # (Cin, K, H0, N, H0)
    return xs.reshape(-1, N * H0)


# --------------------------------- wrapper -----------------------------------

def make_lenet_forward(filter_size=4, kernel_size=3, l1_size=32,
                       in_hw=16, in_channels=1, n_classes=10):
    C1, C2, K, H0 = filter_size, filter_size * 2, kernel_size, in_hw
    H1 = H0 - K + 1
    P1 = H1 // 2
    H2 = P1 - K + 1
    P2 = H2 // 2

    def forward(params, x):
        N = x.shape[0]
        E1, O1, SE, SO, E2, O2, CE, CO = _build_static_mats(
            N, C1, C2, K, H0, H1, P1, H2, P2)

        xs = _prep_x(x.astype(jnp.float32), K, H0, N)
        w1b = _band_conv1(params["conv1_w"].astype(jnp.float32), H1, K, H0)
        b1r = jnp.repeat(params["conv1_b"].astype(jnp.float32), H1)[:, None]
        w2b = _band_conv2(params["conv2_w"].astype(jnp.float32), H2, K, P1)
        b2r = jnp.repeat(params["conv2_b"].astype(jnp.float32), H2)[:, None]
        w1f = _fold_fc1(params["fc1_w"].astype(jnp.float32), C2, P2, l1_size)
        fb1 = params["fc1_b"].astype(jnp.float32)[:, None]
        w2t = params["fc2_w"].astype(jnp.float32).T
        fb2 = params["fc2_b"].astype(jnp.float32)[:, None]

        operands = (xs, w1b, b1r, E1, O1, SE, SO, w2b, b2r,
                    E2, O2, CE, CO, w1f, fb1, w2t, fb2)
        vmem = pl.BlockSpec(memory_space=pltpu.MemorySpace.VMEM)

        out_t = pl.pallas_call(
            _make_kernel(K, P2),
            out_shape=jax.ShapeDtypeStruct((n_classes, N), jnp.float32),
            in_specs=[vmem] * len(operands),
            out_specs=vmem,
        )(*operands)
        # Batch lives on lanes inside the kernel; tiny host transpose at the end.
        return out_t.T

    return forward


# ------------------------------ params / reference ---------------------------

def init_params(key, filter_size=4, kernel_size=3, l1_size=32,
                in_hw=16, in_channels=1):
    k = jax.random.split(key, 8)
    f, ks = filter_size, kernel_size
    # spatial trace to get fc1 in_features (mirrors the lazy fc1 in PyTorch)
    h = in_hw - ks + 1
    h = h // 2
    h = h - ks + 1
    h = h // 2
    fc1_in = (f * 2) * h * h
    scale = 0.5
    return {
        "conv1_w": scale * jax.random.normal(k[0], (f, in_channels, ks, ks), jnp.float32),
        "conv1_b": scale * jax.random.normal(k[1], (f,), jnp.float32),
        "conv2_w": scale * jax.random.normal(k[2], (f * 2, f, ks, ks), jnp.float32),
        "conv2_b": scale * jax.random.normal(k[3], (f * 2,), jnp.float32),
        "fc1_w": scale * jax.random.normal(k[4], (fc1_in, l1_size), jnp.float32),
        "fc1_b": scale * jax.random.normal(k[5], (l1_size,), jnp.float32),
        "fc2_w": scale * jax.random.normal(k[6], (l1_size, 10), jnp.float32),
        "fc2_b": scale * jax.random.normal(k[7], (10,), jnp.float32),
    }


def lenet_reference(params, x):
    """Pure-JAX (XLA) forward pass, used only to validate the Pallas kernel."""
    hi = jax.lax.Precision.HIGHEST

    def conv_sig(x, w, b):
        y = jax.lax.conv_general_dilated(
            x, w, (1, 1), "VALID",
            dimension_numbers=("NCHW", "OIHW", "NCHW"), precision=hi)
        return jax.nn.sigmoid(y + b[None, :, None, None])

    def pool(x):
        return jax.lax.reduce_window(
            x, -jnp.inf, jax.lax.max, (1, 1, 2, 2), (1, 1, 2, 2), "VALID")

    x = pool(conv_sig(x, params["conv1_w"], params["conv1_b"]))
    x = pool(conv_sig(x, params["conv2_w"], params["conv2_b"]))
    x = x.reshape(x.shape[0], -1)
    x = jax.nn.sigmoid(jnp.dot(x, params["fc1_w"], precision=hi) + params["fc1_b"])
    x = jnp.dot(x, params["fc2_w"], precision=hi) + params["fc2_b"]
    return jax.nn.log_softmax(x, axis=-1)


# ----------------------------------- main ------------------------------------

if __name__ == "__main__":
    key = jax.random.PRNGKey(0)
    k_x, k_p = jax.random.split(key)

    batch, in_channels, hw = 2, 1, 16
    x = jax.random.normal(k_x, (batch, in_channels, hw, hw), jnp.float32)
    params = init_params(k_p, filter_size=4, kernel_size=3, l1_size=32,
                         in_hw=hw, in_channels=in_channels)

    forward = jax.jit(make_lenet_forward(filter_size=4, kernel_size=3,
                                         l1_size=32, in_hw=hw,
                                         in_channels=in_channels))
    out = jax.block_until_ready(forward(params, x))

    assert out.shape == (batch, 10), out.shape
    # rows of exp(log_softmax) must sum to 1
    assert jnp.allclose(jnp.sum(jnp.exp(out), axis=1), 1.0, atol=1e-4)
    # cross-check against the pure-JAX reference (exact sigmoid + HIGHEST-precision
    # matmuls -> agreement to ~1e-6; assert at a comfortable 1e-3)
    ref = lenet_reference(params, x)
    assert jnp.allclose(out, ref, atol=1e-3, rtol=0.0), \
        float(jnp.max(jnp.abs(out - ref)))

    print("KERNEL_OK")
</pallas_src>

<mosaic_0001>
module attributes {stable_mosaic.version = 11 : i64} {
  func.func @kernel(%arg0: memref<48x32xf32, #tpu.memory_space<vmem>>, %arg1: memref<56x48xf32, #tpu.memory_space<vmem>>, %arg2: memref<56x1xf32, #tpu.memory_space<vmem>>, %arg3: memref<28x56xf32, #tpu.memory_space<vmem>>, %arg4: memref<28x56xf32, #tpu.memory_space<vmem>>, %arg5: memref<3x32x14xf32, #tpu.memory_space<vmem>>, %arg6: memref<3x32x14xf32, #tpu.memory_space<vmem>>, %arg7: memref<3x40x28xf32, #tpu.memory_space<vmem>>, %arg8: memref<40x1xf32, #tpu.memory_space<vmem>>, %arg9: memref<16x40xf32, #tpu.memory_space<vmem>>, %arg10: memref<16x40xf32, #tpu.memory_space<vmem>>, %arg11: memref<2x14x2xf32, #tpu.memory_space<vmem>>, %arg12: memref<2x14x2xf32, #tpu.memory_space<vmem>>, %arg13: memref<2x32x16xf32, #tpu.memory_space<vmem>>, %arg14: memref<32x1xf32, #tpu.memory_space<vmem>>, %arg15: memref<10x32xf32, #tpu.memory_space<vmem>>, %arg16: memref<10x1xf32, #tpu.memory_space<vmem>>, %arg17: memref<10x2xf32, #tpu.memory_space<vmem>>) attributes {dimension_semantics = [], scalar_prefetch = 0 : i64, scratch_operands = 0 : i64, tpu.core_type = #tpu.core_type<tc>} {
    %c0 = arith.constant 0 : index
    %c0_0 = arith.constant 0 : index
    %0 = vector.load %arg1[%c0, %c0_0] : memref<56x48xf32, #tpu.memory_space<vmem>>, vector<56x48xf32>
    %c0_1 = arith.constant 0 : index
    %c0_2 = arith.constant 0 : index
    %1 = vector.load %arg0[%c0_1, %c0_2] : memref<48x32xf32, #tpu.memory_space<vmem>>, vector<48x32xf32>
    %cst = arith.constant dense<0.000000e+00> : vector<56x32xf32>
    %2 = tpu.matmul %0, %1, %cst {dimension_numbers = #tpu.dot_dimension_numbers<[1], [0], [0], [1], [0, 0, 1, 1], [], []>, precision = #tpu.contract_precision<fp32>} : vector<56x48xf32>, vector<48x32xf32>, vector<56x32xf32> -> vector<56x32xf32>
    %c0_3 = arith.constant 0 : index
    %c0_4 = arith.constant 0 : index
    %3 = vector.load %arg2[%c0_3, %c0_4] : memref<56x1xf32, #tpu.memory_space<vmem>>, vector<56x1xf32>
    %4 = vector.broadcast %3 : vector<56x1xf32> to vector<56x32xf32>
    %5 = arith.addf %2, %4 : vector<56x32xf32>
    %cst_5 = arith.constant 5.000000e-01 : f32
    %6 = vector.broadcast %cst_5 : f32 to vector<56x32xf32>
    %7 = arith.mulf %6, %5 : vector<56x32xf32>
    %8 = math.tanh %7 : vector<56x32xf32>
    %cst_6 = arith.constant 5.000000e-01 : f32
    %9 = vector.broadcast %cst_6 : f32 to vector<56x32xf32>
    %10 = arith.mulf %9, %8 : vector<56x32xf32>
    %cst_7 = arith.constant 5.000000e-01 : f32
    %11 = vector.broadcast %cst_7 : f32 to vector<56x32xf32>
    %12 = arith.addf %10, %11 : vector<56x32xf32>
    %c0_8 = arith.constant 0 : index
    %c0_9 = arith.constant 0 : index
    %13 = vector.load %arg3[%c0_8, %c0_9] : memref<28x56xf32, #tpu.memory_space<vmem>>, vector<28x56xf32>
    %cst_10 = arith.constant dense<0.000000e+00> : vector<28x32xf32>
    %14 = tpu.matmul %13, %12, %cst_10 {dimension_numbers = #tpu.dot_dimension_numbers<[1], [0], [0], [1], [0, 0, 1, 1], [], []>, precision = #tpu.contract_precision<fp32>} : vector<28x56xf32>, vector<56x32xf32>, vector<28x32xf32> -> vector<28x32xf32>
    %c0_11 = arith.constant 0 : index
    %c0_12 = arith.constant 0 : index
    %15 = vector.load %arg4[%c0_11, %c0_12] : memref<28x56xf32, #tpu.memory_space<vmem>>, vector<28x56xf32>
    %cst_13 = arith.constant dense<0.000000e+00> : vector<28x32xf32>
    %16 = tpu.matmul %15, %12, %cst_13 {dimension_numbers = #tpu.dot_dimension_numbers<[1], [0], [0], [1], [0, 0, 1, 1], [], []>, precision = #tpu.contract_precision<fp32>} : vector<28x56xf32>, vector<56x32xf32>, vector<28x32xf32> -> vector<28x32xf32>
    %17 = arith.maximumf %14, %16 : vector<28x32xf32>
    %c0_14 = arith.constant 0 : index
    %c0_15 = arith.constant 0 : index
    %18 = vector.load %arg8[%c0_14, %c0_15] : memref<40x1xf32, #tpu.memory_space<vmem>>, vector<40x1xf32>
    %c0_16 = arith.constant 0 : index
    %c0_17 = arith.constant 0 : index
    %c0_18 = arith.constant 0 : index
    %19 = vector.load %arg5[%c0_16, %c0_17, %c0_18] : memref<3x32x14xf32, #tpu.memory_space<vmem>>, vector<1x32x14xf32>
    %20 = vector.shape_cast %19 : vector<1x32x14xf32> to vector<32x14xf32>
    %cst_19 = arith.constant dense<0.000000e+00> : vector<28x14xf32>
    %21 = tpu.matmul %17, %20, %cst_19 {dimension_numbers = #tpu.dot_dimension_numbers<[1], [0], [0], [1], [0, 0, 1, 1], [], []>, precision = #tpu.contract_precision<fp32>} : vector<28x32xf32>, vector<32x14xf32>, vector<28x14xf32> -> vector<28x14xf32>
    %c0_20 = arith.constant 0 : index
    %c0_21 = arith.constant 0 : index
    %c0_22 = arith.constant 0 : index
    %22 = vector.load %arg6[%c0_20, %c0_21, %c0_22] : memref<3x32x14xf32, #tpu.memory_space<vmem>>, vector<1x32x14xf32>
    %23 = vector.shape_cast %22 : vector<1x32x14xf32> to vector<32x14xf32>
    %cst_23 = arith.constant dense<0.000000e+00> : vector<28x14xf32>
    %24 = tpu.matmul %17, %23, %cst_23 {dimension_numbers = #tpu.dot_dimension_numbers<[1], [0], [0], [1], [0, 0, 1, 1], [], []>, precision = #tpu.contract_precision<fp32>} : vector<28x32xf32>, vector<32x14xf32>, vector<28x14xf32> -> vector<28x14xf32>
    %25 = arith.maximumf %21, %24 : vector<28x14xf32>
    %c0_24 = arith.constant 0 : index
    %c0_25 = arith.constant 0 : index
    %c0_26 = arith.constant 0 : index
    %26 = vector.load %arg7[%c0_24, %c0_25, %c0_26] : memref<3x40x28xf32, #tpu.memory_space<vmem>>, vector<1x40x28xf32>
    %27 = vector.shape_cast %26 : vector<1x40x28xf32> to vector<40x28xf32>
    %cst_27 = arith.constant dense<0.000000e+00> : vector<40x14xf32>
    %28 = tpu.matmul %27, %25, %cst_27 {dimension_numbers = #tpu.dot_dimension_numbers<[1], [0], [0], [1], [0, 0, 1, 1], [], []>, precision = #tpu.contract_precision<fp32>} : vector<40x28xf32>, vector<28x14xf32>, vector<40x14xf32> -> vector<40x14xf32>
    %29 = vector.broadcast %18 : vector<40x1xf32> to vector<40x14xf32>
    %30 = arith.addf %29, %28 : vector<40x14xf32>
    %c1 = arith.constant 1 : index
    %c0_28 = arith.constant 0 : index
    %c0_29 = arith.constant 0 : index
    %31 = vector.load %arg5[%c1, %c0_28, %c0_29] : memref<3x32x14xf32, #tpu.memory_space<vmem>>, vector<1x32x14xf32>
    %32 = vector.shape_cast %31 : vector<1x32x14xf32> to vector<32x14xf32>
    %cst_30 = arith.constant dense<0.000000e+00> : vector<28x14xf32>
    %33 = tpu.matmul %17, %32, %cst_30 {dimension_numbers = #tpu.dot_dimension_numbers<[1], [0], [0], [1], [0, 0, 1, 1], [], []>, precision = #tpu.contract_precision<fp32>} : vector<28x32xf32>, vector<32x14xf32>, vector<28x14xf32> -> vector<28x14xf32>
    %c1_31 = arith.constant 1 : index
    %c0_32 = arith.constant 0 : index
    %c0_33 = arith.constant 0 : index
    %34 = vector.load %arg6[%c1_31, %c0_32, %c0_33] : memref<3x32x14xf32, #tpu.memory_space<vmem>>, vector<1x32x14xf32>
    %35 = vector.shape_cast %34 : vector<1x32x14xf32> to vector<32x14xf32>
    %cst_34 = arith.constant dense<0.000000e+00> : vector<28x14xf32>
    %36 = tpu.matmul %17, %35, %cst_34 {dimension_numbers = #tpu.dot_dimension_numbers<[1], [0], [0], [1], [0, 0, 1, 1], [], []>, precision = #tpu.contract_precision<fp32>} : vector<28x32xf32>, vector<32x14xf32>, vector<28x14xf32> -> vector<28x14xf32>
    %37 = arith.maximumf %33, %36 : vector<28x14xf32>
    %c1_35 = arith.constant 1 : index
    %c0_36 = arith.constant 0 : index
    %c0_37 = arith.constant 0 : index
    %38 = vector.load %arg7[%c1_35, %c0_36, %c0_37] : memref<3x40x28xf32, #tpu.memory_space<vmem>>, vector<1x40x28xf32>
    %39 = vector.shape_cast %38 : vector<1x40x28xf32> to vector<40x28xf32>
    %cst_38 = arith.constant dense<0.000000e+00> : vector<40x14xf32>
    %40 = tpu.matmul %39, %37, %cst_38 {dimension_numbers = #tpu.dot_dimension_numbers<[1], [0], [0], [1], [0, 0, 1, 1], [], []>, precision = #tpu.contract_precision<fp32>} : vector<40x28xf32>, vector<28x14xf32>, vector<40x14xf32> -> vector<40x14xf32>
    %41 = arith.addf %30, %40 : vector<40x14xf32>
    %c2 = arith.constant 2 : index
    %c0_39 = arith.constant 0 : index
    %c0_40 = arith.constant 0 : index
    %42 = vector.load %arg5[%c2, %c0_39, %c0_40] : memref<3x32x14xf32, #tpu.memory_space<vmem>>, vector<1x32x14xf32>
    %43 = vector.shape_cast %42 : vector<1x32x14xf32> to vector<32x14xf32>
    %cst_41 = arith.constant dense<0.000000e+00> : vector<28x14xf32>
    %44 = tpu.matmul %17, %43, %cst_41 {dimension_numbers = #tpu.dot_dimension_numbers<[1], [0], [0], [1], [0, 0, 1, 1], [], []>, precision = #tpu.contract_precision<fp32>} : vector<28x32xf32>, vector<32x14xf32>, vector<28x14xf32> -> vector<28x14xf32>
    %c2_42 = arith.constant 2 : index
    %c0_43 = arith.constant 0 : index
    %c0_44 = arith.constant 0 : index
    %45 = vector.load %arg6[%c2_42, %c0_43, %c0_44] : memref<3x32x14xf32, #tpu.memory_space<vmem>>, vector<1x32x14xf32>
    %46 = vector.shape_cast %45 : vector<1x32x14xf32> to vector<32x14xf32>
    %cst_45 = arith.constant dense<0.000000e+00> : vector<28x14xf32>
    %47 = tpu.matmul %17, %46, %cst_45 {dimension_numbers = #tpu.dot_dimension_numbers<[1], [0], [0], [1], [0, 0, 1, 1], [], []>, precision = #tpu.contract_precision<fp32>} : vector<28x32xf32>, vector<32x14xf32>, vector<28x14xf32> -> vector<28x14xf32>
    %48 = arith.maximumf %44, %47 : vector<28x14xf32>
    %c2_46 = arith.constant 2 : index
    %c0_47 = arith.constant 0 : index
    %c0_48 = arith.constant 0 : index
    %49 = vector.load %arg7[%c2_46, %c0_47, %c0_48] : memref<3x40x28xf32, #tpu.memory_space<vmem>>, vector<1x40x28xf32>
    %50 = vector.shape_cast %49 : vector<1x40x28xf32> to vector<40x28xf32>
    %cst_49 = arith.constant dense<0.000000e+00> : vector<40x14xf32>
    %51 = tpu.matmul %50, %48, %cst_49 {dimension_numbers = #tpu.dot_dimension_numbers<[1], [0], [0], [1], [0, 0, 1, 1], [], []>, precision = #tpu.contract_precision<fp32>} : vector<40x28xf32>, vector<28x14xf32>, vector<40x14xf32> -> vector<40x14xf32>
    %52 = arith.addf %41, %51 : vector<40x14xf32>
    %cst_50 = arith.constant 5.000000e-01 : f32
    %53 = vector.broadcast %cst_50 : f32 to vector<40x14xf32>
    %54 = arith.mulf %53, %52 : vector<40x14xf32>
    %55 = math.tanh %54 : vector<40x14xf32>
    %cst_51 = arith.constant 5.000000e-01 : f32
    %56 = vector.broadcast %cst_51 : f32 to vector<40x14xf32>
    %57 = arith.mulf %56, %55 : vector<40x14xf32>
    %cst_52 = arith.constant 5.000000e-01 : f32
    %58 = vector.broadcast %cst_52 : f32 to vector<40x14xf32>
    %59 = arith.addf %57, %58 : vector<40x14xf32>
    %c0_53 = arith.constant 0 : index
    %c0_54 = arith.constant 0 : index
    %60 = vector.load %arg9[%c0_53, %c0_54] : memref<16x40xf32, #tpu.memory_space<vmem>>, vector<16x40xf32>
    %cst_55 = arith.constant dense<0.000000e+00> : vector<16x14xf32>
    %61 = tpu.matmul %60, %59, %cst_55 {dimension_numbers = #tpu.dot_dimension_numbers<[1], [0], [0], [1], [0, 0, 1, 1], [], []>, precision = #tpu.contract_precision<fp32>} : vector<16x40xf32>, vector<40x14xf32>, vector<16x14xf32> -> vector<16x14xf32>
    %c0_56 = arith.constant 0 : index
    %c0_57 = arith.constant 0 : index
    %62 = vector.load %arg10[%c0_56, %c0_57] : memref<16x40xf32, #tpu.memory_space<vmem>>, vector<16x40xf32>
    %cst_58 = arith.constant dense<0.000000e+00> : vector<16x14xf32>
    %63 = tpu.matmul %62, %59, %cst_58 {dimension_numbers = #tpu.dot_dimension_numbers<[1], [0], [0], [1], [0, 0, 1, 1], [], []>, precision = #tpu.contract_precision<fp32>} : vector<16x40xf32>, vector<40x14xf32>, vector<16x14xf32> -> vector<16x14xf32>
    %64 = arith.maximumf %61, %63 : vector<16x14xf32>
    %c0_59 = arith.constant 0 : index
    %c0_60 = arith.constant 0 : index
    %65 = vector.load %arg14[%c0_59, %c0_60] : memref<32x1xf32, #tpu.memory_space<vmem>>, vector<32x1xf32>
    %c0_61 = arith.constant 0 : index
    %c0_62 = arith.constant 0 : index
    %c0_63 = arith.constant 0 : index
    %66 = vector.load %arg11[%c0_61, %c0_62, %c0_63] : memref<2x14x2xf32, #tpu.memory_space<vmem>>, vector<1x14x2xf32>
    %67 = vector.shape_cast %66 : vector<1x14x2xf32> to vector<14x2xf32>
    %cst_64 = arith.constant dense<0.000000e+00> : vector<16x2xf32>
    %68 = tpu.matmul %64, %67, %cst_64 {dimension_numbers = #tpu.dot_dimension_numbers<[1], [0], [0], [1], [0, 0, 1, 1], [], []>, precision = #tpu.contract_precision<fp32>} : vector<16x14xf32>, vector<14x2xf32>, vector<16x2xf32> -> vector<16x2xf32>
    %c0_65 = arith.constant 0 : index
    %c0_66 = arith.constant 0 : index
    %c0_67 = arith.constant 0 : index
    %69 = vector.load %arg12[%c0_65, %c0_66, %c0_67] : memref<2x14x2xf32, #tpu.memory_space<vmem>>, vector<1x14x2xf32>
    %70 = vector.shape_cast %69 : vector<1x14x2xf32> to vector<14x2xf32>
    %cst_68 = arith.constant dense<0.000000e+00> : vector<16x2xf32>
    %71 = tpu.matmul %64, %70, %cst_68 {dimension_numbers = #tpu.dot_dimension_numbers<[1], [0], [0], [1], [0, 0, 1, 1], [], []>, precision = #tpu.contract_precision<fp32>} : vector<16x14xf32>, vector<14x2xf32>, vector<16x2xf32> -> vector<16x2xf32>
    %72 = arith.maximumf %68, %71 : vector<16x2xf32>
    %c0_69 = arith.constant 0 : index
    %c0_70 = arith.constant 0 : index
    %c0_71 = arith.constant 0 : index
    %73 = vector.load %arg13[%c0_69, %c0_70, %c0_71] : memref<2x32x16xf32, #tpu.memory_space<vmem>>, vector<1x32x16xf32>
    %74 = vector.shape_cast %73 : vector<1x32x16xf32> to vector<32x16xf32>
    %cst_72 = arith.constant dense<0.000000e+00> : vector<32x2xf32>
    %75 = tpu.matmul %74, %72, %cst_72 {dimension_numbers = #tpu.dot_dimension_numbers<[1], [0], [0], [1], [0, 0, 1, 1], [], []>, precision = #tpu.contract_precision<fp32>} : vector<32x16xf32>, vector<16x2xf32>, vector<32x2xf32> -> vector<32x2xf32>
    %76 = vector.broadcast %65 : vector<32x1xf32> to vector<32x2xf32>
    %77 = arith.addf %76, %75 : vector<32x2xf32>
    %c1_73 = arith.constant 1 : index
    %c0_74 = arith.constant 0 : index
    %c0_75 = arith.constant 0 : index
    %78 = vector.load %arg11[%c1_73, %c0_74, %c0_75] : memref<2x14x2xf32, #tpu.memory_space<vmem>>, vector<1x14x2xf32>
    %79 = vector.shape_cast %78 : vector<1x14x2xf32> to vector<14x2xf32>
    %cst_76 = arith.constant dense<0.000000e+00> : vector<16x2xf32>
    %80 = tpu.matmul %64, %79, %cst_76 {dimension_numbers = #tpu.dot_dimension_numbers<[1], [0], [0], [1], [0, 0, 1, 1], [], []>, precision = #tpu.contract_precision<fp32>} : vector<16x14xf32>, vector<14x2xf32>, vector<16x2xf32> -> vector<16x2xf32>
    %c1_77 = arith.constant 1 : index
    %c0_78 = arith.constant 0 : index
    %c0_79 = arith.constant 0 : index
    %81 = vector.load %arg12[%c1_77, %c0_78, %c0_79] : memref<2x14x2xf32, #tpu.memory_space<vmem>>, vector<1x14x2xf32>
    %82 = vector.shape_cast %81 : vector<1x14x2xf32> to vector<14x2xf32>
    %cst_80 = arith.constant dense<0.000000e+00> : vector<16x2xf32>
    %83 = tpu.matmul %64, %82, %cst_80 {dimension_numbers = #tpu.dot_dimension_numbers<[1], [0], [0], [1], [0, 0, 1, 1], [], []>, precision = #tpu.contract_precision<fp32>} : vector<16x14xf32>, vector<14x2xf32>, vector<16x2xf32> -> vector<16x2xf32>
    %84 = arith.maximumf %80, %83 : vector<16x2xf32>
    %c1_81 = arith.constant 1 : index
    %c0_82 = arith.constant 0 : index
    %c0_83 = arith.constant 0 : index
    %85 = vector.load %arg13[%c1_81, %c0_82, %c0_83] : memref<2x32x16xf32, #tpu.memory_space<vmem>>, vector<1x32x16xf32>
    %86 = vector.shape_cast %85 : vector<1x32x16xf32> to vector<32x16xf32>
    %cst_84 = arith.constant dense<0.000000e+00> : vector<32x2xf32>
    %87 = tpu.matmul %86, %84, %cst_84 {dimension_numbers = #tpu.dot_dimension_numbers<[1], [0], [0], [1], [0, 0, 1, 1], [], []>, precision = #tpu.contract_precision<fp32>} : vector<32x16xf32>, vector<16x2xf32>, vector<32x2xf32> -> vector<32x2xf32>
    %88 = arith.addf %77, %87 : vector<32x2xf32>
    %cst_85 = arith.constant 5.000000e-01 : f32
    %89 = vector.broadcast %cst_85 : f32 to vector<32x2xf32>
    %90 = arith.mulf %89, %88 : vector<32x2xf32>
    %91 = math.tanh %90 : vector<32x2xf32>
    %cst_86 = arith.constant 5.000000e-01 : f32
    %92 = vector.broadcast %cst_86 : f32 to vector<32x2xf32>
    %93 = arith.mulf %92, %91 : vector<32x2xf32>
    %cst_87 = arith.constant 5.000000e-01 : f32
    %94 = vector.broadcast %cst_87 : f32 to vector<32x2xf32>
    %95 = arith.addf %93, %94 : vector<32x2xf32>
    %c0_88 = arith.constant 0 : index
    %c0_89 = arith.constant 0 : index
    %96 = vector.load %arg15[%c0_88, %c0_89] : memref<10x32xf32, #tpu.memory_space<vmem>>, vector<10x32xf32>
    %cst_90 = arith.constant dense<0.000000e+00> : vector<10x2xf32>
    %97 = tpu.matmul %96, %95, %cst_90 {dimension_numbers = #tpu.dot_dimension_numbers<[1], [0], [0], [1], [0, 0, 1, 1], [], []>, precision = #tpu.contract_precision<fp32>} : vector<10x32xf32>, vector<32x2xf32>, vector<10x2xf32> -> vector<10x2xf32>
    %c0_91 = arith.constant 0 : index
    %c0_92 = arith.constant 0 : index
    %98 = vector.load %arg16[%c0_91, %c0_92] : memref<10x1xf32, #tpu.memory_space<vmem>>, vector<10x1xf32>
    %99 = vector.broadcast %98 : vector<10x1xf32> to vector<10x2xf32>
    %100 = arith.addf %97, %99 : vector<10x2xf32>
    %cst_93 = arith.constant dense<0xFF800000> : vector<2xf32>
    %101 = vector.multi_reduction <maximumf>, %100, %cst_93 [0] : vector<10x2xf32> to vector<2xf32>
    %102 = vector.shape_cast %101 : vector<2xf32> to vector<1x2xf32>
    %103 = vector.broadcast %102 : vector<1x2xf32> to vector<10x2xf32>
    %104 = arith.subf %100, %103 : vector<10x2xf32>
    %105 = math.exp %104 : vector<10x2xf32>
    %cst_94 = arith.constant dense<0.000000e+00> : vector<2xf32>
    %106 = vector.multi_reduction <add>, %105, %cst_94 [0] : vector<10x2xf32> to vector<2xf32>
    %107 = vector.shape_cast %106 : vector<2xf32> to vector<1x2xf32>
    %108 = math.log %107 : vector<1x2xf32>
    %109 = vector.broadcast %108 : vector<1x2xf32> to vector<10x2xf32>
    %110 = arith.subf %104, %109 : vector<10x2xf32>
    %c0_95 = arith.constant 0 : index
    %c0_96 = arith.constant 0 : index
    %111 = vector.load %arg17[%c0_95, %c0_96] : memref<10x2xf32, #tpu.memory_space<vmem>>, vector<10x2xf32>
    tpu.vector_store %arg17[%c0_95, %c0_96], %110 {strides = array<i32>} : memref<10x2xf32, #tpu.memory_space<vmem>>, vector<10x2xf32>,
    return
  }
}

</mosaic_0001>

<llo_original>
// kernel: forward.1
$region0: #{forward.1}
  #allocation0 [shape = 'u32[]', space=smem, size = 0x4, offset = 0x4, fixed_abs, tag = 'smem constant byte address 0x4 - core index']
  #allocation1 [shape = 'u32[72,128]{1,0:T(1,128)}', space=vmem, size = 0x9000, scoped, tag = 'internal scratch']
  %s0 = inlined_call_operand.vmem [shape: f32[48,32], index: 0, kind: input, shape index: {}]
  %s1 = inlined_call_operand.vmem [shape: f32[56,48], index: 1, kind: input, shape index: {}]
  %s2 = inlined_call_operand.vmem [shape: f32[56,1], index: 2, kind: input, shape index: {}]
  %s3 = inlined_call_operand.vmem [shape: f32[28,56], index: 3, kind: input, shape index: {}]
  %s4 = inlined_call_operand.vmem [shape: f32[28,56], index: 4, kind: input, shape index: {}]
  %s5 = inlined_call_operand.vmem [shape: f32[3,32,14], index: 5, kind: input, shape index: {}]
  %s6 = inlined_call_operand.vmem [shape: f32[3,32,14], index: 6, kind: input, shape index: {}]
  %s7 = inlined_call_operand.vmem [shape: f32[3,40,28], index: 7, kind: input, shape index: {}]
  %s8 = inlined_call_operand.vmem [shape: f32[40,1], index: 8, kind: input, shape index: {}]
  %s9 = inlined_call_operand.vmem [shape: f32[16,40], index: 9, kind: input, shape index: {}]
  %s10 = inlined_call_operand.vmem [shape: f32[16,40], index: 10, kind: input, shape index: {}]
  %s11 = inlined_call_operand.vmem [shape: f32[2,14,2], index: 11, kind: input, shape index: {}]
  %s12 = inlined_call_operand.vmem [shape: f32[2,14,2], index: 12, kind: input, shape index: {}]
  %s13 = inlined_call_operand.vmem [shape: f32[2,32,16], index: 13, kind: input, shape index: {}]
  %s14 = inlined_call_operand.vmem [shape: f32[32,1], index: 14, kind: input, shape index: {}]
  %s15 = inlined_call_operand.vmem [shape: f32[10,32], index: 15, kind: input, shape index: {}]
  %s16 = inlined_call_operand.vmem [shape: f32[10,1], index: 16, kind: input, shape index: {}]
  %s17 = inlined_call_operand.vmem [shape: f32[10,2], index: 17, kind: output, shape index: {}]
  %s18 = sld [smem:[#allocation0]]
  $region78: #{forward.1} parent=0
    _
  %s20 = ssub.s32 1, %s18
  %s21 = scalar_select 0, %s20, %s18
  // Predicated region
  $region2: #{forward.1} parent=0 // pred_check
    _
  $region3: #{forward.1} parent=0 // pred_check_branch
    %23 = sbr.rel (0) target = $region5
  $region4: #{forward.1} parent=0 // pred_region
    _
  $region5: #{forward.1} parent=0 // pred_fallthru
    _
  // Predicated region
  $region6: #{forward.1} parent=0 // pred_check
    _
  $region7: #{forward.1} parent=0 // pred_check_branch
    %25 = sbr.rel (0) target = $region9
  $region8: #{forward.1} parent=0 // pred_region
    _
  $region9: #{forward.1} parent=0 // pred_fallthru
    _
  // Predicated region
  $region10: #{forward.1} parent=0 // pred_check
    _
  $region11: #{forward.1} parent=0 // pred_check_branch
    %27 = sbr.rel (0) target = $region13
  $region12: #{forward.1} parent=0 // pred_region
    _
  $region13: #{forward.1} parent=0 // pred_fallthru
    _
  // Predicated region
  $region14: #{forward.1} parent=0 // pred_check
    _
  $region15: #{forward.1} parent=0 // pred_check_branch
    %29 = sbr.rel (0) target = $region17
  $region16: #{forward.1} parent=0 // pred_region
    _
  $region17: #{forward.1} parent=0 // pred_fallthru
    _
  // Predicated region
  $region18: #{forward.1} parent=0 // pred_check
    _
  $region19: #{forward.1} parent=0 // pred_check_branch
    %31 = sbr.rel (0) target = $region21
  $region20: #{forward.1} parent=0 // pred_region
    _
  $region21: #{forward.1} parent=0 // pred_fallthru
    _
  // Predicated region
  $region22: #{forward.1} parent=0 // pred_check
    _
  $region23: #{forward.1} parent=0 // pred_check_branch
    %33 = sbr.rel (0) target = $region25
  $region24: #{forward.1} parent=0 // pred_region
    _
  $region25: #{forward.1} parent=0 // pred_fallthru
    _
  // Predicated region
  $region26: #{forward.1} parent=0 // pred_check
    _
  $region27: #{forward.1} parent=0 // pred_check_branch
    %35 = sbr.rel (0) target = $region29
  $region28: #{forward.1} parent=0 // pred_region
    _
  $region29: #{forward.1} parent=0 // pred_fallthru
    _
  // Predicated region
  $region30: #{forward.1} parent=0 // pred_check
    _
  $region31: #{forward.1} parent=0 // pred_check_branch
    %37 = sbr.rel (0) target = $region33
  $region32: #{forward.1} parent=0 // pred_region
    _
  $region33: #{forward.1} parent=0 // pred_fallthru
    _
  // Predicated region
  $region34: #{forward.1} parent=0 // pred_check
    _
  $region35: #{forward.1} parent=0 // pred_check_branch
    %39 = sbr.rel (0) target = $region37
  $region36: #{forward.1} parent=0 // pred_region
    _
  $region37: #{forward.1} parent=0 // pred_fallthru
    _
  // Predicated region
  $region38: #{forward.1} parent=0 // pred_check
    _
  $region39: #{forward.1} parent=0 // pred_check_branch
    %41 = sbr.rel (0) target = $region41
  $region40: #{forward.1} parent=0 // pred_region
    _
  $region41: #{forward.1} parent=0 // pred_fallthru
    _
  // Predicated region
  $region42: #{forward.1} parent=0 // pred_check
    _
  $region43: #{forward.1} parent=0 // pred_check_branch
    %43 = sbr.rel (0) target = $region45
  $region44: #{forward.1} parent=0 // pred_region
    _
  $region45: #{forward.1} parent=0 // pred_fallthru
    _
  // Predicated region
  $region46: #{forward.1} parent=0 // pred_check
    _
  $region47: #{forward.1} parent=0 // pred_check_branch
    %45 = sbr.rel (0) target = $region49
  $region48: #{forward.1} parent=0 // pred_region
    _
  $region49: #{forward.1} parent=0 // pred_fallthru
    _
  // Predicated region
  $region50: #{forward.1} parent=0 // pred_check
    _
  $region51: #{forward.1} parent=0 // pred_check_branch
    %47 = sbr.rel (0) target = $region53
  $region52: #{forward.1} parent=0 // pred_region
    _
  $region53: #{forward.1} parent=0 // pred_fallthru
    _
  // Predicated region
  $region54: #{forward.1} parent=0 // pred_check
    _
  $region55: #{forward.1} parent=0 // pred_check_branch
    %49 = sbr.rel (0) target = $region57
  $region56: #{forward.1} parent=0 // pred_region
    _
  $region57: #{forward.1} parent=0 // pred_fallthru
    _
  // Predicated region
  $region58: #{forward.1} parent=0 // pred_check
    _
  $region59: #{forward.1} parent=0 // pred_check_branch
    %51 = sbr.rel (0) target = $region61
  $region60: #{forward.1} parent=0 // pred_region
    _
  $region61: #{forward.1} parent=0 // pred_fallthru
    _
  // Predicated region
  $region62: #{forward.1} parent=0 // pred_check
    _
  $region63: #{forward.1} parent=0 // pred_check_branch
    %53 = sbr.rel (0) target = $region65
  $region64: #{forward.1} parent=0 // pred_region
    _
  $region65: #{forward.1} parent=0 // pred_fallthru
    _
  // Predicated region
  $region66: #{forward.1} parent=0 // pred_check
    _
  $region67: #{forward.1} parent=0 // pred_check_branch
    %55 = sbr.rel (0) target = $region69
  $region68: #{forward.1} parent=0 // pred_region
    _
  $region69: #{forward.1} parent=0 // pred_fallthru
    _
  %v56 = vld [vmem:[%s1] sm:$0xff]
  %v57 = vld [vmem:[%s1 + $0x8] sm:$0xff]
  %v58 = vld [vmem:[%s1 + $0x10] sm:$0xff]
  %v59 = vld [vmem:[%s1 + $0x18] sm:$0xff]
  %v60 = vld [vmem:[%s1 + $0x20] sm:$0xff]
  %v61 = vld [vmem:[%s1 + $0x28] sm:$0xff]
  %v62 = vld [vmem:[%s1 + $0x30] sm:$0xff]
  %v63 = vld [vmem:[%s0] sm:$0xff]
  %v64 = vld [vmem:[%s0 + $0x8] sm:$0xff]
  %v65 = vld [vmem:[%s0 + $0x10] sm:$0xff]
  %v66 = vld [vmem:[%s0 + $0x18] sm:$0xff]
  %v67 = vld [vmem:[%s0 + $0x20] sm:$0xff]
  %v68 = vld [vmem:[%s0 + $0x28] sm:$0xff]
  %v69 = vld [vmem:[%s2] sm:$0xff]
  %v70 = vld [vmem:[%s2 + $0x8] sm:$0xff]
  %v71 = vld [vmem:[%s2 + $0x10] sm:$0xff]
  %v72 = vld [vmem:[%s2 + $0x18] sm:$0xff]
  %v73 = vld [vmem:[%s2 + $0x20] sm:$0xff]
  %v74 = vld [vmem:[%s2 + $0x28] sm:$0xff]
  %v75 = vld [vmem:[%s2 + $0x30] sm:$0xff]
  %77 = vset.pattern.permute.xlu0 0
  %78 = vperm.xlu0 %77, %v69
  %v79 = vpop.permute.xlu0 %78
  %82 = vset.pattern.permute.xlu0 0
  %83 = vperm.xlu0 %82, %v70
  %v84 = vpop.permute.xlu0 %83
  %87 = vset.pattern.permute.xlu0 0
  %88 = vperm.xlu0 %87, %v71
  %v89 = vpop.permute.xlu0 %88
  %92 = vset.pattern.permute.xlu0 0
  %93 = vperm.xlu0 %92, %v72
  %v94 = vpop.permute.xlu0 %93
  %97 = vset.pattern.permute.xlu0 0
  %98 = vperm.xlu0 %97, %v73
  %v99 = vpop.permute.xlu0 %98
  %102 = vset.pattern.permute.xlu0 0
  %103 = vperm.xlu0 %102, %v74
  %v104 = vpop.permute.xlu0 %103
  %107 = vset.pattern.permute.xlu0 0
  %108 = vperm.xlu0 %107, %v75
  %v109 = vpop.permute.xlu0 %108
  %vm111 = vcmask 392192
  %v113 = vsel %vm111, %v56, 0
  %v116 = vsel %vm111, %v57, 0
  %v119 = vsel %vm111, %v58, 0
  %v122 = vsel %vm111, %v59, 0
  %v125 = vsel %vm111, %v60, 0
  %v128 = vsel %vm111, %v61, 0
  %v131 = vsel %vm111, %v62, 0
  %133 = vmatpush.msra.mxu0 0.0
  %134 = vmatpush.msra.mxu0 0.0
  %135 = vmatpush.msra.mxu0 0.0
  %136 = vmatpush.msra.mxu0 0.0
  %137 = vmatpush.msra.mxu0 0.0
  %138 = vmatpush.msra.mxu0 0.0
  %139 = vmatpush.msra.mxu0 0.0
  %140 = vmatpush.msra.mxu0 0.0
  %141 = vmatpush.msra.mxu0 0.0
  %142 = vmatpush.msra.mxu0 0.0
  %v143 = vand.u32 %v68, 4294901760
  %144 = vmatpush.msra.mxu0 %v143
  %v145 = vand.u32 %v67, 4294901760
  %146 = vmatpush.msra.mxu0 %v145
  %v147 = vand.u32 %v66, 4294901760
  %148 = vmatpush.msra.mxu0 %v147
  %v149 = vand.u32 %v65, 4294901760
  %150 = vmatpush.msra.mxu0 %v149
  %v151 = vand.u32 %v64, 4294901760
  %152 = vmatpush.msra.mxu0 %v151
  %v153 = vand.u32 %v63, 4294901760
  %154 = vmatpush.msra.mxu0 %v153
  %v155 = vand.u32 %v113, 4294901760
  %v156 = vsub.f32 %v113, %v155
  %v157 = vand.u32 %v156, 4294901760
  %v158 = vsub.f32 %v156, %v157
  %v159 = vand.u32 %v158, 4294901760
  %160 = vmatmul.f32.gmra.mxu0 %v159
  %v161 = vpop.f32.mrf.mxu0
  %v162 = vadd.f32 %v79, %v161
  %v163 = vand.u32 %v116, 4294901760
  %v164 = vsub.f32 %v116, %v163
  %v165 = vand.u32 %v164, 4294901760
  %v166 = vsub.f32 %v164, %v165
  %v167 = vand.u32 %v166, 4294901760
  %168 = vmatmul.f32.gmra.mxu0 %v167
  %v169 = vpop.f32.mrf.mxu0
  %v170 = vadd.f32 %v84, %v169
  %v171 = vand.u32 %v119, 4294901760
  %v172 = vsub.f32 %v119, %v171
  %v173 = vand.u32 %v172, 4294901760
  %v174 = vsub.f32 %v172, %v173
  %v175 = vand.u32 %v174, 4294901760
  %176 = vmatmul.f32.gmra.mxu0 %v175
  %v177 = vpop.f32.mrf.mxu0
  %v178 = vadd.f32 %v89, %v177
  %v179 = vand.u32 %v122, 4294901760
  %v180 = vsub.f32 %v122, %v179
  %v181 = vand.u32 %v180, 4294901760
  %v182 = vsub.f32 %v180, %v181
  %v183 = vand.u32 %v182, 4294901760
  %184 = vmatmul.f32.gmra.mxu0 %v183
  %v185 = vpop.f32.mrf.mxu0
  %v186 = vadd.f32 %v94, %v185
  %v187 = vand.u32 %v125, 4294901760
  %v188 = vsub.f32 %v125, %v187
  %v189 = vand.u32 %v188, 4294901760
  %v190 = vsub.f32 %v188, %v189
  %v191 = vand.u32 %v190, 4294901760
  %192 = vmatmul.f32.gmra.mxu0 %v191
  %v193 = vpop.f32.mrf.mxu0
  %v194 = vadd.f32 %v99, %v193
  %v195 = vand.u32 %v128, 4294901760
  %v196 = vsub.f32 %v128, %v195
  %v197 = vand.u32 %v196, 4294901760
  %v198 = vsub.f32 %v196, %v197
  %v199 = vand.u32 %v198, 4294901760
  %200 = vmatmul.f32.gmra.mxu0 %v199
  %v201 = vpop.f32.mrf.mxu0
  %v202 = vadd.f32 %v104, %v201
  %v203 = vand.u32 %v131, 4294901760
  %v204 = vsub.f32 %v131, %v203
  %v205 = vand.u32 %v204, 4294901760
  %v206 = vsub.f32 %v204, %v205
  %v207 = vand.u32 %v206, 4294901760
  %208 = vmatmul.f32.gmra.mxu0 %v207
  %v209 = vpop.f32.mrf.mxu0
  %v210 = vadd.f32 %v109, %v209
  %211 = vdwg.mxu0
  %212 = vmatpush.msra.mxu0 0.0
  %213 = vmatpush.msra.mxu0 0.0
  %214 = vmatpush.msra.mxu0 0.0
  %215 = vmatpush.msra.mxu0 0.0
  %216 = vmatpush.msra.mxu0 0.0
  %217 = vmatpush.msra.mxu0 0.0
  %218 = vmatpush.msra.mxu0 0.0
  %219 = vmatpush.msra.mxu0 0.0
  %220 = vmatpush.msra.mxu0 0.0
  %221 = vmatpush.msra.mxu0 0.0
  %v222 = vand.u32 %v68, 4294901760
  %v223 = vsub.f32 %v68, %v222
  %v224 = vand.u32 %v223, 4294901760
  %v225 = vsub.f32 %v223, %v224
  %v226 = vand.u32 %v225, 4294901760
  %227 = vmatpush.msra.mxu0 %v226
  %v228 = vand.u32 %v67, 4294901760
  %v229 = vsub.f32 %v67, %v228
  %v230 = vand.u32 %v229, 4294901760
  %v231 = vsub.f32 %v229, %v230
  %v232 = vand.u32 %v231, 4294901760
  %233 = vmatpush.msra.mxu0 %v232
  %v234 = vand.u32 %v66, 4294901760
  %v235 = vsub.f32 %v66, %v234
  %v236 = vand.u32 %v235, 4294901760
  %v237 = vsub.f32 %v235, %v236
  %v238 = vand.u32 %v237, 4294901760
  %239 = vmatpush.msra.mxu0 %v238
  %v240 = vand.u32 %v65, 4294901760
  %v241 = vsub.f32 %v65, %v240
  %v242 = vand.u32 %v241, 4294901760
  %v243 = vsub.f32 %v241, %v242
  %v244 = vand.u32 %v243, 4294901760
  %245 = vmatpush.msra.mxu0 %v244
  %v246 = vand.u32 %v64, 4294901760
  %v247 = vsub.f32 %v64, %v246
  %v248 = vand.u32 %v247, 4294901760
  %v249 = vsub.f32 %v247, %v248
  %v250 = vand.u32 %v249, 4294901760
  %251 = vmatpush.msra.mxu0 %v250
  %v252 = vand.u32 %v63, 4294901760
  %v253 = vsub.f32 %v63, %v252
  %v254 = vand.u32 %v253, 4294901760
  %v255 = vsub.f32 %v253, %v254
  %v256 = vand.u32 %v255, 4294901760
  %257 = vmatpush.msra.mxu0 %v256
  %v258 = vand.u32 %v113, 4294901760
  %259 = vmatmul.f32.gmra.mxu0 %v258
  %v260 = vpop.f32.mrf.mxu0
  %v261 = vadd.f32 %v162, %v260
  %v262 = vand.u32 %v116, 4294901760
  %263 = vmatmul.f32.gmra.mxu0 %v262
  %v264 = vpop.f32.mrf.mxu0
  %v265 = vadd.f32 %v170, %v264
  %v266 = vand.u32 %v119, 4294901760
  %267 = vmatmul.f32.gmra.mxu0 %v266
  %v268 = vpop.f32.mrf.mxu0
  %v269 = vadd.f32 %v178, %v268
  %v270 = vand.u32 %v122, 4294901760
  %271 = vmatmul.f32.gmra.mxu0 %v270
  %v272 = vpop.f32.mrf.mxu0
  %v273 = vadd.f32 %v186, %v272
  %v274 = vand.u32 %v125, 4294901760
  %275 = vmatmul.f32.gmra.mxu0 %v274
  %v276 = vpop.f32.mrf.mxu0
  %v277 = vadd.f32 %v194, %v276
  %v278 = vand.u32 %v128, 4294901760
  %279 = vmatmul.f32.gmra.mxu0 %v278
  %v280 = vpop.f32.mrf.mxu0
  %v281 = vadd.f32 %v202, %v280
  %v282 = vand.u32 %v131, 4294901760
  %283 = vmatmul.f32.gmra.mxu0 %v282
  %v284 = vpop.f32.mrf.mxu0
  %v285 = vadd.f32 %v210, %v284
  %286 = vdwg.mxu0
  %287 = vmatpush.msra.mxu0 0.0
  %288 = vmatpush.msra.mxu0 0.0
  %289 = vmatpush.msra.mxu0 0.0
  %290 = vmatpush.msra.mxu0 0.0
  %291 = vmatpush.msra.mxu0 0.0
  %292 = vmatpush.msra.mxu0 0.0
  %293 = vmatpush.msra.mxu0 0.0
  %294 = vmatpush.msra.mxu0 0.0
  %295 = vmatpush.msra.mxu0 0.0
  %296 = vmatpush.msra.mxu0 0.0
  %v297 = vand.u32 %v68, 4294901760
  %v298 = vsub.f32 %v68, %v297
  %299 = vmatpush.msra.mxu0 %v298
  %v300 = vand.u32 %v67, 4294901760
  %v301 = vsub.f32 %v67, %v300
  %302 = vmatpush.msra.mxu0 %v301
  %v303 = vand.u32 %v66, 4294901760
  %v304 = vsub.f32 %v66, %v303
  %305 = vmatpush.msra.mxu0 %v304
  %v306 = vand.u32 %v65, 4294901760
  %v307 = vsub.f32 %v65, %v306
  %308 = vmatpush.msra.mxu0 %v307
  %v309 = vand.u32 %v64, 4294901760
  %v310 = vsub.f32 %v64, %v309
  %311 = vmatpush.msra.mxu0 %v310
  %v312 = vand.u32 %v63, 4294901760
  %v313 = vsub.f32 %v63, %v312
  %314 = vmatpush.msra.mxu0 %v313
  %v315 = vand.u32 %v113, 4294901760
  %v316 = vsub.f32 %v113, %v315
  %317 = vmatmul.f32.gmra.mxu0 %v316
  %v318 = vpop.f32.mrf.mxu0
  %v319 = vadd.f32 %v261, %v318
  %v320 = vand.u32 %v116, 4294901760
  %v321 = vsub.f32 %v116, %v320
  %322 = vmatmul.f32.gmra.mxu0 %v321
  %v323 = vpop.f32.mrf.mxu0
  %v324 = vadd.f32 %v265, %v323
  %v325 = vand.u32 %v119, 4294901760
  %v326 = vsub.f32 %v119, %v325
  %327 = vmatmul.f32.gmra.mxu0 %v326
  %v328 = vpop.f32.mrf.mxu0
  %v329 = vadd.f32 %v269, %v328
  %v330 = vand.u32 %v122, 4294901760
  %v331 = vsub.f32 %v122, %v330
  %332 = vmatmul.f32.gmra.mxu0 %v331
  %v333 = vpop.f32.mrf.mxu0
  %v334 = vadd.f32 %v273, %v333
  %v335 = vand.u32 %v125, 4294901760
  %v336 = vsub.f32 %v125, %v335
  %337 = vmatmul.f32.gmra.mxu0 %v336
  %v338 = vpop.f32.mrf.mxu0
  %v339 = vadd.f32 %v277, %v338
  %v340 = vand.u32 %v128, 4294901760
  %v341 = vsub.f32 %v128, %v340
  %342 = vmatmul.f32.gmra.mxu0 %v341
  %v343 = vpop.f32.mrf.mxu0
  %v344 = vadd.f32 %v281, %v343
  %v345 = vand.u32 %v131, 4294901760
  %v346 = vsub.f32 %v131, %v345
  %347 = vmatmul.f32.gmra.mxu0 %v346
  %v348 = vpop.f32.mrf.mxu0
  %v349 = vadd.f32 %v285, %v348
  %350 = vdwg.mxu0
  %351 = vmatpush.msra.mxu0 0.0
  %352 = vmatpush.msra.mxu0 0.0
  %353 = vmatpush.msra.mxu0 0.0
  %354 = vmatpush.msra.mxu0 0.0
  %355 = vmatpush.msra.mxu0 0.0
  %356 = vmatpush.msra.mxu0 0.0
  %357 = vmatpush.msra.mxu0 0.0
  %358 = vmatpush.msra.mxu0 0.0
  %359 = vmatpush.msra.mxu0 0.0
  %360 = vmatpush.msra.mxu0 0.0
  %v361 = vand.u32 %v68, 4294901760
  %362 = vmatpush.msra.mxu0 %v361
  %v363 = vand.u32 %v67, 4294901760
  %364 = vmatpush.msra.mxu0 %v363
  %v365 = vand.u32 %v66, 4294901760
  %366 = vmatpush.msra.mxu0 %v365
  %v367 = vand.u32 %v65, 4294901760
  %368 = vmatpush.msra.mxu0 %v367
  %v369 = vand.u32 %v64, 4294901760
  %370 = vmatpush.msra.mxu0 %v369
  %v371 = vand.u32 %v63, 4294901760
  %372 = vmatpush.msra.mxu0 %v371
  %v373 = vand.u32 %v113, 4294901760
  %v374 = vsub.f32 %v113, %v373
  %v375 = vand.u32 %v374, 4294901760
  %376 = vmatmul.f32.gmra.mxu0 %v375
  %v377 = vpop.f32.mrf.mxu0
  %v378 = vadd.f32 %v319, %v377
  %v379 = vand.u32 %v116, 4294901760
  %v380 = vsub.f32 %v116, %v379
  %v381 = vand.u32 %v380, 4294901760
  %382 = vmatmul.f32.gmra.mxu0 %v381
  %v383 = vpop.f32.mrf.mxu0
  %v384 = vadd.f32 %v324, %v383
  %v385 = vand.u32 %v119, 4294901760
  %v386 = vsub.f32 %v119, %v385
  %v387 = vand.u32 %v386, 4294901760
  %388 = vmatmul.f32.gmra.mxu0 %v387
  %v389 = vpop.f32.mrf.mxu0
  %v390 = vadd.f32 %v329, %v389
  %v391 = vand.u32 %v122, 4294901760
  %v392 = vsub.f32 %v122, %v391
  %v393 = vand.u32 %v392, 4294901760
  %394 = vmatmul.f32.gmra.mxu0 %v393
  %v395 = vpop.f32.mrf.mxu0
  %v396 = vadd.f32 %v334, %v395
  %v397 = vand.u32 %v125, 4294901760
  %v398 = vsub.f32 %v125, %v397
  %v399 = vand.u32 %v398, 4294901760
  %400 = vmatmul.f32.gmra.mxu0 %v399
  %v401 = vpop.f32.mrf.mxu0
  %v402 = vadd.f32 %v339, %v401
  %v403 = vand.u32 %v128, 4294901760
  %v404 = vsub.f32 %v128, %v403
  %v405 = vand.u32 %v404, 4294901760
  %406 = vmatmul.f32.gmra.mxu0 %v405
  %v407 = vpop.f32.mrf.mxu0
  %v408 = vadd.f32 %v344, %v407
  %v409 = vand.u32 %v131, 4294901760
  %v410 = vsub.f32 %v131, %v409
  %v411 = vand.u32 %v410, 4294901760
  %412 = vmatmul.f32.gmra.mxu0 %v411
  %v413 = vpop.f32.mrf.mxu0
  %v414 = vadd.f32 %v349, %v413
  %415 = vdwg.mxu0
  %416 = vmatpush.msra.mxu0 0.0
  %417 = vmatpush.msra.mxu0 0.0
  %418 = vmatpush.msra.mxu0 0.0
  %419 = vmatpush.msra.mxu0 0.0
  %420 = vmatpush.msra.mxu0 0.0
  %421 = vmatpush.msra.mxu0 0.0
  %422 = vmatpush.msra.mxu0 0.0
  %423 = vmatpush.msra.mxu0 0.0
  %424 = vmatpush.msra.mxu0 0.0
  %425 = vmatpush.msra.mxu0 0.0
  %v426 = vand.u32 %v68, 4294901760
  %v427 = vsub.f32 %v68, %v426
  %v428 = vand.u32 %v427, 4294901760
  %429 = vmatpush.msra.mxu0 %v428
  %v430 = vand.u32 %v67, 4294901760
  %v431 = vsub.f32 %v67, %v430
  %v432 = vand.u32 %v431, 4294901760
  %433 = vmatpush.msra.mxu0 %v432
  %v434 = vand.u32 %v66, 4294901760
  %v435 = vsub.f32 %v66, %v434
  %v436 = vand.u32 %v435, 4294901760
  %437 = vmatpush.msra.mxu0 %v436
  %v438 = vand.u32 %v65, 4294901760
  %v439 = vsub.f32 %v65, %v438
  %v440 = vand.u32 %v439, 4294901760
  %441 = vmatpush.msra.mxu0 %v440
  %v442 = vand.u32 %v64, 4294901760
  %v443 = vsub.f32 %v64, %v442
  %v444 = vand.u32 %v443, 4294901760
  %445 = vmatpush.msra.mxu0 %v444
  %v446 = vand.u32 %v63, 4294901760
  %v447 = vsub.f32 %v63, %v446
  %v448 = vand.u32 %v447, 4294901760
  %449 = vmatpush.msra.mxu0 %v448
  %v450 = vand.u32 %v113, 4294901760
  %451 = vmatmul.f32.gmra.mxu0 %v450
  %v452 = vpop.f32.mrf.mxu0
  %v453 = vadd.f32 %v378, %v452
  %v454 = vand.u32 %v116, 4294901760
  %455 = vmatmul.f32.gmra.mxu0 %v454
  %v456 = vpop.f32.mrf.mxu0
  %v457 = vadd.f32 %v384, %v456
  %v458 = vand.u32 %v119, 4294901760
  %459 = vmatmul.f32.gmra.mxu0 %v458
  %v460 = vpop.f32.mrf.mxu0
  %v461 = vadd.f32 %v390, %v460
  %v462 = vand.u32 %v122, 4294901760
  %463 = vmatmul.f32.gmra.mxu0 %v462
  %v464 = vpop.f32.mrf.mxu0
  %v465 = vadd.f32 %v396, %v464
  %v466 = vand.u32 %v125, 4294901760
  %467 = vmatmul.f32.gmra.mxu0 %v466
  %v468 = vpop.f32.mrf.mxu0
  %v469 = vadd.f32 %v402, %v468
  %v470 = vand.u32 %v128, 4294901760
  %471 = vmatmul.f32.gmra.mxu0 %v470
  %v472 = vpop.f32.mrf.mxu0
  %v473 = vadd.f32 %v408, %v472
  %v474 = vand.u32 %v131, 4294901760
  %475 = vmatmul.f32.gmra.mxu0 %v474
  %v476 = vpop.f32.mrf.mxu0
  %v477 = vadd.f32 %v414, %v476
  %478 = vdwg.mxu0
  %479 = vmatpush.msra.mxu0 0.0
  %480 = vmatpush.msra.mxu0 0.0
  %481 = vmatpush.msra.mxu0 0.0
  %482 = vmatpush.msra.mxu0 0.0
  %483 = vmatpush.msra.mxu0 0.0
  %484 = vmatpush.msra.mxu0 0.0
  %485 = vmatpush.msra.mxu0 0.0
  %486 = vmatpush.msra.mxu0 0.0
  %487 = vmatpush.msra.mxu0 0.0
  %488 = vmatpush.msra.mxu0 0.0
  %v489 = vand.u32 %v68, 4294901760
  %490 = vmatpush.msra.mxu0 %v489
  %v491 = vand.u32 %v67, 4294901760
  %492 = vmatpush.msra.mxu0 %v491
  %v493 = vand.u32 %v66, 4294901760
  %494 = vmatpush.msra.mxu0 %v493
  %v495 = vand.u32 %v65, 4294901760
  %496 = vmatpush.msra.mxu0 %v495
  %v497 = vand.u32 %v64, 4294901760
  %498 = vmatpush.msra.mxu0 %v497
  %v499 = vand.u32 %v63, 4294901760
  %500 = vmatpush.msra.mxu0 %v499
  %v501 = vand.u32 %v113, 4294901760
  %502 = vmatmul.f32.gmra.mxu0 %v501
  %v503 = vpop.f32.mrf.mxu0
  %v504 = vadd.f32 %v453, %v503
  %v505 = vand.u32 %v116, 4294901760
  %506 = vmatmul.f32.gmra.mxu0 %v505
  %v507 = vpop.f32.mrf.mxu0
  %v508 = vadd.f32 %v457, %v507
  %v509 = vand.u32 %v119, 4294901760
  %510 = vmatmul.f32.gmra.mxu0 %v509
  %v511 = vpop.f32.mrf.mxu0
  %v512 = vadd.f32 %v461, %v511
  %v513 = vand.u32 %v122, 4294901760
  %514 = vmatmul.f32.gmra.mxu0 %v513
  %v515 = vpop.f32.mrf.mxu0
  %v516 = vadd.f32 %v465, %v515
  %v517 = vand.u32 %v125, 4294901760
  %518 = vmatmul.f32.gmra.mxu0 %v517
  %v519 = vpop.f32.mrf.mxu0
  %v520 = vadd.f32 %v469, %v519
  %v521 = vand.u32 %v128, 4294901760
  %522 = vmatmul.f32.gmra.mxu0 %v521
  %v523 = vpop.f32.mrf.mxu0
  %v524 = vadd.f32 %v473, %v523
  %v525 = vand.u32 %v131, 4294901760
  %526 = vmatmul.f32.gmra.mxu0 %v525
  %v527 = vpop.f32.mrf.mxu0
  %v528 = vadd.f32 %v477, %v527
  %529 = vdwg.mxu0
  %v530 = vmul.f32 %v504, 0.5
  %v531 = vmul.f32 %v508, 0.5
  %v532 = vmul.f32 %v512, 0.5
  %v533 = vmul.f32 %v516, 0.5
  %v534 = vmul.f32 %v520, 0.5
  %v535 = vmul.f32 %v524, 0.5
  %v536 = vmul.f32 %v528, 0.5
  %v537 = vtanh.pop %v530
  %v538 = vtanh.pop %v531
  %v539 = vtanh.pop %v532
  %v540 = vtanh.pop %v533
  %v541 = vtanh.pop %v534
  %v542 = vtanh.pop %v535
  %v543 = vtanh.pop %v536
  %v544 = vmul.f32 %v537, 0.5
  %v545 = vmul.f32 %v538, 0.5
  %v546 = vmul.f32 %v539, 0.5
  %v547 = vmul.f32 %v540, 0.5
  %v548 = vmul.f32 %v541, 0.5
  %v549 = vmul.f32 %v542, 0.5
  %v550 = vmul.f32 %v543, 0.5
  %v551 = vadd.f32 %v544, 0.5
  %v552 = vadd.f32 %v545, 0.5
  %v553 = vadd.f32 %v546, 0.5
  %v554 = vadd.f32 %v547, 0.5
  %v555 = vadd.f32 %v548, 0.5
  %v556 = vadd.f32 %v549, 0.5
  %v557 = vadd.f32 %v550, 0.5
  %v558 = vld [vmem:[%s3] sm:$0xff]
  %v559 = vld [vmem:[%s3 + $0x8] sm:$0xff]
  %v560 = vld [vmem:[%s3 + $0x10] sm:$0xff]
  %v561 = vld [vmem:[%s3 + $0x18] sm:$0xf]
  %vm562 = vcmask 457728
  %v564 = vsel %vm562, %v558, 0
  %v567 = vsel %vm562, %v559, 0
  %v570 = vsel %vm562, %v560, 0
  %v573 = vsel %vm562, %v561, 0
  %575 = vmatpush.msra.mxu0 0.0
  %576 = vmatpush.msra.mxu0 0.0
  %577 = vmatpush.msra.mxu0 0.0
  %578 = vmatpush.msra.mxu0 0.0
  %579 = vmatpush.msra.mxu0 0.0
  %580 = vmatpush.msra.mxu0 0.0
  %581 = vmatpush.msra.mxu0 0.0
  %582 = vmatpush.msra.mxu0 0.0
  %583 = vmatpush.msra.mxu0 0.0
  %v584 = vand.u32 %v557, 4294901760
  %585 = vmatpush.msra.mxu0 %v584
  %v586 = vand.u32 %v556, 4294901760
  %587 = vmatpush.msra.mxu0 %v586
  %v588 = vand.u32 %v555, 4294901760
  %589 = vmatpush.msra.mxu0 %v588
  %v590 = vand.u32 %v554, 4294901760
  %591 = vmatpush.msra.mxu0 %v590
  %v592 = vand.u32 %v553, 4294901760
  %593 = vmatpush.msra.mxu0 %v592
  %v594 = vand.u32 %v552, 4294901760
  %595 = vmatpush.msra.mxu0 %v594
  %v596 = vand.u32 %v551, 4294901760
  %597 = vmatpush.msra.mxu0 %v596
  %v598 = vand.u32 %v564, 4294901760
  %v599 = vsub.f32 %v564, %v598
  %v600 = vand.u32 %v599, 4294901760
  %v601 = vsub.f32 %v599, %v600
  %v602 = vand.u32 %v601, 4294901760
  %603 = vmatmul.f32.gmra.mxu0 %v602
  %v604 = vpop.f32.mrf.mxu0
  %v605 = vadd.f32 0.0, %v604
  %v606 = vand.u32 %v567, 4294901760
  %v607 = vsub.f32 %v567, %v606
  %v608 = vand.u32 %v607, 4294901760
  %v609 = vsub.f32 %v607, %v608
  %v610 = vand.u32 %v609, 4294901760
  %611 = vmatmul.f32.gmra.mxu0 %v610
  %v612 = vpop.f32.mrf.mxu0
  %v613 = vadd.f32 0.0, %v612
  %v614 = vand.u32 %v570, 4294901760
  %v615 = vsub.f32 %v570, %v614
  %v616 = vand.u32 %v615, 4294901760
  %v617 = vsub.f32 %v615, %v616
  %v618 = vand.u32 %v617, 4294901760
  %619 = vmatmul.f32.gmra.mxu0 %v618
  %v620 = vpop.f32.mrf.mxu0
  %v621 = vadd.f32 0.0, %v620
  %v622 = vand.u32 %v573, 4294901760
  %v623 = vsub.f32 %v573, %v622
  %v624 = vand.u32 %v623, 4294901760
  %v625 = vsub.f32 %v623, %v624
  %v626 = vand.u32 %v625, 4294901760
  %627 = vmatmul.f32.gmra.mxu0 %v626
  %v628 = vpop.f32.mrf.mxu0
  %v629 = vadd.f32 0.0, %v628
  %630 = vdwg.mxu0
  %631 = vmatpush.msra.mxu0 0.0
  %632 = vmatpush.msra.mxu0 0.0
  %633 = vmatpush.msra.mxu0 0.0
  %634 = vmatpush.msra.mxu0 0.0
  %635 = vmatpush.msra.mxu0 0.0
  %636 = vmatpush.msra.mxu0 0.0
  %637 = vmatpush.msra.mxu0 0.0
  %638 = vmatpush.msra.mxu0 0.0
  %639 = vmatpush.msra.mxu0 0.0
  %v640 = vand.u32 %v557, 4294901760
  %v641 = vsub.f32 %v557, %v640
  %v642 = vand.u32 %v641, 4294901760
  %v643 = vsub.f32 %v641, %v642
  %v644 = vand.u32 %v643, 4294901760
  %645 = vmatpush.msra.mxu0 %v644
  %v646 = vand.u32 %v556, 4294901760
  %v647 = vsub.f32 %v556, %v646
  %v648 = vand.u32 %v647, 4294901760
  %v649 = vsub.f32 %v647, %v648
  %v650 = vand.u32 %v649, 4294901760
  %651 = vmatpush.msra.mxu0 %v650
  %v652 = vand.u32 %v555, 4294901760
  %v653 = vsub.f32 %v555, %v652
  %v654 = vand.u32 %v653, 4294901760
  %v655 = vsub.f32 %v653, %v654
  %v656 = vand.u32 %v655, 4294901760
  %657 = vmatpush.msra.mxu0 %v656
  %v658 = vand.u32 %v554, 4294901760
  %v659 = vsub.f32 %v554, %v658
  %v660 = vand.u32 %v659, 4294901760
  %v661 = vsub.f32 %v659, %v660
  %v662 = vand.u32 %v661, 4294901760
  %663 = vmatpush.msra.mxu0 %v662
  %v664 = vand.u32 %v553, 4294901760
  %v665 = vsub.f32 %v553, %v664
  %v666 = vand.u32 %v665, 4294901760
  %v667 = vsub.f32 %v665, %v666
  %v668 = vand.u32 %v667, 4294901760
  %669 = vmatpush.msra.mxu0 %v668
  %v670 = vand.u32 %v552, 4294901760
  %v671 = vsub.f32 %v552, %v670
  %v672 = vand.u32 %v671, 4294901760
  %v673 = vsub.f32 %v671, %v672
  %v674 = vand.u32 %v673, 4294901760
  %675 = vmatpush.msra.mxu0 %v674
  %v676 = vand.u32 %v551, 4294901760
  %v677 = vsub.f32 %v551, %v676
  %v678 = vand.u32 %v677, 4294901760
  %v679 = vsub.f32 %v677, %v678
  %v680 = vand.u32 %v679, 4294901760
  %681 = vmatpush.msra.mxu0 %v680
  %v682 = vand.u32 %v564, 4294901760
  %683 = vmatmul.f32.gmra.mxu0 %v682
  %v684 = vpop.f32.mrf.mxu0
  %v685 = vadd.f32 %v605, %v684
  %v686 = vand.u32 %v567, 4294901760
  %687 = vmatmul.f32.gmra.mxu0 %v686
  %v688 = vpop.f32.mrf.mxu0
  %v689 = vadd.f32 %v613, %v688
  %v690 = vand.u32 %v570, 4294901760
  %691 = vmatmul.f32.gmra.mxu0 %v690
  %v692 = vpop.f32.mrf.mxu0
  %v693 = vadd.f32 %v621, %v692
  %v694 = vand.u32 %v573, 4294901760
  %695 = vmatmul.f32.gmra.mxu0 %v694
  %v696 = vpop.f32.mrf.mxu0
  %v697 = vadd.f32 %v629, %v696
  %698 = vdwg.mxu0
  %699 = vmatpush.msra.mxu0 0.0
  %700 = vmatpush.msra.mxu0 0.0
  %701 = vmatpush.msra.mxu0 0.0
  %702 = vmatpush.msra.mxu0 0.0
  %703 = vmatpush.msra.mxu0 0.0
  %704 = vmatpush.msra.mxu0 0.0
  %705 = vmatpush.msra.mxu0 0.0
  %706 = vmatpush.msra.mxu0 0.0
  %707 = vmatpush.msra.mxu0 0.0
  %v708 = vand.u32 %v557, 4294901760
  %v709 = vsub.f32 %v557, %v708
  %710 = vmatpush.msra.mxu0 %v709
  %v711 = vand.u32 %v556, 4294901760
  %v712 = vsub.f32 %v556, %v711
  %713 = vmatpush.msra.mxu0 %v712
  %v714 = vand.u32 %v555, 4294901760
  %v715 = vsub.f32 %v555, %v714
  %716 = vmatpush.msra.mxu0 %v715
  %v717 = vand.u32 %v554, 4294901760
  %v718 = vsub.f32 %v554, %v717
  %719 = vmatpush.msra.mxu0 %v718
  %v720 = vand.u32 %v553, 4294901760
  %v721 = vsub.f32 %v553, %v720
  %722 = vmatpush.msra.mxu0 %v721
  %v723 = vand.u32 %v552, 4294901760
  %v724 = vsub.f32 %v552, %v723
  %725 = vmatpush.msra.mxu0 %v724
  %v726 = vand.u32 %v551, 4294901760
  %v727 = vsub.f32 %v551, %v726
  %728 = vmatpush.msra.mxu0 %v727
  %v729 = vand.u32 %v564, 4294901760
  %v730 = vsub.f32 %v564, %v729
  %731 = vmatmul.f32.gmra.mxu0 %v730
  %v732 = vpop.f32.mrf.mxu0
  %v733 = vadd.f32 %v685, %v732
  %v734 = vand.u32 %v567, 4294901760
  %v735 = vsub.f32 %v567, %v734
  %736 = vmatmul.f32.gmra.mxu0 %v735
  %v737 = vpop.f32.mrf.mxu0
  %v738 = vadd.f32 %v689, %v737
  %v739 = vand.u32 %v570, 4294901760
  %v740 = vsub.f32 %v570, %v739
  %741 = vmatmul.f32.gmra.mxu0 %v740
  %v742 = vpop.f32.mrf.mxu0
  %v743 = vadd.f32 %v693, %v742
  %v744 = vand.u32 %v573, 4294901760
  %v745 = vsub.f32 %v573, %v744
  %746 = vmatmul.f32.gmra.mxu0 %v745
  %v747 = vpop.f32.mrf.mxu0
  %v748 = vadd.f32 %v697, %v747
  %749 = vdwg.mxu0
  %750 = vmatpush.msra.mxu0 0.0
  %751 = vmatpush.msra.mxu0 0.0
  %752 = vmatpush.msra.mxu0 0.0
  %753 = vmatpush.msra.mxu0 0.0
  %754 = vmatpush.msra.mxu0 0.0
  %755 = vmatpush.msra.mxu0 0.0
  %756 = vmatpush.msra.mxu0 0.0
  %757 = vmatpush.msra.mxu0 0.0
  %758 = vmatpush.msra.mxu0 0.0
  %v759 = vand.u32 %v557, 4294901760
  %760 = vmatpush.msra.mxu0 %v759
  %v761 = vand.u32 %v556, 4294901760
  %762 = vmatpush.msra.mxu0 %v761
  %v763 = vand.u32 %v555, 4294901760
  %764 = vmatpush.msra.mxu0 %v763
  %v765 = vand.u32 %v554, 4294901760
  %766 = vmatpush.msra.mxu0 %v765
  %v767 = vand.u32 %v553, 4294901760
  %768 = vmatpush.msra.mxu0 %v767
  %v769 = vand.u32 %v552, 4294901760
  %770 = vmatpush.msra.mxu0 %v769
  %v771 = vand.u32 %v551, 4294901760
  %772 = vmatpush.msra.mxu0 %v771
  %v773 = vand.u32 %v564, 4294901760
  %v774 = vsub.f32 %v564, %v773
  %v775 = vand.u32 %v774, 4294901760
  %776 = vmatmul.f32.gmra.mxu0 %v775
  %v777 = vpop.f32.mrf.mxu0
  %v778 = vadd.f32 %v733, %v777
  %v779 = vand.u32 %v567, 4294901760
  %v780 = vsub.f32 %v567, %v779
  %v781 = vand.u32 %v780, 4294901760
  %782 = vmatmul.f32.gmra.mxu0 %v781
  %v783 = vpop.f32.mrf.mxu0
  %v784 = vadd.f32 %v738, %v783
  %v785 = vand.u32 %v570, 4294901760
  %v786 = vsub.f32 %v570, %v785
  %v787 = vand.u32 %v786, 4294901760
  %788 = vmatmul.f32.gmra.mxu0 %v787
  %v789 = vpop.f32.mrf.mxu0
  %v790 = vadd.f32 %v743, %v789
  %v791 = vand.u32 %v573, 4294901760
  %v792 = vsub.f32 %v573, %v791
  %v793 = vand.u32 %v792, 4294901760
  %794 = vmatmul.f32.gmra.mxu0 %v793
  %v795 = vpop.f32.mrf.mxu0
  %v796 = vadd.f32 %v748, %v795
  %797 = vdwg.mxu0
  %798 = vmatpush.msra.mxu0 0.0
  %799 = vmatpush.msra.mxu0 0.0
  %800 = vmatpush.msra.mxu0 0.0
  %801 = vmatpush.msra.mxu0 0.0
  %802 = vmatpush.msra.mxu0 0.0
  %803 = vmatpush.msra.mxu0 0.0
  %804 = vmatpush.msra.mxu0 0.0
  %805 = vmatpush.msra.mxu0 0.0
  %806 = vmatpush.msra.mxu0 0.0
  %v807 = vand.u32 %v557, 4294901760
  %v808 = vsub.f32 %v557, %v807
  %v809 = vand.u32 %v808, 4294901760
  %810 = vmatpush.msra.mxu0 %v809
  %v811 = vand.u32 %v556, 4294901760
  %v812 = vsub.f32 %v556, %v811
  %v813 = vand.u32 %v812, 4294901760
  %814 = vmatpush.msra.mxu0 %v813
  %v815 = vand.u32 %v555, 4294901760
  %v816 = vsub.f32 %v555, %v815
  %v817 = vand.u32 %v816, 4294901760
  %818 = vmatpush.msra.mxu0 %v817
  %v819 = vand.u32 %v554, 4294901760
  %v820 = vsub.f32 %v554, %v819
  %v821 = vand.u32 %v820, 4294901760
  %822 = vmatpush.msra.mxu0 %v821
  %v823 = vand.u32 %v553, 4294901760
  %v824 = vsub.f32 %v553, %v823
  %v825 = vand.u32 %v824, 4294901760
  %826 = vmatpush.msra.mxu0 %v825
  %v827 = vand.u32 %v552, 4294901760
  %v828 = vsub.f32 %v552, %v827
  %v829 = vand.u32 %v828, 4294901760
  %830 = vmatpush.msra.mxu0 %v829
  %v831 = vand.u32 %v551, 4294901760
  %v832 = vsub.f32 %v551, %v831
  %v833 = vand.u32 %v832, 4294901760
  %834 = vmatpush.msra.mxu0 %v833
  %v835 = vand.u32 %v564, 4294901760
  %836 = vmatmul.f32.gmra.mxu0 %v835
  %v837 = vpop.f32.mrf.mxu0
  %v838 = vadd.f32 %v778, %v837
  %v839 = vand.u32 %v567, 4294901760
  %840 = vmatmul.f32.gmra.mxu0 %v839
  %v841 = vpop.f32.mrf.mxu0
  %v842 = vadd.f32 %v784, %v841
  %v843 = vand.u32 %v570, 4294901760
  %844 = vmatmul.f32.gmra.mxu0 %v843
  %v845 = vpop.f32.mrf.mxu0
  %v846 = vadd.f32 %v790, %v845
  %v847 = vand.u32 %v573, 4294901760
  %848 = vmatmul.f32.gmra.mxu0 %v847
  %v849 = vpop.f32.mrf.mxu0
  %v850 = vadd.f32 %v796, %v849
  %851 = vdwg.mxu0
  %852 = vmatpush.msra.mxu0 0.0
  %853 = vmatpush.msra.mxu0 0.0
  %854 = vmatpush.msra.mxu0 0.0
  %855 = vmatpush.msra.mxu0 0.0
  %856 = vmatpush.msra.mxu0 0.0
  %857 = vmatpush.msra.mxu0 0.0
  %858 = vmatpush.msra.mxu0 0.0
  %859 = vmatpush.msra.mxu0 0.0
  %860 = vmatpush.msra.mxu0 0.0
  %v861 = vand.u32 %v557, 4294901760
  %862 = vmatpush.msra.mxu0 %v861
  %v863 = vand.u32 %v556, 4294901760
  %864 = vmatpush.msra.mxu0 %v863
  %v865 = vand.u32 %v555, 4294901760
  %866 = vmatpush.msra.mxu0 %v865
  %v867 = vand.u32 %v554, 4294901760
  %868 = vmatpush.msra.mxu0 %v867
  %v869 = vand.u32 %v553, 4294901760
  %870 = vmatpush.msra.mxu0 %v869
  %v871 = vand.u32 %v552, 4294901760
  %872 = vmatpush.msra.mxu0 %v871
  %v873 = vand.u32 %v551, 4294901760
  %874 = vmatpush.msra.mxu0 %v873
  %v875 = vand.u32 %v564, 4294901760
  %876 = vmatmul.f32.gmra.mxu0 %v875
  %v877 = vpop.f32.mrf.mxu0
  %v878 = vadd.f32 %v838, %v877
  %v879 = vand.u32 %v567, 4294901760
  %880 = vmatmul.f32.gmra.mxu0 %v879
  %v881 = vpop.f32.mrf.mxu0
  %v882 = vadd.f32 %v842, %v881
  %v883 = vand.u32 %v570, 4294901760
  %884 = vmatmul.f32.gmra.mxu0 %v883
  %v885 = vpop.f32.mrf.mxu0
  %v886 = vadd.f32 %v846, %v885
  %v887 = vand.u32 %v573, 4294901760
  %888 = vmatmul.f32.gmra.mxu0 %v887
  %v889 = vpop.f32.mrf.mxu0
  %v890 = vadd.f32 %v850, %v889
  %891 = vdwg.mxu0
  %v892 = vld [vmem:[%s4] sm:$0xff]
  %v893 = vld [vmem:[%s4 + $0x8] sm:$0xff]
  %v894 = vld [vmem:[%s4 + $0x10] sm:$0xff]
  %v895 = vld [vmem:[%s4 + $0x18] sm:$0xf]
  %v897 = vsel %vm562, %v892, 0
  %v900 = vsel %vm562, %v893, 0
  %v903 = vsel %vm562, %v894, 0
  %v906 = vsel %vm562, %v895, 0
  %908 = vmatpush.msra.mxu0 0.0
  %909 = vmatpush.msra.mxu0 0.0
  %910 = vmatpush.msra.mxu0 0.0
  %911 = vmatpush.msra.mxu0 0.0
  %912 = vmatpush.msra.mxu0 0.0
  %913 = vmatpush.msra.mxu0 0.0
  %914 = vmatpush.msra.mxu0 0.0
  %915 = vmatpush.msra.mxu0 0.0
  %916 = vmatpush.msra.mxu0 0.0
  %v917 = vand.u32 %v557, 4294901760
  %918 = vmatpush.msra.mxu0 %v917
  %v919 = vand.u32 %v556, 4294901760
  %920 = vmatpush.msra.mxu0 %v919
  %v921 = vand.u32 %v555, 4294901760
  %922 = vmatpush.msra.mxu0 %v921
  %v923 = vand.u32 %v554, 4294901760
  %924 = vmatpush.msra.mxu0 %v923
  %v925 = vand.u32 %v553, 4294901760
  %926 = vmatpush.msra.mxu0 %v925
  %v927 = vand.u32 %v552, 4294901760
  %928 = vmatpush.msra.mxu0 %v927
  %v929 = vand.u32 %v551, 4294901760
  %930 = vmatpush.msra.mxu0 %v929
  %v931 = vand.u32 %v897, 4294901760
  %v932 = vsub.f32 %v897, %v931
  %v933 = vand.u32 %v932, 4294901760
  %v934 = vsub.f32 %v932, %v933
  %v935 = vand.u32 %v934, 4294901760
  %936 = vmatmul.f32.gmra.mxu0 %v935
  %v937 = vpop.f32.mrf.mxu0
  %v938 = vadd.f32 0.0, %v937
  %v939 = vand.u32 %v900, 4294901760
  %v940 = vsub.f32 %v900, %v939
  %v941 = vand.u32 %v940, 4294901760
  %v942 = vsub.f32 %v940, %v941
  %v943 = vand.u32 %v942, 4294901760
  %944 = vmatmul.f32.gmra.mxu0 %v943
  %v945 = vpop.f32.mrf.mxu0
  %v946 = vadd.f32 0.0, %v945
  %v947 = vand.u32 %v903, 4294901760
  %v948 = vsub.f32 %v903, %v947
  %v949 = vand.u32 %v948, 4294901760
  %v950 = vsub.f32 %v948, %v949
  %v951 = vand.u32 %v950, 4294901760
  %952 = vmatmul.f32.gmra.mxu0 %v951
  %v953 = vpop.f32.mrf.mxu0
  %v954 = vadd.f32 0.0, %v953
  %v955 = vand.u32 %v906, 4294901760
  %v956 = vsub.f32 %v906, %v955
  %v957 = vand.u32 %v956, 4294901760
  %v958 = vsub.f32 %v956, %v957
  %v959 = vand.u32 %v958, 4294901760
  %960 = vmatmul.f32.gmra.mxu0 %v959
  %v961 = vpop.f32.mrf.mxu0
  %v962 = vadd.f32 0.0, %v961
  %963 = vdwg.mxu0
  %964 = vmatpush.msra.mxu0 0.0
  %965 = vmatpush.msra.mxu0 0.0
  %966 = vmatpush.msra.mxu0 0.0
  %967 = vmatpush.msra.mxu0 0.0
  %968 = vmatpush.msra.mxu0 0.0
  %969 = vmatpush.msra.mxu0 0.0
  %970 = vmatpush.msra.mxu0 0.0
  %971 = vmatpush.msra.mxu0 0.0
  %972 = vmatpush.msra.mxu0 0.0
  %v973 = vand.u32 %v557, 4294901760
  %v974 = vsub.f32 %v557, %v973
  %v975 = vand.u32 %v974, 4294901760
  %v976 = vsub.f32 %v974, %v975
  %v977 = vand.u32 %v976, 4294901760
  %978 = vmatpush.msra.mxu0 %v977
  %v979 = vand.u32 %v556, 4294901760
  %v980 = vsub.f32 %v556, %v979
  %v981 = vand.u32 %v980, 4294901760
  %v982 = vsub.f32 %v980, %v981
  %v983 = vand.u32 %v982, 4294901760
  %984 = vmatpush.msra.mxu0 %v983
  %v985 = vand.u32 %v555, 4294901760
  %v986 = vsub.f32 %v555, %v985
  %v987 = vand.u32 %v986, 4294901760
  %v988 = vsub.f32 %v986, %v987
  %v989 = vand.u32 %v988, 4294901760
  %990 = vmatpush.msra.mxu0 %v989
  %v991 = vand.u32 %v554, 4294901760
  %v992 = vsub.f32 %v554, %v991
  %v993 = vand.u32 %v992, 4294901760
  %v994 = vsub.f32 %v992, %v993
  %v995 = vand.u32 %v994, 4294901760
  %996 = vmatpush.msra.mxu0 %v995
  %v997 = vand.u32 %v553, 4294901760
  %v998 = vsub.f32 %v553, %v997
  %v999 = vand.u32 %v998, 4294901760
  %v1000 = vsub.f32 %v998, %v999
  %v1001 = vand.u32 %v1000, 4294901760
  %1002 = vmatpush.msra.mxu0 %v1001
  %v1003 = vand.u32 %v552, 4294901760
  %v1004 = vsub.f32 %v552, %v1003
  %v1005 = vand.u32 %v1004, 4294901760
  %v1006 = vsub.f32 %v1004, %v1005
  %v1007 = vand.u32 %v1006, 4294901760
  %1008 = vmatpush.msra.mxu0 %v1007
  %v1009 = vand.u32 %v551, 4294901760
  %v1010 = vsub.f32 %v551, %v1009
  %v1011 = vand.u32 %v1010, 4294901760
  %v1012 = vsub.f32 %v1010, %v1011
  %v1013 = vand.u32 %v1012, 4294901760
  %1014 = vmatpush.msra.mxu0 %v1013
  %v1015 = vand.u32 %v897, 4294901760
  %1016 = vmatmul.f32.gmra.mxu0 %v1015
  %v1017 = vpop.f32.mrf.mxu0
  %v1018 = vadd.f32 %v938, %v1017
  %v1019 = vand.u32 %v900, 4294901760
  %1020 = vmatmul.f32.gmra.mxu0 %v1019
  %v1021 = vpop.f32.mrf.mxu0
  %v1022 = vadd.f32 %v946, %v1021
  %v1023 = vand.u32 %v903, 4294901760
  %1024 = vmatmul.f32.gmra.mxu0 %v1023
  %v1025 = vpop.f32.mrf.mxu0
  %v1026 = vadd.f32 %v954, %v1025
  %v1027 = vand.u32 %v906, 4294901760
  %1028 = vmatmul.f32.gmra.mxu0 %v1027
  %v1029 = vpop.f32.mrf.mxu0
  %v1030 = vadd.f32 %v962, %v1029
  %1031 = vdwg.mxu0
  %1032 = vmatpush.msra.mxu0 0.0
  %1033 = vmatpush.msra.mxu0 0.0
  %1034 = vmatpush.msra.mxu0 0.0
  %1035 = vmatpush.msra.mxu0 0.0
  %1036 = vmatpush.msra.mxu0 0.0
  %1037 = vmatpush.msra.mxu0 0.0
  %1038 = vmatpush.msra.mxu0 0.0
  %1039 = vmatpush.msra.mxu0 0.0
  %1040 = vmatpush.msra.mxu0 0.0
  %v1041 = vand.u32 %v557, 4294901760
  %v1042 = vsub.f32 %v557, %v1041
  %1043 = vmatpush.msra.mxu0 %v1042
  %v1044 = vand.u32 %v556, 4294901760
  %v1045 = vsub.f32 %v556, %v1044
  %1046 = vmatpush.msra.mxu0 %v1045
  %v1047 = vand.u32 %v555, 4294901760
  %v1048 = vsub.f32 %v555, %v1047
  %1049 = vmatpush.msra.mxu0 %v1048
  %v1050 = vand.u32 %v554, 4294901760
  %v1051 = vsub.f32 %v554, %v1050
  %1052 = vmatpush.msra.mxu0 %v1051
  %v1053 = vand.u32 %v553, 4294901760
  %v1054 = vsub.f32 %v553, %v1053
  %1055 = vmatpush.msra.mxu0 %v1054
  %v1056 = vand.u32 %v552, 4294901760
  %v1057 = vsub.f32 %v552, %v1056
  %1058 = vmatpush.msra.mxu0 %v1057
  %v1059 = vand.u32 %v551, 4294901760
  %v1060 = vsub.f32 %v551, %v1059
  %1061 = vmatpush.msra.mxu0 %v1060
  %v1062 = vand.u32 %v897, 4294901760
  %v1063 = vsub.f32 %v897, %v1062
  %1064 = vmatmul.f32.gmra.mxu0 %v1063
  %v1065 = vpop.f32.mrf.mxu0
  %v1066 = vadd.f32 %v1018, %v1065
  %v1067 = vand.u32 %v900, 4294901760
  %v1068 = vsub.f32 %v900, %v1067
  %1069 = vmatmul.f32.gmra.mxu0 %v1068
  %v1070 = vpop.f32.mrf.mxu0
  %v1071 = vadd.f32 %v1022, %v1070
  %v1072 = vand.u32 %v903, 4294901760
  %v1073 = vsub.f32 %v903, %v1072
  %1074 = vmatmul.f32.gmra.mxu0 %v1073
  %v1075 = vpop.f32.mrf.mxu0
  %v1076 = vadd.f32 %v1026, %v1075
  %v1077 = vand.u32 %v906, 4294901760
  %v1078 = vsub.f32 %v906, %v1077
  %1079 = vmatmul.f32.gmra.mxu0 %v1078
  %v1080 = vpop.f32.mrf.mxu0
  %v1081 = vadd.f32 %v1030, %v1080
  %1082 = vdwg.mxu0
  %1083 = vmatpush.msra.mxu0 0.0
  %1084 = vmatpush.msra.mxu0 0.0
  %1085 = vmatpush.msra.mxu0 0.0
  %1086 = vmatpush.msra.mxu0 0.0
  %1087 = vmatpush.msra.mxu0 0.0
  %1088 = vmatpush.msra.mxu0 0.0
  %1089 = vmatpush.msra.mxu0 0.0
  %1090 = vmatpush.msra.mxu0 0.0
  %1091 = vmatpush.msra.mxu0 0.0
  %v1092 = vand.u32 %v557, 4294901760
  %1093 = vmatpush.msra.mxu0 %v1092
  %v1094 = vand.u32 %v556, 4294901760
  %1095 = vmatpush.msra.mxu0 %v1094
  %v1096 = vand.u32 %v555, 4294901760
  %1097 = vmatpush.msra.mxu0 %v1096
  %v1098 = vand.u32 %v554, 4294901760
  %1099 = vmatpush.msra.mxu0 %v1098
  %v1100 = vand.u32 %v553, 4294901760
  %1101 = vmatpush.msra.mxu0 %v1100
  %v1102 = vand.u32 %v552, 4294901760
  %1103 = vmatpush.msra.mxu0 %v1102
  %v1104 = vand.u32 %v551, 4294901760
  %1105 = vmatpush.msra.mxu0 %v1104
  %v1106 = vand.u32 %v897, 4294901760
  %v1107 = vsub.f32 %v897, %v1106
  %v1108 = vand.u32 %v1107, 4294901760
  %1109 = vmatmul.f32.gmra.mxu0 %v1108
  %v1110 = vpop.f32.mrf.mxu0
  %v1111 = vadd.f32 %v1066, %v1110
  %v1112 = vand.u32 %v900, 4294901760
  %v1113 = vsub.f32 %v900, %v1112
  %v1114 = vand.u32 %v1113, 4294901760
  %1115 = vmatmul.f32.gmra.mxu0 %v1114
  %v1116 = vpop.f32.mrf.mxu0
  %v1117 = vadd.f32 %v1071, %v1116
  %v1118 = vand.u32 %v903, 4294901760
  %v1119 = vsub.f32 %v903, %v1118
  %v1120 = vand.u32 %v1119, 4294901760
  %1121 = vmatmul.f32.gmra.mxu0 %v1120
  %v1122 = vpop.f32.mrf.mxu0
  %v1123 = vadd.f32 %v1076, %v1122
  %v1124 = vand.u32 %v906, 4294901760
  %v1125 = vsub.f32 %v906, %v1124
  %v1126 = vand.u32 %v1125, 4294901760
  %1127 = vmatmul.f32.gmra.mxu0 %v1126
  %v1128 = vpop.f32.mrf.mxu0
  %v1129 = vadd.f32 %v1081, %v1128
  %1130 = vdwg.mxu0
  %1131 = vmatpush.msra.mxu0 0.0
  %1132 = vmatpush.msra.mxu0 0.0
  %1133 = vmatpush.msra.mxu0 0.0
  %1134 = vmatpush.msra.mxu0 0.0
  %1135 = vmatpush.msra.mxu0 0.0
  %1136 = vmatpush.msra.mxu0 0.0
  %1137 = vmatpush.msra.mxu0 0.0
  %1138 = vmatpush.msra.mxu0 0.0
  %1139 = vmatpush.msra.mxu0 0.0
  %v1140 = vand.u32 %v557, 4294901760
  %v1141 = vsub.f32 %v557, %v1140
  %v1142 = vand.u32 %v1141, 4294901760
  %1143 = vmatpush.msra.mxu0 %v1142
  %v1144 = vand.u32 %v556, 4294901760
  %v1145 = vsub.f32 %v556, %v1144
  %v1146 = vand.u32 %v1145, 4294901760
  %1147 = vmatpush.msra.mxu0 %v1146
  %v1148 = vand.u32 %v555, 4294901760
  %v1149 = vsub.f32 %v555, %v1148
  %v1150 = vand.u32 %v1149, 4294901760
  %1151 = vmatpush.msra.mxu0 %v1150
  %v1152 = vand.u32 %v554, 4294901760
  %v1153 = vsub.f32 %v554, %v1152
  %v1154 = vand.u32 %v1153, 4294901760
  %1155 = vmatpush.msra.mxu0 %v1154
  %v1156 = vand.u32 %v553, 4294901760
  %v1157 = vsub.f32 %v553, %v1156
  %v1158 = vand.u32 %v1157, 4294901760
  %1159 = vmatpush.msra.mxu0 %v1158
  %v1160 = vand.u32 %v552, 4294901760
  %v1161 = vsub.f32 %v552, %v1160
  %v1162 = vand.u32 %v1161, 4294901760
  %1163 = vmatpush.msra.mxu0 %v1162
  %v1164 = vand.u32 %v551, 4294901760
  %v1165 = vsub.f32 %v551, %v1164
  %v1166 = vand.u32 %v1165, 4294901760
  %1167 = vmatpush.msra.mxu0 %v1166
  %v1168 = vand.u32 %v897, 4294901760
  %1169 = vmatmul.f32.gmra.mxu0 %v1168
  %v1170 = vpop.f32.mrf.mxu0
  %v1171 = vadd.f32 %v1111, %v1170
  %v1172 = vand.u32 %v900, 4294901760
  %1173 = vmatmul.f32.gmra.mxu0 %v1172
  %v1174 = vpop.f32.mrf.mxu0
  %v1175 = vadd.f32 %v1117, %v1174
  %v1176 = vand.u32 %v903, 4294901760
  %1177 = vmatmul.f32.gmra.mxu0 %v1176
  %v1178 = vpop.f32.mrf.mxu0
  %v1179 = vadd.f32 %v1123, %v1178
  %v1180 = vand.u32 %v906, 4294901760
  %1181 = vmatmul.f32.gmra.mxu0 %v1180
  %v1182 = vpop.f32.mrf.mxu0
  %v1183 = vadd.f32 %v1129, %v1182
  %1184 = vdwg.mxu0
  %1185 = vmatpush.msra.mxu0 0.0
  %1186 = vmatpush.msra.mxu0 0.0
  %1187 = vmatpush.msra.mxu0 0.0
  %1188 = vmatpush.msra.mxu0 0.0
  %1189 = vmatpush.msra.mxu0 0.0
  %1190 = vmatpush.msra.mxu0 0.0
  %1191 = vmatpush.msra.mxu0 0.0
  %1192 = vmatpush.msra.mxu0 0.0
  %1193 = vmatpush.msra.mxu0 0.0
  %v1194 = vand.u32 %v557, 4294901760
  %1195 = vmatpush.msra.mxu0 %v1194
  %v1196 = vand.u32 %v556, 4294901760
  %1197 = vmatpush.msra.mxu0 %v1196
  %v1198 = vand.u32 %v555, 4294901760
  %1199 = vmatpush.msra.mxu0 %v1198
  %v1200 = vand.u32 %v554, 4294901760
  %1201 = vmatpush.msra.mxu0 %v1200
  %v1202 = vand.u32 %v553, 4294901760
  %1203 = vmatpush.msra.mxu0 %v1202
  %v1204 = vand.u32 %v552, 4294901760
  %1205 = vmatpush.msra.mxu0 %v1204
  %v1206 = vand.u32 %v551, 4294901760
  %1207 = vmatpush.msra.mxu0 %v1206
  %v1208 = vand.u32 %v897, 4294901760
  %1209 = vmatmul.f32.gmra.mxu0 %v1208
  %v1210 = vpop.f32.mrf.mxu0
  %v1211 = vadd.f32 %v1171, %v1210
  %v1212 = vand.u32 %v900, 4294901760
  %1213 = vmatmul.f32.gmra.mxu0 %v1212
  %v1214 = vpop.f32.mrf.mxu0
  %v1215 = vadd.f32 %v1175, %v1214
  %v1216 = vand.u32 %v903, 4294901760
  %1217 = vmatmul.f32.gmra.mxu0 %v1216
  %v1218 = vpop.f32.mrf.mxu0
  %v1219 = vadd.f32 %v1179, %v1218
  %v1220 = vand.u32 %v906, 4294901760
  %1221 = vmatmul.f32.gmra.mxu0 %v1220
  %v1222 = vpop.f32.mrf.mxu0
  %v1223 = vadd.f32 %v1183, %v1222
  %1224 = vdwg.mxu0
  %v1225 = vmax.f32 %v878, %v1211
  %v1226 = vmax.f32 %v882, %v1215
  %v1227 = vmax.f32 %v886, %v1219
  %v1228 = vmax.f32 %v890, %v1223
  %v1229 = vld [vmem:[%s8] sm:$0xff]
  %v1230 = vld [vmem:[%s8 + $0x8] sm:$0xff]
  %v1231 = vld [vmem:[%s8 + $0x10] sm:$0xff]
  %v1232 = vld [vmem:[%s8 + $0x18] sm:$0xff]
  %v1233 = vld [vmem:[%s8 + $0x20] sm:$0xff]
  %v1234 = vld [vmem:[%s5] sm:$0xff]
  %v1235 = vld [vmem:[%s5 + $0x8] sm:$0xff]
  %v1236 = vld [vmem:[%s5 + $0x10] sm:$0xff]
  %v1237 = vld [vmem:[%s5 + $0x18] sm:$0xff]
  %vm1238 = vcmask 261120
  %v1240 = vsel %vm1238, %v1225, 0
  %v1243 = vsel %vm1238, %v1226, 0
  %v1246 = vsel %vm1238, %v1227, 0
  %v1249 = vsel %vm1238, %v1228, 0
  %1251 = vmatpush.msra.mxu0 0.0
  %1252 = vmatpush.msra.mxu0 0.0
  %1253 = vmatpush.msra.mxu0 0.0
  %1254 = vmatpush.msra.mxu0 0.0
  %1255 = vmatpush.msra.mxu0 0.0
  %1256 = vmatpush.msra.mxu0 0.0
  %1257 = vmatpush.msra.mxu0 0.0
  %1258 = vmatpush.msra.mxu0 0.0
  %1259 = vmatpush.msra.mxu0 0.0
  %1260 = vmatpush.msra.mxu0 0.0
  %1261 = vmatpush.msra.mxu0 0.0
  %1262 = vmatpush.msra.mxu0 0.0
  %v1263 = vand.u32 %v1237, 4294901760
  %1264 = vmatpush.msra.mxu0 %v1263
  %v1265 = vand.u32 %v1236, 4294901760
  %1266 = vmatpush.msra.mxu0 %v1265
  %v1267 = vand.u32 %v1235, 4294901760
  %1268 = vmatpush.msra.mxu0 %v1267
  %v1269 = vand.u32 %v1234, 4294901760
  %1270 = vmatpush.msra.mxu0 %v1269
  %v1271 = vand.u32 %v1240, 4294901760
  %v1272 = vsub.f32 %v1240, %v1271
  %v1273 = vand.u32 %v1272, 4294901760
  %v1274 = vsub.f32 %v1272, %v1273
  %v1275 = vand.u32 %v1274, 4294901760
  %1276 = vmatmul.f32.gmra.mxu0 %v1275
  %v1277 = vpop.f32.mrf.mxu0
  %v1278 = vadd.f32 0.0, %v1277
  %v1279 = vand.u32 %v1243, 4294901760
  %v1280 = vsub.f32 %v1243, %v1279
  %v1281 = vand.u32 %v1280, 4294901760
  %v1282 = vsub.f32 %v1280, %v1281
  %v1283 = vand.u32 %v1282, 4294901760
  %1284 = vmatmul.f32.gmra.mxu0 %v1283
  %v1285 = vpop.f32.mrf.mxu0
  %v1286 = vadd.f32 0.0, %v1285
  %v1287 = vand.u32 %v1246, 4294901760
  %v1288 = vsub.f32 %v1246, %v1287
  %v1289 = vand.u32 %v1288, 4294901760
  %v1290 = vsub.f32 %v1288, %v1289
  %v1291 = vand.u32 %v1290, 4294901760
  %1292 = vmatmul.f32.gmra.mxu0 %v1291
  %v1293 = vpop.f32.mrf.mxu0
  %v1294 = vadd.f32 0.0, %v1293
  %v1295 = vand.u32 %v1249, 4294901760
  %v1296 = vsub.f32 %v1249, %v1295
  %v1297 = vand.u32 %v1296, 4294901760
  %v1298 = vsub.f32 %v1296, %v1297
  %v1299 = vand.u32 %v1298, 4294901760
  %1300 = vmatmul.f32.gmra.mxu0 %v1299
  %v1301 = vpop.f32.mrf.mxu0
  %v1302 = vadd.f32 0.0, %v1301
  %1303 = vdwg.mxu0
  %1304 = vmatpush.msra.mxu0 0.0
  %1305 = vmatpush.msra.mxu0 0.0
  %1306 = vmatpush.msra.mxu0 0.0
  %1307 = vmatpush.msra.mxu0 0.0
  %1308 = vmatpush.msra.mxu0 0.0
  %1309 = vmatpush.msra.mxu0 0.0
  %1310 = vmatpush.msra.mxu0 0.0
  %1311 = vmatpush.msra.mxu0 0.0
  %1312 = vmatpush.msra.mxu0 0.0
  %1313 = vmatpush.msra.mxu0 0.0
  %1314 = vmatpush.msra.mxu0 0.0
  %1315 = vmatpush.msra.mxu0 0.0
  %v1316 = vand.u32 %v1237, 4294901760
  %v1317 = vsub.f32 %v1237, %v1316
  %v1318 = vand.u32 %v1317, 4294901760
  %v1319 = vsub.f32 %v1317, %v1318
  %v1320 = vand.u32 %v1319, 4294901760
  %1321 = vmatpush.msra.mxu0 %v1320
  %v1322 = vand.u32 %v1236, 4294901760
  %v1323 = vsub.f32 %v1236, %v1322
  %v1324 = vand.u32 %v1323, 4294901760
  %v1325 = vsub.f32 %v1323, %v1324
  %v1326 = vand.u32 %v1325, 4294901760
  %1327 = vmatpush.msra.mxu0 %v1326
  %v1328 = vand.u32 %v1235, 4294901760
  %v1329 = vsub.f32 %v1235, %v1328
  %v1330 = vand.u32 %v1329, 4294901760
  %v1331 = vsub.f32 %v1329, %v1330
  %v1332 = vand.u32 %v1331, 4294901760
  %1333 = vmatpush.msra.mxu0 %v1332
  %v1334 = vand.u32 %v1234, 4294901760
  %v1335 = vsub.f32 %v1234, %v1334
  %v1336 = vand.u32 %v1335, 4294901760
  %v1337 = vsub.f32 %v1335, %v1336
  %v1338 = vand.u32 %v1337, 4294901760
  %1339 = vmatpush.msra.mxu0 %v1338
  %v1340 = vand.u32 %v1240, 4294901760
  %1341 = vmatmul.f32.gmra.mxu0 %v1340
  %v1342 = vpop.f32.mrf.mxu0
  %v1343 = vadd.f32 %v1278, %v1342
  %v1344 = vand.u32 %v1243, 4294901760
  %1345 = vmatmul.f32.gmra.mxu0 %v1344
  %v1346 = vpop.f32.mrf.mxu0
  %v1347 = vadd.f32 %v1286, %v1346
  %v1348 = vand.u32 %v1246, 4294901760
  %1349 = vmatmul.f32.gmra.mxu0 %v1348
  %v1350 = vpop.f32.mrf.mxu0
  %v1351 = vadd.f32 %v1294, %v1350
  %v1352 = vand.u32 %v1249, 4294901760
  %1353 = vmatmul.f32.gmra.mxu0 %v1352
  %v1354 = vpop.f32.mrf.mxu0
  %v1355 = vadd.f32 %v1302, %v1354
  %1356 = vdwg.mxu0
  %1357 = vmatpush.msra.mxu0 0.0
  %1358 = vmatpush.msra.mxu0 0.0
  %1359 = vmatpush.msra.mxu0 0.0
  %1360 = vmatpush.msra.mxu0 0.0
  %1361 = vmatpush.msra.mxu0 0.0
  %1362 = vmatpush.msra.mxu0 0.0
  %1363 = vmatpush.msra.mxu0 0.0
  %1364 = vmatpush.msra.mxu0 0.0
  %1365 = vmatpush.msra.mxu0 0.0
  %1366 = vmatpush.msra.mxu0 0.0
  %1367 = vmatpush.msra.mxu0 0.0
  %1368 = vmatpush.msra.mxu0 0.0
  %v1369 = vand.u32 %v1237, 4294901760
  %v1370 = vsub.f32 %v1237, %v1369
  %1371 = vmatpush.msra.mxu0 %v1370
  %v1372 = vand.u32 %v1236, 4294901760
  %v1373 = vsub.f32 %v1236, %v1372
  %1374 = vmatpush.msra.mxu0 %v1373
  %v1375 = vand.u32 %v1235, 4294901760
  %v1376 = vsub.f32 %v1235, %v1375
  %1377 = vmatpush.msra.mxu0 %v1376
  %v1378 = vand.u32 %v1234, 4294901760
  %v1379 = vsub.f32 %v1234, %v1378
  %1380 = vmatpush.msra.mxu0 %v1379
  %v1381 = vand.u32 %v1240, 4294901760
  %v1382 = vsub.f32 %v1240, %v1381
  %1383 = vmatmul.f32.gmra.mxu0 %v1382
  %v1384 = vpop.f32.mrf.mxu0
  %v1385 = vadd.f32 %v1343, %v1384
  %v1386 = vand.u32 %v1243, 4294901760
  %v1387 = vsub.f32 %v1243, %v1386
  %1388 = vmatmul.f32.gmra.mxu0 %v1387
  %v1389 = vpop.f32.mrf.mxu0
  %v1390 = vadd.f32 %v1347, %v1389
  %v1391 = vand.u32 %v1246, 4294901760
  %v1392 = vsub.f32 %v1246, %v1391
  %1393 = vmatmul.f32.gmra.mxu0 %v1392
  %v1394 = vpop.f32.mrf.mxu0
  %v1395 = vadd.f32 %v1351, %v1394
  %v1396 = vand.u32 %v1249, 4294901760
  %v1397 = vsub.f32 %v1249, %v1396
  %1398 = vmatmul.f32.gmra.mxu0 %v1397
  %v1399 = vpop.f32.mrf.mxu0
  %v1400 = vadd.f32 %v1355, %v1399
  %1401 = vdwg.mxu0
  %1402 = vmatpush.msra.mxu0 0.0
  %1403 = vmatpush.msra.mxu0 0.0
  %1404 = vmatpush.msra.mxu0 0.0
  %1405 = vmatpush.msra.mxu0 0.0
  %1406 = vmatpush.msra.mxu0 0.0
  %1407 = vmatpush.msra.mxu0 0.0
  %1408 = vmatpush.msra.mxu0 0.0
  %1409 = vmatpush.msra.mxu0 0.0
  %1410 = vmatpush.msra.mxu0 0.0
  %1411 = vmatpush.msra.mxu0 0.0
  %1412 = vmatpush.msra.mxu0 0.0
  %1413 = vmatpush.msra.mxu0 0.0
  %v1414 = vand.u32 %v1237, 4294901760
  %1415 = vmatpush.msra.mxu0 %v1414
  %v1416 = vand.u32 %v1236, 4294901760
  %1417 = vmatpush.msra.mxu0 %v1416
  %v1418 = vand.u32 %v1235, 4294901760
  %1419 = vmatpush.msra.mxu0 %v1418
  %v1420 = vand.u32 %v1234, 4294901760
  %1421 = vmatpush.msra.mxu0 %v1420
  %v1422 = vand.u32 %v1240, 4294901760
  %v1423 = vsub.f32 %v1240, %v1422
  %v1424 = vand.u32 %v1423, 4294901760
  %1425 = vmatmul.f32.gmra.mxu0 %v1424
  %v1426 = vpop.f32.mrf.mxu0
  %v1427 = vadd.f32 %v1385, %v1426
  %v1428 = vand.u32 %v1243, 4294901760
  %v1429 = vsub.f32 %v1243, %v1428
  %v1430 = vand.u32 %v1429, 4294901760
  %1431 = vmatmul.f32.gmra.mxu0 %v1430
  %v1432 = vpop.f32.mrf.mxu0
  %v1433 = vadd.f32 %v1390, %v1432
  %v1434 = vand.u32 %v1246, 4294901760
  %v1435 = vsub.f32 %v1246, %v1434
  %v1436 = vand.u32 %v1435, 4294901760
  %1437 = vmatmul.f32.gmra.mxu0 %v1436
  %v1438 = vpop.f32.mrf.mxu0
  %v1439 = vadd.f32 %v1395, %v1438
  %v1440 = vand.u32 %v1249, 4294901760
  %v1441 = vsub.f32 %v1249, %v1440
  %v1442 = vand.u32 %v1441, 4294901760
  %1443 = vmatmul.f32.gmra.mxu0 %v1442
  %v1444 = vpop.f32.mrf.mxu0
  %v1445 = vadd.f32 %v1400, %v1444
  %1446 = vdwg.mxu0
  %1447 = vmatpush.msra.mxu0 0.0
  %1448 = vmatpush.msra.mxu0 0.0
  %1449 = vmatpush.msra.mxu0 0.0
  %1450 = vmatpush.msra.mxu0 0.0
  %1451 = vmatpush.msra.mxu0 0.0
  %1452 = vmatpush.msra.mxu0 0.0
  %1453 = vmatpush.msra.mxu0 0.0
  %1454 = vmatpush.msra.mxu0 0.0
  %1455 = vmatpush.msra.mxu0 0.0
  %1456 = vmatpush.msra.mxu0 0.0
  %1457 = vmatpush.msra.mxu0 0.0
  %1458 = vmatpush.msra.mxu0 0.0
  %v1459 = vand.u32 %v1237, 4294901760
  %v1460 = vsub.f32 %v1237, %v1459
  %v1461 = vand.u32 %v1460, 4294901760
  %1462 = vmatpush.msra.mxu0 %v1461
  %v1463 = vand.u32 %v1236, 4294901760
  %v1464 = vsub.f32 %v1236, %v1463
  %v1465 = vand.u32 %v1464, 4294901760
  %1466 = vmatpush.msra.mxu0 %v1465
  %v1467 = vand.u32 %v1235, 4294901760
  %v1468 = vsub.f32 %v1235, %v1467
  %v1469 = vand.u32 %v1468, 4294901760
  %1470 = vmatpush.msra.mxu0 %v1469
  %v1471 = vand.u32 %v1234, 4294901760
  %v1472 = vsub.f32 %v1234, %v1471
  %v1473 = vand.u32 %v1472, 4294901760
  %1474 = vmatpush.msra.mxu0 %v1473
  %v1475 = vand.u32 %v1240, 4294901760
  %1476 = vmatmul.f32.gmra.mxu0 %v1475
  %v1477 = vpop.f32.mrf.mxu0
  %v1478 = vadd.f32 %v1427, %v1477
  %v1479 = vand.u32 %v1243, 4294901760
  %1480 = vmatmul.f32.gmra.mxu0 %v1479
  %v1481 = vpop.f32.mrf.mxu0
  %v1482 = vadd.f32 %v1433, %v1481
  %v1483 = vand.u32 %v1246, 4294901760
  %1484 = vmatmul.f32.gmra.mxu0 %v1483
  %v1485 = vpop.f32.mrf.mxu0
  %v1486 = vadd.f32 %v1439, %v1485
  %v1487 = vand.u32 %v1249, 4294901760
  %1488 = vmatmul.f32.gmra.mxu0 %v1487
  %v1489 = vpop.f32.mrf.mxu0
  %v1490 = vadd.f32 %v1445, %v1489
  %1491 = vdwg.mxu0
  %1492 = vmatpush.msra.mxu0 0.0
  %1493 = vmatpush.msra.mxu0 0.0
  %1494 = vmatpush.msra.mxu0 0.0
  %1495 = vmatpush.msra.mxu0 0.0
  %1496 = vmatpush.msra.mxu0 0.0
  %1497 = vmatpush.msra.mxu0 0.0
  %1498 = vmatpush.msra.mxu0 0.0
  %1499 = vmatpush.msra.mxu0 0.0
  %1500 = vmatpush.msra.mxu0 0.0
  %1501 = vmatpush.msra.mxu0 0.0
  %1502 = vmatpush.msra.mxu0 0.0
  %1503 = vmatpush.msra.mxu0 0.0
  %v1504 = vand.u32 %v1237, 4294901760
  %1505 = vmatpush.msra.mxu0 %v1504
  %v1506 = vand.u32 %v1236, 4294901760
  %1507 = vmatpush.msra.mxu0 %v1506
  %v1508 = vand.u32 %v1235, 4294901760
  %1509 = vmatpush.msra.mxu0 %v1508
  %v1510 = vand.u32 %v1234, 4294901760
  %1511 = vmatpush.msra.mxu0 %v1510
  %v1512 = vand.u32 %v1240, 4294901760
  %1513 = vmatmul.f32.gmra.mxu0 %v1512
  %v1514 = vpop.f32.mrf.mxu0
  %v1515 = vadd.f32 %v1478, %v1514
  %v1516 = vand.u32 %v1243, 4294901760
  %1517 = vmatmul.f32.gmra.mxu0 %v1516
  %v1518 = vpop.f32.mrf.mxu0
  %v1519 = vadd.f32 %v1482, %v1518
  %v1520 = vand.u32 %v1246, 4294901760
  %1521 = vmatmul.f32.gmra.mxu0 %v1520
  %v1522 = vpop.f32.mrf.mxu0
  %v1523 = vadd.f32 %v1486, %v1522
  %v1524 = vand.u32 %v1249, 4294901760
  %1525 = vmatmul.f32.gmra.mxu0 %v1524
  %v1526 = vpop.f32.mrf.mxu0
  %v1527 = vadd.f32 %v1490, %v1526
  %1528 = vdwg.mxu0
  %v1529 = vld [vmem:[%s6] sm:$0xff]
  %v1530 = vld [vmem:[%s6 + $0x8] sm:$0xff]
  %v1531 = vld [vmem:[%s6 + $0x10] sm:$0xff]
  %v1532 = vld [vmem:[%s6 + $0x18] sm:$0xff]
  %1533 = vmatpush.msra.mxu0 0.0
  %1534 = vmatpush.msra.mxu0 0.0
  %1535 = vmatpush.msra.mxu0 0.0
  %1536 = vmatpush.msra.mxu0 0.0
  %1537 = vmatpush.msra.mxu0 0.0
  %1538 = vmatpush.msra.mxu0 0.0
  %1539 = vmatpush.msra.mxu0 0.0
  %1540 = vmatpush.msra.mxu0 0.0
  %1541 = vmatpush.msra.mxu0 0.0
  %1542 = vmatpush.msra.mxu0 0.0
  %1543 = vmatpush.msra.mxu0 0.0
  %1544 = vmatpush.msra.mxu0 0.0
  %v1545 = vand.u32 %v1532, 4294901760
  %1546 = vmatpush.msra.mxu0 %v1545
  %v1547 = vand.u32 %v1531, 4294901760
  %1548 = vmatpush.msra.mxu0 %v1547
  %v1549 = vand.u32 %v1530, 4294901760
  %1550 = vmatpush.msra.mxu0 %v1549
  %v1551 = vand.u32 %v1529, 4294901760
  %1552 = vmatpush.msra.mxu0 %v1551
  %v1553 = vand.u32 %v1240, 4294901760
  %v1554 = vsub.f32 %v1240, %v1553
  %v1555 = vand.u32 %v1554, 4294901760
  %v1556 = vsub.f32 %v1554, %v1555
  %v1557 = vand.u32 %v1556, 4294901760
  %1558 = vmatmul.f32.gmra.mxu0 %v1557
  %v1559 = vpop.f32.mrf.mxu0
  %v1560 = vadd.f32 0.0, %v1559
  %v1561 = vand.u32 %v1243, 4294901760
  %v1562 = vsub.f32 %v1243, %v1561
  %v1563 = vand.u32 %v1562, 4294901760
  %v1564 = vsub.f32 %v1562, %v1563
  %v1565 = vand.u32 %v1564, 4294901760
  %1566 = vmatmul.f32.gmra.mxu0 %v1565
  %v1567 = vpop.f32.mrf.mxu0
  %v1568 = vadd.f32 0.0, %v1567
  %v1569 = vand.u32 %v1246, 4294901760
  %v1570 = vsub.f32 %v1246, %v1569
  %v1571 = vand.u32 %v1570, 4294901760
  %v1572 = vsub.f32 %v1570, %v1571
  %v1573 = vand.u32 %v1572, 4294901760
  %1574 = vmatmul.f32.gmra.mxu0 %v1573
  %v1575 = vpop.f32.mrf.mxu0
  %v1576 = vadd.f32 0.0, %v1575
  %v1577 = vand.u32 %v1249, 4294901760
  %v1578 = vsub.f32 %v1249, %v1577
  %v1579 = vand.u32 %v1578, 4294901760
  %v1580 = vsub.f32 %v1578, %v1579
  %v1581 = vand.u32 %v1580, 4294901760
  %1582 = vmatmul.f32.gmra.mxu0 %v1581
  %v1583 = vpop.f32.mrf.mxu0
  %v1584 = vadd.f32 0.0, %v1583
  %1585 = vdwg.mxu0
  %1586 = vmatpush.msra.mxu0 0.0
  %1587 = vmatpush.msra.mxu0 0.0
  %1588 = vmatpush.msra.mxu0 0.0
  %1589 = vmatpush.msra.mxu0 0.0
  %1590 = vmatpush.msra.mxu0 0.0
  %1591 = vmatpush.msra.mxu0 0.0
  %1592 = vmatpush.msra.mxu0 0.0
  %1593 = vmatpush.msra.mxu0 0.0
  %1594 = vmatpush.msra.mxu0 0.0
  %1595 = vmatpush.msra.mxu0 0.0
  %1596 = vmatpush.msra.mxu0 0.0
  %1597 = vmatpush.msra.mxu0 0.0
  %v1598 = vand.u32 %v1532, 4294901760
  %v1599 = vsub.f32 %v1532, %v1598
  %v1600 = vand.u32 %v1599, 4294901760
  %v1601 = vsub.f32 %v1599, %v1600
  %v1602 = vand.u32 %v1601, 4294901760
  %1603 = vmatpush.msra.mxu0 %v1602
  %v1604 = vand.u32 %v1531, 4294901760
  %v1605 = vsub.f32 %v1531, %v1604
  %v1606 = vand.u32 %v1605, 4294901760
  %v1607 = vsub.f32 %v1605, %v1606
  %v1608 = vand.u32 %v1607, 4294901760
  %1609 = vmatpush.msra.mxu0 %v1608
  %v1610 = vand.u32 %v1530, 4294901760
  %v1611 = vsub.f32 %v1530, %v1610
  %v1612 = vand.u32 %v1611, 4294901760
  %v1613 = vsub.f32 %v1611, %v1612
  %v1614 = vand.u32 %v1613, 4294901760
  %1615 = vmatpush.msra.mxu0 %v1614
  %v1616 = vand.u32 %v1529, 4294901760
  %v1617 = vsub.f32 %v1529, %v1616
  %v1618 = vand.u32 %v1617, 4294901760
  %v1619 = vsub.f32 %v1617, %v1618
  %v1620 = vand.u32 %v1619, 4294901760
  %1621 = vmatpush.msra.mxu0 %v1620
  %v1622 = vand.u32 %v1240, 4294901760
  %1623 = vmatmul.f32.gmra.mxu0 %v1622
  %v1624 = vpop.f32.mrf.mxu0
  %v1625 = vadd.f32 %v1560, %v1624
  %v1626 = vand.u32 %v1243, 4294901760
  %1627 = vmatmul.f32.gmra.mxu0 %v1626
  %v1628 = vpop.f32.mrf.mxu0
  %v1629 = vadd.f32 %v1568, %v1628
  %v1630 = vand.u32 %v1246, 4294901760
  %1631 = vmatmul.f32.gmra.mxu0 %v1630
  %v1632 = vpop.f32.mrf.mxu0
  %v1633 = vadd.f32 %v1576, %v1632
  %v1634 = vand.u32 %v1249, 4294901760
  %1635 = vmatmul.f32.gmra.mxu0 %v1634
  %v1636 = vpop.f32.mrf.mxu0
  %v1637 = vadd.f32 %v1584, %v1636
  %1638 = vdwg.mxu0
  %1639 = vmatpush.msra.mxu0 0.0
  %1640 = vmatpush.msra.mxu0 0.0
  %1641 = vmatpush.msra.mxu0 0.0
  %1642 = vmatpush.msra.mxu0 0.0
  %1643 = vmatpush.msra.mxu0 0.0
  %1644 = vmatpush.msra.mxu0 0.0
  %1645 = vmatpush.msra.mxu0 0.0
  %1646 = vmatpush.msra.mxu0 0.0
  %1647 = vmatpush.msra.mxu0 0.0
  %1648 = vmatpush.msra.mxu0 0.0
  %1649 = vmatpush.msra.mxu0 0.0
  %1650 = vmatpush.msra.mxu0 0.0
  %v1651 = vand.u32 %v1532, 4294901760
  %v1652 = vsub.f32 %v1532, %v1651
  %1653 = vmatpush.msra.mxu0 %v1652
  %v1654 = vand.u32 %v1531, 4294901760
  %v1655 = vsub.f32 %v1531, %v1654
  %1656 = vmatpush.msra.mxu0 %v1655
  %v1657 = vand.u32 %v1530, 4294901760
  %v1658 = vsub.f32 %v1530, %v1657
  %1659 = vmatpush.msra.mxu0 %v1658
  %v1660 = vand.u32 %v1529, 4294901760
  %v1661 = vsub.f32 %v1529, %v1660
  %1662 = vmatpush.msra.mxu0 %v1661
  %v1663 = vand.u32 %v1240, 4294901760
  %v1664 = vsub.f32 %v1240, %v1663
  %1665 = vmatmul.f32.gmra.mxu0 %v1664
  %v1666 = vpop.f32.mrf.mxu0
  %v1667 = vadd.f32 %v1625, %v1666
  %v1668 = vand.u32 %v1243, 4294901760
  %v1669 = vsub.f32 %v1243, %v1668
  %1670 = vmatmul.f32.gmra.mxu0 %v1669
  %v1671 = vpop.f32.mrf.mxu0
  %v1672 = vadd.f32 %v1629, %v1671
  %v1673 = vand.u32 %v1246, 4294901760
  %v1674 = vsub.f32 %v1246, %v1673
  %1675 = vmatmul.f32.gmra.mxu0 %v1674
  %v1676 = vpop.f32.mrf.mxu0
  %v1677 = vadd.f32 %v1633, %v1676
  %v1678 = vand.u32 %v1249, 4294901760
  %v1679 = vsub.f32 %v1249, %v1678
  %1680 = vmatmul.f32.gmra.mxu0 %v1679
  %v1681 = vpop.f32.mrf.mxu0
  %v1682 = vadd.f32 %v1637, %v1681
  %1683 = vdwg.mxu0
  %1684 = vmatpush.msra.mxu0 0.0
  %1685 = vmatpush.msra.mxu0 0.0
  %1686 = vmatpush.msra.mxu0 0.0
  %1687 = vmatpush.msra.mxu0 0.0
  %1688 = vmatpush.msra.mxu0 0.0
  %1689 = vmatpush.msra.mxu0 0.0
  %1690 = vmatpush.msra.mxu0 0.0
  %1691 = vmatpush.msra.mxu0 0.0
  %1692 = vmatpush.msra.mxu0 0.0
  %1693 = vmatpush.msra.mxu0 0.0
  %1694 = vmatpush.msra.mxu0 0.0
  %1695 = vmatpush.msra.mxu0 0.0
  %v1696 = vand.u32 %v1532, 4294901760
  %1697 = vmatpush.msra.mxu0 %v1696
  %v1698 = vand.u32 %v1531, 4294901760
  %1699 = vmatpush.msra.mxu0 %v1698
  %v1700 = vand.u32 %v1530, 4294901760
  %1701 = vmatpush.msra.mxu0 %v1700
  %v1702 = vand.u32 %v1529, 4294901760
  %1703 = vmatpush.msra.mxu0 %v1702
  %v1704 = vand.u32 %v1240, 4294901760
  %v1705 = vsub.f32 %v1240, %v1704
  %v1706 = vand.u32 %v1705, 4294901760
  %1707 = vmatmul.f32.gmra.mxu0 %v1706
  %v1708 = vpop.f32.mrf.mxu0
  %v1709 = vadd.f32 %v1667, %v1708
  %v1710 = vand.u32 %v1243, 4294901760
  %v1711 = vsub.f32 %v1243, %v1710
  %v1712 = vand.u32 %v1711, 4294901760
  %1713 = vmatmul.f32.gmra.mxu0 %v1712
  %v1714 = vpop.f32.mrf.mxu0
  %v1715 = vadd.f32 %v1672, %v1714
  %v1716 = vand.u32 %v1246, 4294901760
  %v1717 = vsub.f32 %v1246, %v1716
  %v1718 = vand.u32 %v1717, 4294901760
  %1719 = vmatmul.f32.gmra.mxu0 %v1718
  %v1720 = vpop.f32.mrf.mxu0
  %v1721 = vadd.f32 %v1677, %v1720
  %v1722 = vand.u32 %v1249, 4294901760
  %v1723 = vsub.f32 %v1249, %v1722
  %v1724 = vand.u32 %v1723, 4294901760
  %1725 = vmatmul.f32.gmra.mxu0 %v1724
  %v1726 = vpop.f32.mrf.mxu0
  %v1727 = vadd.f32 %v1682, %v1726
  %1728 = vdwg.mxu0
  %1729 = vmatpush.msra.mxu0 0.0
  %1730 = vmatpush.msra.mxu0 0.0
  %1731 = vmatpush.msra.mxu0 0.0
  %1732 = vmatpush.msra.mxu0 0.0
  %1733 = vmatpush.msra.mxu0 0.0
  %1734 = vmatpush.msra.mxu0 0.0
  %1735 = vmatpush.msra.mxu0 0.0
  %1736 = vmatpush.msra.mxu0 0.0
  %1737 = vmatpush.msra.mxu0 0.0
  %1738 = vmatpush.msra.mxu0 0.0
  %1739 = vmatpush.msra.mxu0 0.0
  %1740 = vmatpush.msra.mxu0 0.0
  %v1741 = vand.u32 %v1532, 4294901760
  %v1742 = vsub.f32 %v1532, %v1741
  %v1743 = vand.u32 %v1742, 4294901760
  %1744 = vmatpush.msra.mxu0 %v1743
  %v1745 = vand.u32 %v1531, 4294901760
  %v1746 = vsub.f32 %v1531, %v1745
  %v1747 = vand.u32 %v1746, 4294901760
  %1748 = vmatpush.msra.mxu0 %v1747
  %v1749 = vand.u32 %v1530, 4294901760
  %v1750 = vsub.f32 %v1530, %v1749
  %v1751 = vand.u32 %v1750, 4294901760
  %1752 = vmatpush.msra.mxu0 %v1751
  %v1753 = vand.u32 %v1529, 4294901760
  %v1754 = vsub.f32 %v1529, %v1753
  %v1755 = vand.u32 %v1754, 4294901760
  %1756 = vmatpush.msra.mxu0 %v1755
  %v1757 = vand.u32 %v1240, 4294901760
  %1758 = vmatmul.f32.gmra.mxu0 %v1757
  %v1759 = vpop.f32.mrf.mxu0
  %v1760 = vadd.f32 %v1709, %v1759
  %v1761 = vand.u32 %v1243, 4294901760
  %1762 = vmatmul.f32.gmra.mxu0 %v1761
  %v1763 = vpop.f32.mrf.mxu0
  %v1764 = vadd.f32 %v1715, %v1763
  %v1765 = vand.u32 %v1246, 4294901760
  %1766 = vmatmul.f32.gmra.mxu0 %v1765
  %v1767 = vpop.f32.mrf.mxu0
  %v1768 = vadd.f32 %v1721, %v1767
  %v1769 = vand.u32 %v1249, 4294901760
  %1770 = vmatmul.f32.gmra.mxu0 %v1769
  %v1771 = vpop.f32.mrf.mxu0
  %v1772 = vadd.f32 %v1727, %v1771
  %1773 = vdwg.mxu0
  %1774 = vmatpush.msra.mxu0 0.0
  %1775 = vmatpush.msra.mxu0 0.0
  %1776 = vmatpush.msra.mxu0 0.0
  %1777 = vmatpush.msra.mxu0 0.0
  %1778 = vmatpush.msra.mxu0 0.0
  %1779 = vmatpush.msra.mxu0 0.0
  %1780 = vmatpush.msra.mxu0 0.0
  %1781 = vmatpush.msra.mxu0 0.0
  %1782 = vmatpush.msra.mxu0 0.0
  %1783 = vmatpush.msra.mxu0 0.0
  %1784 = vmatpush.msra.mxu0 0.0
  %1785 = vmatpush.msra.mxu0 0.0
  %v1786 = vand.u32 %v1532, 4294901760
  %1787 = vmatpush.msra.mxu0 %v1786
  %v1788 = vand.u32 %v1531, 4294901760
  %1789 = vmatpush.msra.mxu0 %v1788
  %v1790 = vand.u32 %v1530, 4294901760
  %1791 = vmatpush.msra.mxu0 %v1790
  %v1792 = vand.u32 %v1529, 4294901760
  %1793 = vmatpush.msra.mxu0 %v1792
  %v1794 = vand.u32 %v1240, 4294901760
  %1795 = vmatmul.f32.gmra.mxu0 %v1794
  %v1796 = vpop.f32.mrf.mxu0
  %v1797 = vadd.f32 %v1760, %v1796
  %v1798 = vand.u32 %v1243, 4294901760
  %1799 = vmatmul.f32.gmra.mxu0 %v1798
  %v1800 = vpop.f32.mrf.mxu0
  %v1801 = vadd.f32 %v1764, %v1800
  %v1802 = vand.u32 %v1246, 4294901760
  %1803 = vmatmul.f32.gmra.mxu0 %v1802
  %v1804 = vpop.f32.mrf.mxu0
  %v1805 = vadd.f32 %v1768, %v1804
  %v1806 = vand.u32 %v1249, 4294901760
  %1807 = vmatmul.f32.gmra.mxu0 %v1806
  %v1808 = vpop.f32.mrf.mxu0
  %v1809 = vadd.f32 %v1772, %v1808
  %1810 = vdwg.mxu0
  %v1811 = vmax.f32 %v1515, %v1797
  %v1812 = vmax.f32 %v1519, %v1801
  %v1813 = vmax.f32 %v1523, %v1805
  %v1814 = vmax.f32 %v1527, %v1809
  %v1815 = vld [vmem:[%s7] sm:$0xff]
  %v1816 = vld [vmem:[%s7 + $0x8] sm:$0xff]
  %v1817 = vld [vmem:[%s7 + $0x10] sm:$0xff]
  %v1818 = vld [vmem:[%s7 + $0x18] sm:$0xff]
  %v1819 = vld [vmem:[%s7 + $0x20] sm:$0xff]
  %vm1820 = vcmask 228352
  %v1822 = vsel %vm1820, %v1815, 0
  %v1825 = vsel %vm1820, %v1816, 0
  %v1828 = vsel %vm1820, %v1817, 0
  %v1831 = vsel %vm1820, %v1818, 0
  %v1834 = vsel %vm1820, %v1819, 0
  %vm1836 = vcmask 1043456
  %v1838 = vsel %vm1836, %v1814, 0
  %1840 = vmatpush.msra.mxu0 0.0
  %1841 = vmatpush.msra.mxu0 0.0
  %1842 = vmatpush.msra.mxu0 0.0
  %1843 = vmatpush.msra.mxu0 0.0
  %1844 = vmatpush.msra.mxu0 0.0
  %1845 = vmatpush.msra.mxu0 0.0
  %1846 = vmatpush.msra.mxu0 0.0
  %1847 = vmatpush.msra.mxu0 0.0
  %1848 = vmatpush.msra.mxu0 0.0
  %1849 = vmatpush.msra.mxu0 0.0
  %1850 = vmatpush.msra.mxu0 0.0
  %1851 = vmatpush.msra.mxu0 0.0
  %v1852 = vand.u32 %v1838, 4294901760
  %1853 = vmatpush.msra.mxu0 %v1852
  %v1854 = vand.u32 %v1813, 4294901760
  %1855 = vmatpush.msra.mxu0 %v1854
  %v1856 = vand.u32 %v1812, 4294901760
  %1857 = vmatpush.msra.mxu0 %v1856
  %v1858 = vand.u32 %v1811, 4294901760
  %1859 = vmatpush.msra.mxu0 %v1858
  %v1860 = vand.u32 %v1822, 4294901760
  %v1861 = vsub.f32 %v1822, %v1860
  %v1862 = vand.u32 %v1861, 4294901760
  %v1863 = vsub.f32 %v1861, %v1862
  %v1864 = vand.u32 %v1863, 4294901760
  %1865 = vmatmul.f32.gmra.mxu0 %v1864
  %v1866 = vpop.f32.mrf.mxu0
  %v1867 = vadd.f32 0.0, %v1866
  %v1868 = vand.u32 %v1825, 4294901760
  %v1869 = vsub.f32 %v1825, %v1868
  %v1870 = vand.u32 %v1869, 4294901760
  %v1871 = vsub.f32 %v1869, %v1870
  %v1872 = vand.u32 %v1871, 4294901760
  %1873 = vmatmul.f32.gmra.mxu0 %v1872
  %v1874 = vpop.f32.mrf.mxu0
  %v1875 = vadd.f32 0.0, %v1874
  %v1876 = vand.u32 %v1828, 4294901760
  %v1877 = vsub.f32 %v1828, %v1876
  %v1878 = vand.u32 %v1877, 4294901760
  %v1879 = vsub.f32 %v1877, %v1878
  %v1880 = vand.u32 %v1879, 4294901760
  %1881 = vmatmul.f32.gmra.mxu0 %v1880
  %v1882 = vpop.f32.mrf.mxu0
  %v1883 = vadd.f32 0.0, %v1882
  %v1884 = vand.u32 %v1831, 4294901760
  %v1885 = vsub.f32 %v1831, %v1884
  %v1886 = vand.u32 %v1885, 4294901760
  %v1887 = vsub.f32 %v1885, %v1886
  %v1888 = vand.u32 %v1887, 4294901760
  %1889 = vmatmul.f32.gmra.mxu0 %v1888
  %v1890 = vpop.f32.mrf.mxu0
  %v1891 = vadd.f32 0.0, %v1890
  %v1892 = vand.u32 %v1834, 4294901760
  %v1893 = vsub.f32 %v1834, %v1892
  %v1894 = vand.u32 %v1893, 4294901760
  %v1895 = vsub.f32 %v1893, %v1894
  %v1896 = vand.u32 %v1895, 4294901760
  %1897 = vmatmul.f32.gmra.mxu0 %v1896
  %v1898 = vpop.f32.mrf.mxu0
  %v1899 = vadd.f32 0.0, %v1898
  %1900 = vdwg.mxu0
  %1901 = vmatpush.msra.mxu0 0.0
  %1902 = vmatpush.msra.mxu0 0.0
  %1903 = vmatpush.msra.mxu0 0.0
  %1904 = vmatpush.msra.mxu0 0.0
  %1905 = vmatpush.msra.mxu0 0.0
  %1906 = vmatpush.msra.mxu0 0.0
  %1907 = vmatpush.msra.mxu0 0.0
  %1908 = vmatpush.msra.mxu0 0.0
  %1909 = vmatpush.msra.mxu0 0.0
  %1910 = vmatpush.msra.mxu0 0.0
  %1911 = vmatpush.msra.mxu0 0.0
  %1912 = vmatpush.msra.mxu0 0.0
  %v1913 = vand.u32 %v1838, 4294901760
  %v1914 = vsub.f32 %v1838, %v1913
  %v1915 = vand.u32 %v1914, 4294901760
  %v1916 = vsub.f32 %v1914, %v1915
  %v1917 = vand.u32 %v1916, 4294901760
  %1918 = vmatpush.msra.mxu0 %v1917
  %v1919 = vand.u32 %v1813, 4294901760
  %v1920 = vsub.f32 %v1813, %v1919
  %v1921 = vand.u32 %v1920, 4294901760
  %v1922 = vsub.f32 %v1920, %v1921
  %v1923 = vand.u32 %v1922, 4294901760
  %1924 = vmatpush.msra.mxu0 %v1923
  %v1925 = vand.u32 %v1812, 4294901760
  %v1926 = vsub.f32 %v1812, %v1925
  %v1927 = vand.u32 %v1926, 4294901760
  %v1928 = vsub.f32 %v1926, %v1927
  %v1929 = vand.u32 %v1928, 4294901760
  %1930 = vmatpush.msra.mxu0 %v1929
  %v1931 = vand.u32 %v1811, 4294901760
  %v1932 = vsub.f32 %v1811, %v1931
  %v1933 = vand.u32 %v1932, 4294901760
  %v1934 = vsub.f32 %v1932, %v1933
  %v1935 = vand.u32 %v1934, 4294901760
  %1936 = vmatpush.msra.mxu0 %v1935
  %v1937 = vand.u32 %v1822, 4294901760
  %1938 = vmatmul.f32.gmra.mxu0 %v1937
  %v1939 = vpop.f32.mrf.mxu0
  %v1940 = vadd.f32 %v1867, %v1939
  %v1941 = vand.u32 %v1825, 4294901760
  %1942 = vmatmul.f32.gmra.mxu0 %v1941
  %v1943 = vpop.f32.mrf.mxu0
  %v1944 = vadd.f32 %v1875, %v1943
  %v1945 = vand.u32 %v1828, 4294901760
  %1946 = vmatmul.f32.gmra.mxu0 %v1945
  %v1947 = vpop.f32.mrf.mxu0
  %v1948 = vadd.f32 %v1883, %v1947
  %v1949 = vand.u32 %v1831, 4294901760
  %1950 = vmatmul.f32.gmra.mxu0 %v1949
  %v1951 = vpop.f32.mrf.mxu0
  %v1952 = vadd.f32 %v1891, %v1951
  %v1953 = vand.u32 %v1834, 4294901760
  %1954 = vmatmul.f32.gmra.mxu0 %v1953
  %v1955 = vpop.f32.mrf.mxu0
  %v1956 = vadd.f32 %v1899, %v1955
  %1957 = vdwg.mxu0
  %1958 = vmatpush.msra.mxu0 0.0
  %1959 = vmatpush.msra.mxu0 0.0
  %1960 = vmatpush.msra.mxu0 0.0
  %1961 = vmatpush.msra.mxu0 0.0
  %1962 = vmatpush.msra.mxu0 0.0
  %1963 = vmatpush.msra.mxu0 0.0
  %1964 = vmatpush.msra.mxu0 0.0
  %1965 = vmatpush.msra.mxu0 0.0
  %1966 = vmatpush.msra.mxu0 0.0
  %1967 = vmatpush.msra.mxu0 0.0
  %1968 = vmatpush.msra.mxu0 0.0
  %1969 = vmatpush.msra.mxu0 0.0
  %v1970 = vand.u32 %v1838, 4294901760
  %v1971 = vsub.f32 %v1838, %v1970
  %1972 = vmatpush.msra.mxu0 %v1971
  %v1973 = vand.u32 %v1813, 4294901760
  %v1974 = vsub.f32 %v1813, %v1973
  %1975 = vmatpush.msra.mxu0 %v1974
  %v1976 = vand.u32 %v1812, 4294901760
  %v1977 = vsub.f32 %v1812, %v1976
  %1978 = vmatpush.msra.mxu0 %v1977
  %v1979 = vand.u32 %v1811, 4294901760
  %v1980 = vsub.f32 %v1811, %v1979
  %1981 = vmatpush.msra.mxu0 %v1980
  %v1982 = vand.u32 %v1822, 4294901760
  %v1983 = vsub.f32 %v1822, %v1982
  %1984 = vmatmul.f32.gmra.mxu0 %v1983
  %v1985 = vpop.f32.mrf.mxu0
  %v1986 = vadd.f32 %v1940, %v1985
  %v1987 = vand.u32 %v1825, 4294901760
  %v1988 = vsub.f32 %v1825, %v1987
  %1989 = vmatmul.f32.gmra.mxu0 %v1988
  %v1990 = vpop.f32.mrf.mxu0
  %v1991 = vadd.f32 %v1944, %v1990
  %v1992 = vand.u32 %v1828, 4294901760
  %v1993 = vsub.f32 %v1828, %v1992
  %1994 = vmatmul.f32.gmra.mxu0 %v1993
  %v1995 = vpop.f32.mrf.mxu0
  %v1996 = vadd.f32 %v1948, %v1995
  %v1997 = vand.u32 %v1831, 4294901760
  %v1998 = vsub.f32 %v1831, %v1997
  %1999 = vmatmul.f32.gmra.mxu0 %v1998
  %v2000 = vpop.f32.mrf.mxu0
  %v2001 = vadd.f32 %v1952, %v2000
  %v2002 = vand.u32 %v1834, 4294901760
  %v2003 = vsub.f32 %v1834, %v2002
  %2004 = vmatmul.f32.gmra.mxu0 %v2003
  %v2005 = vpop.f32.mrf.mxu0
  %v2006 = vadd.f32 %v1956, %v2005
  %2007 = vdwg.mxu0
  %2008 = vmatpush.msra.mxu0 0.0
  %2009 = vmatpush.msra.mxu0 0.0
  %2010 = vmatpush.msra.mxu0 0.0
  %2011 = vmatpush.msra.mxu0 0.0
  %2012 = vmatpush.msra.mxu0 0.0
  %2013 = vmatpush.msra.mxu0 0.0
  %2014 = vmatpush.msra.mxu0 0.0
  %2015 = vmatpush.msra.mxu0 0.0
  %2016 = vmatpush.msra.mxu0 0.0
  %2017 = vmatpush.msra.mxu0 0.0
  %2018 = vmatpush.msra.mxu0 0.0
  %2019 = vmatpush.msra.mxu0 0.0
  %v2020 = vand.u32 %v1838, 4294901760
  %2021 = vmatpush.msra.mxu0 %v2020
  %v2022 = vand.u32 %v1813, 4294901760
  %2023 = vmatpush.msra.mxu0 %v2022
  %v2024 = vand.u32 %v1812, 4294901760
  %2025 = vmatpush.msra.mxu0 %v2024
  %v2026 = vand.u32 %v1811, 4294901760
  %2027 = vmatpush.msra.mxu0 %v2026
  %v2028 = vand.u32 %v1822, 4294901760
  %v2029 = vsub.f32 %v1822, %v2028
  %v2030 = vand.u32 %v2029, 4294901760
  %2031 = vmatmul.f32.gmra.mxu0 %v2030
  %v2032 = vpop.f32.mrf.mxu0
  %v2033 = vadd.f32 %v1986, %v2032
  %v2034 = vand.u32 %v1825, 4294901760
  %v2035 = vsub.f32 %v1825, %v2034
  %v2036 = vand.u32 %v2035, 4294901760
  %2037 = vmatmul.f32.gmra.mxu0 %v2036
  %v2038 = vpop.f32.mrf.mxu0
  %v2039 = vadd.f32 %v1991, %v2038
  %v2040 = vand.u32 %v1828, 4294901760
  %v2041 = vsub.f32 %v1828, %v2040
  %v2042 = vand.u32 %v2041, 4294901760
  %2043 = vmatmul.f32.gmra.mxu0 %v2042
  %v2044 = vpop.f32.mrf.mxu0
  %v2045 = vadd.f32 %v1996, %v2044
  %v2046 = vand.u32 %v1831, 4294901760
  %v2047 = vsub.f32 %v1831, %v2046
  %v2048 = vand.u32 %v2047, 4294901760
  %2049 = vmatmul.f32.gmra.mxu0 %v2048
  %v2050 = vpop.f32.mrf.mxu0
  %v2051 = vadd.f32 %v2001, %v2050
  %v2052 = vand.u32 %v1834, 4294901760
  %v2053 = vsub.f32 %v1834, %v2052
  %v2054 = vand.u32 %v2053, 4294901760
  %2055 = vmatmul.f32.gmra.mxu0 %v2054
  %v2056 = vpop.f32.mrf.mxu0
  %v2057 = vadd.f32 %v2006, %v2056
  %2058 = vdwg.mxu0
  %2059 = vmatpush.msra.mxu0 0.0
  %2060 = vmatpush.msra.mxu0 0.0
  %2061 = vmatpush.msra.mxu0 0.0
  %2062 = vmatpush.msra.mxu0 0.0
  %2063 = vmatpush.msra.mxu0 0.0
  %2064 = vmatpush.msra.mxu0 0.0
  %2065 = vmatpush.msra.mxu0 0.0
  %2066 = vmatpush.msra.mxu0 0.0
  %2067 = vmatpush.msra.mxu0 0.0
  %2068 = vmatpush.msra.mxu0 0.0
  %2069 = vmatpush.msra.mxu0 0.0
  %2070 = vmatpush.msra.mxu0 0.0
  %v2071 = vand.u32 %v1838, 4294901760
  %v2072 = vsub.f32 %v1838, %v2071
  %v2073 = vand.u32 %v2072, 4294901760
  %2074 = vmatpush.msra.mxu0 %v2073
  %v2075 = vand.u32 %v1813, 4294901760
  %v2076 = vsub.f32 %v1813, %v2075
  %v2077 = vand.u32 %v2076, 4294901760
  %2078 = vmatpush.msra.mxu0 %v2077
  %v2079 = vand.u32 %v1812, 4294901760
  %v2080 = vsub.f32 %v1812, %v2079
  %v2081 = vand.u32 %v2080, 4294901760
  %2082 = vmatpush.msra.mxu0 %v2081
  %v2083 = vand.u32 %v1811, 4294901760
  %v2084 = vsub.f32 %v1811, %v2083
  %v2085 = vand.u32 %v2084, 4294901760
  %2086 = vmatpush.msra.mxu0 %v2085
  %v2087 = vand.u32 %v1822, 4294901760
  %2088 = vmatmul.f32.gmra.mxu0 %v2087
  %v2089 = vpop.f32.mrf.mxu0
  %v2090 = vadd.f32 %v2033, %v2089
  %v2091 = vand.u32 %v1825, 4294901760
  %2092 = vmatmul.f32.gmra.mxu0 %v2091
  %v2093 = vpop.f32.mrf.mxu0
  %v2094 = vadd.f32 %v2039, %v2093
  %v2095 = vand.u32 %v1828, 4294901760
  %2096 = vmatmul.f32.gmra.mxu0 %v2095
  %v2097 = vpop.f32.mrf.mxu0
  %v2098 = vadd.f32 %v2045, %v2097
  %v2099 = vand.u32 %v1831, 4294901760
  %2100 = vmatmul.f32.gmra.mxu0 %v2099
  %v2101 = vpop.f32.mrf.mxu0
  %v2102 = vadd.f32 %v2051, %v2101
  %v2103 = vand.u32 %v1834, 4294901760
  %2104 = vmatmul.f32.gmra.mxu0 %v2103
  %v2105 = vpop.f32.mrf.mxu0
  %v2106 = vadd.f32 %v2057, %v2105
  %2107 = vdwg.mxu0
  %2108 = vmatpush.msra.mxu0 0.0
  %2109 = vmatpush.msra.mxu0 0.0
  %2110 = vmatpush.msra.mxu0 0.0
  %2111 = vmatpush.msra.mxu0 0.0
  %2112 = vmatpush.msra.mxu0 0.0
  %2113 = vmatpush.msra.mxu0 0.0
  %2114 = vmatpush.msra.mxu0 0.0
  %2115 = vmatpush.msra.mxu0 0.0
  %2116 = vmatpush.msra.mxu0 0.0
  %2117 = vmatpush.msra.mxu0 0.0
  %2118 = vmatpush.msra.mxu0 0.0
  %2119 = vmatpush.msra.mxu0 0.0
  %v2120 = vand.u32 %v1838, 4294901760
  %2121 = vmatpush.msra.mxu0 %v2120
  %v2122 = vand.u32 %v1813, 4294901760
  %2123 = vmatpush.msra.mxu0 %v2122
  %v2124 = vand.u32 %v1812, 4294901760
  %2125 = vmatpush.msra.mxu0 %v2124
  %v2126 = vand.u32 %v1811, 4294901760
  %2127 = vmatpush.msra.mxu0 %v2126
  %v2128 = vand.u32 %v1822, 4294901760
  %2129 = vmatmul.f32.gmra.mxu0 %v2128
  %v2130 = vpop.f32.mrf.mxu0
  %v2131 = vadd.f32 %v2090, %v2130
  %v2132 = vand.u32 %v1825, 4294901760
  %2133 = vmatmul.f32.gmra.mxu0 %v2132
  %v2134 = vpop.f32.mrf.mxu0
  %v2135 = vadd.f32 %v2094, %v2134
  %v2136 = vand.u32 %v1828, 4294901760
  %2137 = vmatmul.f32.gmra.mxu0 %v2136
  %v2138 = vpop.f32.mrf.mxu0
  %v2139 = vadd.f32 %v2098, %v2138
  %v2140 = vand.u32 %v1831, 4294901760
  %2141 = vmatmul.f32.gmra.mxu0 %v2140
  %v2142 = vpop.f32.mrf.mxu0
  %v2143 = vadd.f32 %v2102, %v2142
  %v2144 = vand.u32 %v1834, 4294901760
  %2145 = vmatmul.f32.gmra.mxu0 %v2144
  %v2146 = vpop.f32.mrf.mxu0
  %v2147 = vadd.f32 %v2106, %v2146
  %2148 = vdwg.mxu0
  %2150 = vset.pattern.permute.xlu0 0
  %2151 = vperm.xlu0 %2150, %v1229
  %v2152 = vpop.permute.xlu0 %2151
  %2155 = vset.pattern.permute.xlu0 0
  %2156 = vperm.xlu0 %2155, %v1230
  %v2157 = vpop.permute.xlu0 %2156
  %2160 = vset.pattern.permute.xlu0 0
  %2161 = vperm.xlu0 %2160, %v1231
  %v2162 = vpop.permute.xlu0 %2161
  %2165 = vset.pattern.permute.xlu0 0
  %2166 = vperm.xlu0 %2165, %v1232
  %v2167 = vpop.permute.xlu0 %2166
  %2170 = vset.pattern.permute.xlu0 0
  %2171 = vperm.xlu0 %2170, %v1233
  %v2172 = vpop.permute.xlu0 %2171
  %v2174 = vadd.f32 %v2152, %v2131
  %v2175 = vadd.f32 %v2157, %v2135
  %v2176 = vadd.f32 %v2162, %v2139
  %v2177 = vadd.f32 %v2167, %v2143
  %v2178 = vadd.f32 %v2172, %v2147
  %s2179 = scalar_lea.vmem %s5, 32
  %v2180 = vld [vmem:[%s2179] sm:$0xff]
  %v2181 = vld [vmem:[%s2179 + $0x8] sm:$0xff]
  %v2182 = vld [vmem:[%s2179 + $0x10] sm:$0xff]
  %v2183 = vld [vmem:[%s2179 + $0x18] sm:$0xff]
  %2184 = vmatpush.msra.mxu0 0.0
  %2185 = vmatpush.msra.mxu0 0.0
  %2186 = vmatpush.msra.mxu0 0.0
  %2187 = vmatpush.msra.mxu0 0.0
  %2188 = vmatpush.msra.mxu0 0.0
  %2189 = vmatpush.msra.mxu0 0.0
  %2190 = vmatpush.msra.mxu0 0.0
  %2191 = vmatpush.msra.mxu0 0.0
  %2192 = vmatpush.msra.mxu0 0.0
  %2193 = vmatpush.msra.mxu0 0.0
  %2194 = vmatpush.msra.mxu0 0.0
  %2195 = vmatpush.msra.mxu0 0.0
  %v2196 = vand.u32 %v2183, 4294901760
  %2197 = vmatpush.msra.mxu0 %v2196
  %v2198 = vand.u32 %v2182, 4294901760
  %2199 = vmatpush.msra.mxu0 %v2198
  %v2200 = vand.u32 %v2181, 4294901760
  %2201 = vmatpush.msra.mxu0 %v2200
  %v2202 = vand.u32 %v2180, 4294901760
  %2203 = vmatpush.msra.mxu0 %v2202
  %v2204 = vand.u32 %v1240, 4294901760
  %v2205 = vsub.f32 %v1240, %v2204
  %v2206 = vand.u32 %v2205, 4294901760
  %v2207 = vsub.f32 %v2205, %v2206
  %v2208 = vand.u32 %v2207, 4294901760
  %2209 = vmatmul.f32.gmra.mxu0 %v2208
  %v2210 = vpop.f32.mrf.mxu0
  %v2211 = vadd.f32 0.0, %v2210
  %v2212 = vand.u32 %v1243, 4294901760
  %v2213 = vsub.f32 %v1243, %v2212
  %v2214 = vand.u32 %v2213, 4294901760
  %v2215 = vsub.f32 %v2213, %v2214
  %v2216 = vand.u32 %v2215, 4294901760
  %2217 = vmatmul.f32.gmra.mxu0 %v2216
  %v2218 = vpop.f32.mrf.mxu0
  %v2219 = vadd.f32 0.0, %v2218
  %v2220 = vand.u32 %v1246, 4294901760
  %v2221 = vsub.f32 %v1246, %v2220
  %v2222 = vand.u32 %v2221, 4294901760
  %v2223 = vsub.f32 %v2221, %v2222
  %v2224 = vand.u32 %v2223, 4294901760
  %2225 = vmatmul.f32.gmra.mxu0 %v2224
  %v2226 = vpop.f32.mrf.mxu0
  %v2227 = vadd.f32 0.0, %v2226
  %v2228 = vand.u32 %v1249, 4294901760
  %v2229 = vsub.f32 %v1249, %v2228
  %v2230 = vand.u32 %v2229, 4294901760
  %v2231 = vsub.f32 %v2229, %v2230
  %v2232 = vand.u32 %v2231, 4294901760
  %2233 = vmatmul.f32.gmra.mxu0 %v2232
  %v2234 = vpop.f32.mrf.mxu0
  %v2235 = vadd.f32 0.0, %v2234
  %2236 = vdwg.mxu0
  %2237 = vmatpush.msra.mxu0 0.0
  %2238 = vmatpush.msra.mxu0 0.0
  %2239 = vmatpush.msra.mxu0 0.0
  %2240 = vmatpush.msra.mxu0 0.0
  %2241 = vmatpush.msra.mxu0 0.0
  %2242 = vmatpush.msra.mxu0 0.0
  %2243 = vmatpush.msra.mxu0 0.0
  %2244 = vmatpush.msra.mxu0 0.0
  %2245 = vmatpush.msra.mxu0 0.0
  %2246 = vmatpush.msra.mxu0 0.0
  %2247 = vmatpush.msra.mxu0 0.0
  %2248 = vmatpush.msra.mxu0 0.0
  %v2249 = vand.u32 %v2183, 4294901760
  %v2250 = vsub.f32 %v2183, %v2249
  %v2251 = vand.u32 %v2250, 4294901760
  %v2252 = vsub.f32 %v2250, %v2251
  %v2253 = vand.u32 %v2252, 4294901760
  %2254 = vmatpush.msra.mxu0 %v2253
  %v2255 = vand.u32 %v2182, 4294901760
  %v2256 = vsub.f32 %v2182, %v2255
  %v2257 = vand.u32 %v2256, 4294901760
  %v2258 = vsub.f32 %v2256, %v2257
  %v2259 = vand.u32 %v2258, 4294901760
  %2260 = vmatpush.msra.mxu0 %v2259
  %v2261 = vand.u32 %v2181, 4294901760
  %v2262 = vsub.f32 %v2181, %v2261
  %v2263 = vand.u32 %v2262, 4294901760
  %v2264 = vsub.f32 %v2262, %v2263
  %v2265 = vand.u32 %v2264, 4294901760
  %2266 = vmatpush.msra.mxu0 %v2265
  %v2267 = vand.u32 %v2180, 4294901760
  %v2268 = vsub.f32 %v2180, %v2267
  %v2269 = vand.u32 %v2268, 4294901760
  %v2270 = vsub.f32 %v2268, %v2269
  %v2271 = vand.u32 %v2270, 4294901760
  %2272 = vmatpush.msra.mxu0 %v2271
  %v2273 = vand.u32 %v1240, 4294901760
  %2274 = vmatmul.f32.gmra.mxu0 %v2273
  %v2275 = vpop.f32.mrf.mxu0
  %v2276 = vadd.f32 %v2211, %v2275
  %v2277 = vand.u32 %v1243, 4294901760
  %2278 = vmatmul.f32.gmra.mxu0 %v2277
  %v2279 = vpop.f32.mrf.mxu0
  %v2280 = vadd.f32 %v2219, %v2279
  %v2281 = vand.u32 %v1246, 4294901760
  %2282 = vmatmul.f32.gmra.mxu0 %v2281
  %v2283 = vpop.f32.mrf.mxu0
  %v2284 = vadd.f32 %v2227, %v2283
  %v2285 = vand.u32 %v1249, 4294901760
  %2286 = vmatmul.f32.gmra.mxu0 %v2285
  %v2287 = vpop.f32.mrf.mxu0
  %v2288 = vadd.f32 %v2235, %v2287
  %2289 = vdwg.mxu0
  %2290 = vmatpush.msra.mxu0 0.0
  %2291 = vmatpush.msra.mxu0 0.0
  %2292 = vmatpush.msra.mxu0 0.0
  %2293 = vmatpush.msra.mxu0 0.0
  %2294 = vmatpush.msra.mxu0 0.0
  %2295 = vmatpush.msra.mxu0 0.0
  %2296 = vmatpush.msra.mxu0 0.0
  %2297 = vmatpush.msra.mxu0 0.0
  %2298 = vmatpush.msra.mxu0 0.0
  %2299 = vmatpush.msra.mxu0 0.0
  %2300 = vmatpush.msra.mxu0 0.0
  %2301 = vmatpush.msra.mxu0 0.0
  %v2302 = vand.u32 %v2183, 4294901760
  %v2303 = vsub.f32 %v2183, %v2302
  %2304 = vmatpush.msra.mxu0 %v2303
  %v2305 = vand.u32 %v2182, 4294901760
  %v2306 = vsub.f32 %v2182, %v2305
  %2307 = vmatpush.msra.mxu0 %v2306
  %v2308 = vand.u32 %v2181, 4294901760
  %v2309 = vsub.f32 %v2181, %v2308
  %2310 = vmatpush.msra.mxu0 %v2309
  %v2311 = vand.u32 %v2180, 4294901760
  %v2312 = vsub.f32 %v2180, %v2311
  %2313 = vmatpush.msra.mxu0 %v2312
  %v2314 = vand.u32 %v1240, 4294901760
  %v2315 = vsub.f32 %v1240, %v2314
  %2316 = vmatmul.f32.gmra.mxu0 %v2315
  %v2317 = vpop.f32.mrf.mxu0
  %v2318 = vadd.f32 %v2276, %v2317
  %v2319 = vand.u32 %v1243, 4294901760
  %v2320 = vsub.f32 %v1243, %v2319
  %2321 = vmatmul.f32.gmra.mxu0 %v2320
  %v2322 = vpop.f32.mrf.mxu0
  %v2323 = vadd.f32 %v2280, %v2322
  %v2324 = vand.u32 %v1246, 4294901760
  %v2325 = vsub.f32 %v1246, %v2324
  %2326 = vmatmul.f32.gmra.mxu0 %v2325
  %v2327 = vpop.f32.mrf.mxu0
  %v2328 = vadd.f32 %v2284, %v2327
  %v2329 = vand.u32 %v1249, 4294901760
  %v2330 = vsub.f32 %v1249, %v2329
  %2331 = vmatmul.f32.gmra.mxu0 %v2330
  %v2332 = vpop.f32.mrf.mxu0
  %v2333 = vadd.f32 %v2288, %v2332
  %2334 = vdwg.mxu0
  %2335 = vmatpush.msra.mxu0 0.0
  %2336 = vmatpush.msra.mxu0 0.0
  %2337 = vmatpush.msra.mxu0 0.0
  %2338 = vmatpush.msra.mxu0 0.0
  %2339 = vmatpush.msra.mxu0 0.0
  %2340 = vmatpush.msra.mxu0 0.0
  %2341 = vmatpush.msra.mxu0 0.0
  %2342 = vmatpush.msra.mxu0 0.0
  %2343 = vmatpush.msra.mxu0 0.0
  %2344 = vmatpush.msra.mxu0 0.0
  %2345 = vmatpush.msra.mxu0 0.0
  %2346 = vmatpush.msra.mxu0 0.0
  %v2347 = vand.u32 %v2183, 4294901760
  %2348 = vmatpush.msra.mxu0 %v2347
  %v2349 = vand.u32 %v2182, 4294901760
  %2350 = vmatpush.msra.mxu0 %v2349
  %v2351 = vand.u32 %v2181, 4294901760
  %2352 = vmatpush.msra.mxu0 %v2351
  %v2353 = vand.u32 %v2180, 4294901760
  %2354 = vmatpush.msra.mxu0 %v2353
  %v2355 = vand.u32 %v1240, 4294901760
  %v2356 = vsub.f32 %v1240, %v2355
  %v2357 = vand.u32 %v2356, 4294901760
  %2358 = vmatmul.f32.gmra.mxu0 %v2357
  %v2359 = vpop.f32.mrf.mxu0
  %v2360 = vadd.f32 %v2318, %v2359
  %v2361 = vand.u32 %v1243, 4294901760
  %v2362 = vsub.f32 %v1243, %v2361
  %v2363 = vand.u32 %v2362, 4294901760
  %2364 = vmatmul.f32.gmra.mxu0 %v2363
  %v2365 = vpop.f32.mrf.mxu0
  %v2366 = vadd.f32 %v2323, %v2365
  %v2367 = vand.u32 %v1246, 4294901760
  %v2368 = vsub.f32 %v1246, %v2367
  %v2369 = vand.u32 %v2368, 4294901760
  %2370 = vmatmul.f32.gmra.mxu0 %v2369
  %v2371 = vpop.f32.mrf.mxu0
  %v2372 = vadd.f32 %v2328, %v2371
  %v2373 = vand.u32 %v1249, 4294901760
  %v2374 = vsub.f32 %v1249, %v2373
  %v2375 = vand.u32 %v2374, 4294901760
  %2376 = vmatmul.f32.gmra.mxu0 %v2375
  %v2377 = vpop.f32.mrf.mxu0
  %v2378 = vadd.f32 %v2333, %v2377
  %2379 = vdwg.mxu0
  %2380 = vmatpush.msra.mxu0 0.0
  %2381 = vmatpush.msra.mxu0 0.0
  %2382 = vmatpush.msra.mxu0 0.0
  %2383 = vmatpush.msra.mxu0 0.0
  %2384 = vmatpush.msra.mxu0 0.0
  %2385 = vmatpush.msra.mxu0 0.0
  %2386 = vmatpush.msra.mxu0 0.0
  %2387 = vmatpush.msra.mxu0 0.0
  %2388 = vmatpush.msra.mxu0 0.0
  %2389 = vmatpush.msra.mxu0 0.0
  %2390 = vmatpush.msra.mxu0 0.0
  %2391 = vmatpush.msra.mxu0 0.0
  %v2392 = vand.u32 %v2183, 4294901760
  %v2393 = vsub.f32 %v2183, %v2392
  %v2394 = vand.u32 %v2393, 4294901760
  %2395 = vmatpush.msra.mxu0 %v2394
  %v2396 = vand.u32 %v2182, 4294901760
  %v2397 = vsub.f32 %v2182, %v2396
  %v2398 = vand.u32 %v2397, 4294901760
  %2399 = vmatpush.msra.mxu0 %v2398
  %v2400 = vand.u32 %v2181, 4294901760
  %v2401 = vsub.f32 %v2181, %v2400
  %v2402 = vand.u32 %v2401, 4294901760
  %2403 = vmatpush.msra.mxu0 %v2402
  %v2404 = vand.u32 %v2180, 4294901760
  %v2405 = vsub.f32 %v2180, %v2404
  %v2406 = vand.u32 %v2405, 4294901760
  %2407 = vmatpush.msra.mxu0 %v2406
  %v2408 = vand.u32 %v1240, 4294901760
  %2409 = vmatmul.f32.gmra.mxu0 %v2408
  %v2410 = vpop.f32.mrf.mxu0
  %v2411 = vadd.f32 %v2360, %v2410
  %v2412 = vand.u32 %v1243, 4294901760
  %2413 = vmatmul.f32.gmra.mxu0 %v2412
  %v2414 = vpop.f32.mrf.mxu0
  %v2415 = vadd.f32 %v2366, %v2414
  %v2416 = vand.u32 %v1246, 4294901760
  %2417 = vmatmul.f32.gmra.mxu0 %v2416
  %v2418 = vpop.f32.mrf.mxu0
  %v2419 = vadd.f32 %v2372, %v2418
  %v2420 = vand.u32 %v1249, 4294901760
  %2421 = vmatmul.f32.gmra.mxu0 %v2420
  %v2422 = vpop.f32.mrf.mxu0
  %v2423 = vadd.f32 %v2378, %v2422
  %2424 = vdwg.mxu0
  %2425 = vmatpush.msra.mxu0 0.0
  %2426 = vmatpush.msra.mxu0 0.0
  %2427 = vmatpush.msra.mxu0 0.0
  %2428 = vmatpush.msra.mxu0 0.0
  %2429 = vmatpush.msra.mxu0 0.0
  %2430 = vmatpush.msra.mxu0 0.0
  %2431 = vmatpush.msra.mxu0 0.0
  %2432 = vmatpush.msra.mxu0 0.0
  %2433 = vmatpush.msra.mxu0 0.0
  %2434 = vmatpush.msra.mxu0 0.0
  %2435 = vmatpush.msra.mxu0 0.0
  %2436 = vmatpush.msra.mxu0 0.0
  %v2437 = vand.u32 %v2183, 4294901760
  %2438 = vmatpush.msra.mxu0 %v2437
  %v2439 = vand.u32 %v2182, 4294901760
  %2440 = vmatpush.msra.mxu0 %v2439
  %v2441 = vand.u32 %v2181, 4294901760
  %2442 = vmatpush.msra.mxu0 %v2441
  %v2443 = vand.u32 %v2180, 4294901760
  %2444 = vmatpush.msra.mxu0 %v2443
  %v2445 = vand.u32 %v1240, 4294901760
  %2446 = vmatmul.f32.gmra.mxu0 %v2445
  %v2447 = vpop.f32.mrf.mxu0
  %v2448 = vadd.f32 %v2411, %v2447
  %v2449 = vand.u32 %v1243, 4294901760
  %2450 = vmatmul.f32.gmra.mxu0 %v2449
  %v2451 = vpop.f32.mrf.mxu0
  %v2452 = vadd.f32 %v2415, %v2451
  %v2453 = vand.u32 %v1246, 4294901760
  %2454 = vmatmul.f32.gmra.mxu0 %v2453
  %v2455 = vpop.f32.mrf.mxu0
  %v2456 = vadd.f32 %v2419, %v2455
  %v2457 = vand.u32 %v1249, 4294901760
  %2458 = vmatmul.f32.gmra.mxu0 %v2457
  %v2459 = vpop.f32.mrf.mxu0
  %v2460 = vadd.f32 %v2423, %v2459
  %2461 = vdwg.mxu0
  %s2462 = scalar_lea.vmem %s6, 32
  %v2463 = vld [vmem:[%s2462] sm:$0xff]
  %v2464 = vld [vmem:[%s2462 + $0x8] sm:$0xff]
  %v2465 = vld [vmem:[%s2462 + $0x10] sm:$0xff]
  %v2466 = vld [vmem:[%s2462 + $0x18] sm:$0xff]
  %2467 = vmatpush.msra.mxu0 0.0
  %2468 = vmatpush.msra.mxu0 0.0
  %2469 = vmatpush.msra.mxu0 0.0
  %2470 = vmatpush.msra.mxu0 0.0
  %2471 = vmatpush.msra.mxu0 0.0
  %2472 = vmatpush.msra.mxu0 0.0
  %2473 = vmatpush.msra.mxu0 0.0
  %2474 = vmatpush.msra.mxu0 0.0
  %2475 = vmatpush.msra.mxu0 0.0
  %2476 = vmatpush.msra.mxu0 0.0
  %2477 = vmatpush.msra.mxu0 0.0
  %2478 = vmatpush.msra.mxu0 0.0
  %v2479 = vand.u32 %v2466, 4294901760
  %2480 = vmatpush.msra.mxu0 %v2479
  %v2481 = vand.u32 %v2465, 4294901760
  %2482 = vmatpush.msra.mxu0 %v2481
  %v2483 = vand.u32 %v2464, 4294901760
  %2484 = vmatpush.msra.mxu0 %v2483
  %v2485 = vand.u32 %v2463, 4294901760
  %2486 = vmatpush.msra.mxu0 %v2485
  %v2487 = vand.u32 %v1240, 4294901760
  %v2488 = vsub.f32 %v1240, %v2487
  %v2489 = vand.u32 %v2488, 4294901760
  %v2490 = vsub.f32 %v2488, %v2489
  %v2491 = vand.u32 %v2490, 4294901760
  %2492 = vmatmul.f32.gmra.mxu0 %v2491
  %v2493 = vpop.f32.mrf.mxu0
  %v2494 = vadd.f32 0.0, %v2493
  %v2495 = vand.u32 %v1243, 4294901760
  %v2496 = vsub.f32 %v1243, %v2495
  %v2497 = vand.u32 %v2496, 4294901760
  %v2498 = vsub.f32 %v2496, %v2497
  %v2499 = vand.u32 %v2498, 4294901760
  %2500 = vmatmul.f32.gmra.mxu0 %v2499
  %v2501 = vpop.f32.mrf.mxu0
  %v2502 = vadd.f32 0.0, %v2501
  %v2503 = vand.u32 %v1246, 4294901760
  %v2504 = vsub.f32 %v1246, %v2503
  %v2505 = vand.u32 %v2504, 4294901760
  %v2506 = vsub.f32 %v2504, %v2505
  %v2507 = vand.u32 %v2506, 4294901760
  %2508 = vmatmul.f32.gmra.mxu0 %v2507
  %v2509 = vpop.f32.mrf.mxu0
  %v2510 = vadd.f32 0.0, %v2509
  %v2511 = vand.u32 %v1249, 4294901760
  %v2512 = vsub.f32 %v1249, %v2511
  %v2513 = vand.u32 %v2512, 4294901760
  %v2514 = vsub.f32 %v2512, %v2513
  %v2515 = vand.u32 %v2514, 4294901760
  %2516 = vmatmul.f32.gmra.mxu0 %v2515
  %v2517 = vpop.f32.mrf.mxu0
  %v2518 = vadd.f32 0.0, %v2517
  %2519 = vdwg.mxu0
  %2520 = vmatpush.msra.mxu0 0.0
  %2521 = vmatpush.msra.mxu0 0.0
  %2522 = vmatpush.msra.mxu0 0.0
  %2523 = vmatpush.msra.mxu0 0.0
  %2524 = vmatpush.msra.mxu0 0.0
  %2525 = vmatpush.msra.mxu0 0.0
  %2526 = vmatpush.msra.mxu0 0.0
  %2527 = vmatpush.msra.mxu0 0.0
  %2528 = vmatpush.msra.mxu0 0.0
  %2529 = vmatpush.msra.mxu0 0.0
  %2530 = vmatpush.msra.mxu0 0.0
  %2531 = vmatpush.msra.mxu0 0.0
  %v2532 = vand.u32 %v2466, 4294901760
  %v2533 = vsub.f32 %v2466, %v2532
  %v2534 = vand.u32 %v2533, 4294901760
  %v2535 = vsub.f32 %v2533, %v2534
  %v2536 = vand.u32 %v2535, 4294901760
  %2537 = vmatpush.msra.mxu0 %v2536
  %v2538 = vand.u32 %v2465, 4294901760
  %v2539 = vsub.f32 %v2465, %v2538
  %v2540 = vand.u32 %v2539, 4294901760
  %v2541 = vsub.f32 %v2539, %v2540
  %v2542 = vand.u32 %v2541, 4294901760
  %2543 = vmatpush.msra.mxu0 %v2542
  %v2544 = vand.u32 %v2464, 4294901760
  %v2545 = vsub.f32 %v2464, %v2544
  %v2546 = vand.u32 %v2545, 4294901760
  %v2547 = vsub.f32 %v2545, %v2546
  %v2548 = vand.u32 %v2547, 4294901760
  %2549 = vmatpush.msra.mxu0 %v2548
  %v2550 = vand.u32 %v2463, 4294901760
  %v2551 = vsub.f32 %v2463, %v2550
  %v2552 = vand.u32 %v2551, 4294901760
  %v2553 = vsub.f32 %v2551, %v2552
  %v2554 = vand.u32 %v2553, 4294901760
  %2555 = vmatpush.msra.mxu0 %v2554
  %v2556 = vand.u32 %v1240, 4294901760
  %2557 = vmatmul.f32.gmra.mxu0 %v2556
  %v2558 = vpop.f32.mrf.mxu0
  %v2559 = vadd.f32 %v2494, %v2558
  %v2560 = vand.u32 %v1243, 4294901760
  %2561 = vmatmul.f32.gmra.mxu0 %v2560
  %v2562 = vpop.f32.mrf.mxu0
  %v2563 = vadd.f32 %v2502, %v2562
  %v2564 = vand.u32 %v1246, 4294901760
  %2565 = vmatmul.f32.gmra.mxu0 %v2564
  %v2566 = vpop.f32.mrf.mxu0
  %v2567 = vadd.f32 %v2510, %v2566
  %v2568 = vand.u32 %v1249, 4294901760
  %2569 = vmatmul.f32.gmra.mxu0 %v2568
  %v2570 = vpop.f32.mrf.mxu0
  %v2571 = vadd.f32 %v2518, %v2570
  %2572 = vdwg.mxu0
  %2573 = vmatpush.msra.mxu0 0.0
  %2574 = vmatpush.msra.mxu0 0.0
  %2575 = vmatpush.msra.mxu0 0.0
  %2576 = vmatpush.msra.mxu0 0.0
  %2577 = vmatpush.msra.mxu0 0.0
  %2578 = vmatpush.msra.mxu0 0.0
  %2579 = vmatpush.msra.mxu0 0.0
  %2580 = vmatpush.msra.mxu0 0.0
  %2581 = vmatpush.msra.mxu0 0.0
  %2582 = vmatpush.msra.mxu0 0.0
  %2583 = vmatpush.msra.mxu0 0.0
  %2584 = vmatpush.msra.mxu0 0.0
  %v2585 = vand.u32 %v2466, 4294901760
  %v2586 = vsub.f32 %v2466, %v2585
  %2587 = vmatpush.msra.mxu0 %v2586
  %v2588 = vand.u32 %v2465, 4294901760
  %v2589 = vsub.f32 %v2465, %v2588
  %2590 = vmatpush.msra.mxu0 %v2589
  %v2591 = vand.u32 %v2464, 4294901760
  %v2592 = vsub.f32 %v2464, %v2591
  %2593 = vmatpush.msra.mxu0 %v2592
  %v2594 = vand.u32 %v2463, 4294901760
  %v2595 = vsub.f32 %v2463, %v2594
  %2596 = vmatpush.msra.mxu0 %v2595
  %v2597 = vand.u32 %v1240, 4294901760
  %v2598 = vsub.f32 %v1240, %v2597
  %2599 = vmatmul.f32.gmra.mxu0 %v2598
  %v2600 = vpop.f32.mrf.mxu0
  %v2601 = vadd.f32 %v2559, %v2600
  %v2602 = vand.u32 %v1243, 4294901760
  %v2603 = vsub.f32 %v1243, %v2602
  %2604 = vmatmul.f32.gmra.mxu0 %v2603
  %v2605 = vpop.f32.mrf.mxu0
  %v2606 = vadd.f32 %v2563, %v2605
  %v2607 = vand.u32 %v1246, 4294901760
  %v2608 = vsub.f32 %v1246, %v2607
  %2609 = vmatmul.f32.gmra.mxu0 %v2608
  %v2610 = vpop.f32.mrf.mxu0
  %v2611 = vadd.f32 %v2567, %v2610
  %v2612 = vand.u32 %v1249, 4294901760
  %v2613 = vsub.f32 %v1249, %v2612
  %2614 = vmatmul.f32.gmra.mxu0 %v2613
  %v2615 = vpop.f32.mrf.mxu0
  %v2616 = vadd.f32 %v2571, %v2615
  %2617 = vdwg.mxu0
  %2618 = vmatpush.msra.mxu0 0.0
  %2619 = vmatpush.msra.mxu0 0.0
  %2620 = vmatpush.msra.mxu0 0.0
  %2621 = vmatpush.msra.mxu0 0.0
  %2622 = vmatpush.msra.mxu0 0.0
  %2623 = vmatpush.msra.mxu0 0.0
  %2624 = vmatpush.msra.mxu0 0.0
  %2625 = vmatpush.msra.mxu0 0.0
  %2626 = vmatpush.msra.mxu0 0.0
  %2627 = vmatpush.msra.mxu0 0.0
  %2628 = vmatpush.msra.mxu0 0.0
  %2629 = vmatpush.msra.mxu0 0.0
  %v2630 = vand.u32 %v2466, 4294901760
  %2631 = vmatpush.msra.mxu0 %v2630
  %v2632 = vand.u32 %v2465, 4294901760
  %2633 = vmatpush.msra.mxu0 %v2632
  %v2634 = vand.u32 %v2464, 4294901760
  %2635 = vmatpush.msra.mxu0 %v2634
  %v2636 = vand.u32 %v2463, 4294901760
  %2637 = vmatpush.msra.mxu0 %v2636
  %v2638 = vand.u32 %v1240, 4294901760
  %v2639 = vsub.f32 %v1240, %v2638
  %v2640 = vand.u32 %v2639, 4294901760
  %2641 = vmatmul.f32.gmra.mxu0 %v2640
  %v2642 = vpop.f32.mrf.mxu0
  %v2643 = vadd.f32 %v2601, %v2642
  %v2644 = vand.u32 %v1243, 4294901760
  %v2645 = vsub.f32 %v1243, %v2644
  %v2646 = vand.u32 %v2645, 4294901760
  %2647 = vmatmul.f32.gmra.mxu0 %v2646
  %v2648 = vpop.f32.mrf.mxu0
  %v2649 = vadd.f32 %v2606, %v2648
  %v2650 = vand.u32 %v1246, 4294901760
  %v2651 = vsub.f32 %v1246, %v2650
  %v2652 = vand.u32 %v2651, 4294901760
  %2653 = vmatmul.f32.gmra.mxu0 %v2652
  %v2654 = vpop.f32.mrf.mxu0
  %v2655 = vadd.f32 %v2611, %v2654
  %v2656 = vand.u32 %v1249, 4294901760
  %v2657 = vsub.f32 %v1249, %v2656
  %v2658 = vand.u32 %v2657, 4294901760
  %2659 = vmatmul.f32.gmra.mxu0 %v2658
  %v2660 = vpop.f32.mrf.mxu0
  %v2661 = vadd.f32 %v2616, %v2660
  %2662 = vdwg.mxu0
  %2663 = vmatpush.msra.mxu0 0.0
  %2664 = vmatpush.msra.mxu0 0.0
  %2665 = vmatpush.msra.mxu0 0.0
  %2666 = vmatpush.msra.mxu0 0.0
  %2667 = vmatpush.msra.mxu0 0.0
  %2668 = vmatpush.msra.mxu0 0.0
  %2669 = vmatpush.msra.mxu0 0.0
  %2670 = vmatpush.msra.mxu0 0.0
  %2671 = vmatpush.msra.mxu0 0.0
  %2672 = vmatpush.msra.mxu0 0.0
  %2673 = vmatpush.msra.mxu0 0.0
  %2674 = vmatpush.msra.mxu0 0.0
  %v2675 = vand.u32 %v2466, 4294901760
  %v2676 = vsub.f32 %v2466, %v2675
  %v2677 = vand.u32 %v2676, 4294901760
  %2678 = vmatpush.msra.mxu0 %v2677
  %v2679 = vand.u32 %v2465, 4294901760
  %v2680 = vsub.f32 %v2465, %v2679
  %v2681 = vand.u32 %v2680, 4294901760
  %2682 = vmatpush.msra.mxu0 %v2681
  %v2683 = vand.u32 %v2464, 4294901760
  %v2684 = vsub.f32 %v2464, %v2683
  %v2685 = vand.u32 %v2684, 4294901760
  %2686 = vmatpush.msra.mxu0 %v2685
  %v2687 = vand.u32 %v2463, 4294901760
  %v2688 = vsub.f32 %v2463, %v2687
  %v2689 = vand.u32 %v2688, 4294901760
  %2690 = vmatpush.msra.mxu0 %v2689
  %v2691 = vand.u32 %v1240, 4294901760
  %2692 = vmatmul.f32.gmra.mxu0 %v2691
  %v2693 = vpop.f32.mrf.mxu0
  %v2694 = vadd.f32 %v2643, %v2693
  %v2695 = vand.u32 %v1243, 4294901760
  %2696 = vmatmul.f32.gmra.mxu0 %v2695
  %v2697 = vpop.f32.mrf.mxu0
  %v2698 = vadd.f32 %v2649, %v2697
  %v2699 = vand.u32 %v1246, 4294901760
  %2700 = vmatmul.f32.gmra.mxu0 %v2699
  %v2701 = vpop.f32.mrf.mxu0
  %v2702 = vadd.f32 %v2655, %v2701
  %v2703 = vand.u32 %v1249, 4294901760
  %2704 = vmatmul.f32.gmra.mxu0 %v2703
  %v2705 = vpop.f32.mrf.mxu0
  %v2706 = vadd.f32 %v2661, %v2705
  %2707 = vdwg.mxu0
  %2708 = vmatpush.msra.mxu0 0.0
  %2709 = vmatpush.msra.mxu0 0.0
  %2710 = vmatpush.msra.mxu0 0.0
  %2711 = vmatpush.msra.mxu0 0.0
  %2712 = vmatpush.msra.mxu0 0.0
  %2713 = vmatpush.msra.mxu0 0.0
  %2714 = vmatpush.msra.mxu0 0.0
  %2715 = vmatpush.msra.mxu0 0.0
  %2716 = vmatpush.msra.mxu0 0.0
  %2717 = vmatpush.msra.mxu0 0.0
  %2718 = vmatpush.msra.mxu0 0.0
  %2719 = vmatpush.msra.mxu0 0.0
  %v2720 = vand.u32 %v2466, 4294901760
  %2721 = vmatpush.msra.mxu0 %v2720
  %v2722 = vand.u32 %v2465, 4294901760
  %2723 = vmatpush.msra.mxu0 %v2722
  %v2724 = vand.u32 %v2464, 4294901760
  %2725 = vmatpush.msra.mxu0 %v2724
  %v2726 = vand.u32 %v2463, 4294901760
  %2727 = vmatpush.msra.mxu0 %v2726
  %v2728 = vand.u32 %v1240, 4294901760
  %2729 = vmatmul.f32.gmra.mxu0 %v2728
  %v2730 = vpop.f32.mrf.mxu0
  %v2731 = vadd.f32 %v2694, %v2730
  %v2732 = vand.u32 %v1243, 4294901760
  %2733 = vmatmul.f32.gmra.mxu0 %v2732
  %v2734 = vpop.f32.mrf.mxu0
  %v2735 = vadd.f32 %v2698, %v2734
  %v2736 = vand.u32 %v1246, 4294901760
  %2737 = vmatmul.f32.gmra.mxu0 %v2736
  %v2738 = vpop.f32.mrf.mxu0
  %v2739 = vadd.f32 %v2702, %v2738
  %v2740 = vand.u32 %v1249, 4294901760
  %2741 = vmatmul.f32.gmra.mxu0 %v2740
  %v2742 = vpop.f32.mrf.mxu0
  %v2743 = vadd.f32 %v2706, %v2742
  %2744 = vdwg.mxu0
  %v2745 = vmax.f32 %v2448, %v2731
  %v2746 = vmax.f32 %v2452, %v2735
  %v2747 = vmax.f32 %v2456, %v2739
  %v2748 = vmax.f32 %v2460, %v2743
  %s2749 = scalar_lea.vmem %s7, 40
  %v2750 = vld [vmem:[%s2749] sm:$0xff]
  %v2751 = vld [vmem:[%s2749 + $0x8] sm:$0xff]
  %v2752 = vld [vmem:[%s2749 + $0x10] sm:$0xff]
  %v2753 = vld [vmem:[%s2749 + $0x18] sm:$0xff]
  %v2754 = vld [vmem:[%s2749 + $0x20] sm:$0xff]
  %v2756 = vsel %vm1820, %v2750, 0
  %v2759 = vsel %vm1820, %v2751, 0
  %v2762 = vsel %vm1820, %v2752, 0
  %v2765 = vsel %vm1820, %v2753, 0
  %v2768 = vsel %vm1820, %v2754, 0
  %v2771 = vsel %vm1836, %v2748, 0
  %2773 = vmatpush.msra.mxu0 0.0
  %2774 = vmatpush.msra.mxu0 0.0
  %2775 = vmatpush.msra.mxu0 0.0
  %2776 = vmatpush.msra.mxu0 0.0
  %2777 = vmatpush.msra.mxu0 0.0
  %2778 = vmatpush.msra.mxu0 0.0
  %2779 = vmatpush.msra.mxu0 0.0
  %2780 = vmatpush.msra.mxu0 0.0
  %2781 = vmatpush.msra.mxu0 0.0
  %2782 = vmatpush.msra.mxu0 0.0
  %2783 = vmatpush.msra.mxu0 0.0
  %2784 = vmatpush.msra.mxu0 0.0
  %v2785 = vand.u32 %v2771, 4294901760
  %2786 = vmatpush.msra.mxu0 %v2785
  %v2787 = vand.u32 %v2747, 4294901760
  %2788 = vmatpush.msra.mxu0 %v2787
  %v2789 = vand.u32 %v2746, 4294901760
  %2790 = vmatpush.msra.mxu0 %v2789
  %v2791 = vand.u32 %v2745, 4294901760
  %2792 = vmatpush.msra.mxu0 %v2791
  %v2793 = vand.u32 %v2756, 4294901760
  %v2794 = vsub.f32 %v2756, %v2793
  %v2795 = vand.u32 %v2794, 4294901760
  %v2796 = vsub.f32 %v2794, %v2795
  %v2797 = vand.u32 %v2796, 4294901760
  %2798 = vmatmul.f32.gmra.mxu0 %v2797
  %v2799 = vpop.f32.mrf.mxu0
  %v2800 = vadd.f32 0.0, %v2799
  %v2801 = vand.u32 %v2759, 4294901760
  %v2802 = vsub.f32 %v2759, %v2801
  %v2803 = vand.u32 %v2802, 4294901760
  %v2804 = vsub.f32 %v2802, %v2803
  %v2805 = vand.u32 %v2804, 4294901760
  %2806 = vmatmul.f32.gmra.mxu0 %v2805
  %v2807 = vpop.f32.mrf.mxu0
  %v2808 = vadd.f32 0.0, %v2807
  %v2809 = vand.u32 %v2762, 4294901760
  %v2810 = vsub.f32 %v2762, %v2809
  %v2811 = vand.u32 %v2810, 4294901760
  %v2812 = vsub.f32 %v2810, %v2811
  %v2813 = vand.u32 %v2812, 4294901760
  %2814 = vmatmul.f32.gmra.mxu0 %v2813
  %v2815 = vpop.f32.mrf.mxu0
  %v2816 = vadd.f32 0.0, %v2815
  %v2817 = vand.u32 %v2765, 4294901760
  %v2818 = vsub.f32 %v2765, %v2817
  %v2819 = vand.u32 %v2818, 4294901760
  %v2820 = vsub.f32 %v2818, %v2819
  %v2821 = vand.u32 %v2820, 4294901760
  %2822 = vmatmul.f32.gmra.mxu0 %v2821
  %v2823 = vpop.f32.mrf.mxu0
  %v2824 = vadd.f32 0.0, %v2823
  %v2825 = vand.u32 %v2768, 4294901760
  %v2826 = vsub.f32 %v2768, %v2825
  %v2827 = vand.u32 %v2826, 4294901760
  %v2828 = vsub.f32 %v2826, %v2827
  %v2829 = vand.u32 %v2828, 4294901760
  %2830 = vmatmul.f32.gmra.mxu0 %v2829
  %v2831 = vpop.f32.mrf.mxu0
  %v2832 = vadd.f32 0.0, %v2831
  %2833 = vdwg.mxu0
  %2834 = vmatpush.msra.mxu0 0.0
  %2835 = vmatpush.msra.mxu0 0.0
  %2836 = vmatpush.msra.mxu0 0.0
  %2837 = vmatpush.msra.mxu0 0.0
  %2838 = vmatpush.msra.mxu0 0.0
  %2839 = vmatpush.msra.mxu0 0.0
  %2840 = vmatpush.msra.mxu0 0.0
  %2841 = vmatpush.msra.mxu0 0.0
  %2842 = vmatpush.msra.mxu0 0.0
  %2843 = vmatpush.msra.mxu0 0.0
  %2844 = vmatpush.msra.mxu0 0.0
  %2845 = vmatpush.msra.mxu0 0.0
  %v2846 = vand.u32 %v2771, 4294901760
  %v2847 = vsub.f32 %v2771, %v2846
  %v2848 = vand.u32 %v2847, 4294901760
  %v2849 = vsub.f32 %v2847, %v2848
  %v2850 = vand.u32 %v2849, 4294901760
  %2851 = vmatpush.msra.mxu0 %v2850
  %v2852 = vand.u32 %v2747, 4294901760
  %v2853 = vsub.f32 %v2747, %v2852
  %v2854 = vand.u32 %v2853, 4294901760
  %v2855 = vsub.f32 %v2853, %v2854
  %v2856 = vand.u32 %v2855, 4294901760
  %2857 = vmatpush.msra.mxu0 %v2856
  %v2858 = vand.u32 %v2746, 4294901760
  %v2859 = vsub.f32 %v2746, %v2858
  %v2860 = vand.u32 %v2859, 4294901760
  %v2861 = vsub.f32 %v2859, %v2860
  %v2862 = vand.u32 %v2861, 4294901760
  %2863 = vmatpush.msra.mxu0 %v2862
  %v2864 = vand.u32 %v2745, 4294901760
  %v2865 = vsub.f32 %v2745, %v2864
  %v2866 = vand.u32 %v2865, 4294901760
  %v2867 = vsub.f32 %v2865, %v2866
  %v2868 = vand.u32 %v2867, 4294901760
  %2869 = vmatpush.msra.mxu0 %v2868
  %v2870 = vand.u32 %v2756, 4294901760
  %2871 = vmatmul.f32.gmra.mxu0 %v2870
  %v2872 = vpop.f32.mrf.mxu0
  %v2873 = vadd.f32 %v2800, %v2872
  %v2874 = vand.u32 %v2759, 4294901760
  %2875 = vmatmul.f32.gmra.mxu0 %v2874
  %v2876 = vpop.f32.mrf.mxu0
  %v2877 = vadd.f32 %v2808, %v2876
  %v2878 = vand.u32 %v2762, 4294901760
  %2879 = vmatmul.f32.gmra.mxu0 %v2878
  %v2880 = vpop.f32.mrf.mxu0
  %v2881 = vadd.f32 %v2816, %v2880
  %v2882 = vand.u32 %v2765, 4294901760
  %2883 = vmatmul.f32.gmra.mxu0 %v2882
  %v2884 = vpop.f32.mrf.mxu0
  %v2885 = vadd.f32 %v2824, %v2884
  %v2886 = vand.u32 %v2768, 4294901760
  %2887 = vmatmul.f32.gmra.mxu0 %v2886
  %v2888 = vpop.f32.mrf.mxu0
  %v2889 = vadd.f32 %v2832, %v2888
  %2890 = vdwg.mxu0
  %2891 = vmatpush.msra.mxu0 0.0
  %2892 = vmatpush.msra.mxu0 0.0
  %2893 = vmatpush.msra.mxu0 0.0
  %2894 = vmatpush.msra.mxu0 0.0
  %2895 = vmatpush.msra.mxu0 0.0
  %2896 = vmatpush.msra.mxu0 0.0
  %2897 = vmatpush.msra.mxu0 0.0
  %2898 = vmatpush.msra.mxu0 0.0
  %2899 = vmatpush.msra.mxu0 0.0
  %2900 = vmatpush.msra.mxu0 0.0
  %2901 = vmatpush.msra.mxu0 0.0
  %2902 = vmatpush.msra.mxu0 0.0
  %v2903 = vand.u32 %v2771, 4294901760
  %v2904 = vsub.f32 %v2771, %v2903
  %2905 = vmatpush.msra.mxu0 %v2904
  %v2906 = vand.u32 %v2747, 4294901760
  %v2907 = vsub.f32 %v2747, %v2906
  %2908 = vmatpush.msra.mxu0 %v2907
  %v2909 = vand.u32 %v2746, 4294901760
  %v2910 = vsub.f32 %v2746, %v2909
  %2911 = vmatpush.msra.mxu0 %v2910
  %v2912 = vand.u32 %v2745, 4294901760
  %v2913 = vsub.f32 %v2745, %v2912
  %2914 = vmatpush.msra.mxu0 %v2913
  %v2915 = vand.u32 %v2756, 4294901760
  %v2916 = vsub.f32 %v2756, %v2915
  %2917 = vmatmul.f32.gmra.mxu0 %v2916
  %v2918 = vpop.f32.mrf.mxu0
  %v2919 = vadd.f32 %v2873, %v2918
  %v2920 = vand.u32 %v2759, 4294901760
  %v2921 = vsub.f32 %v2759, %v2920
  %2922 = vmatmul.f32.gmra.mxu0 %v2921
  %v2923 = vpop.f32.mrf.mxu0
  %v2924 = vadd.f32 %v2877, %v2923
  %v2925 = vand.u32 %v2762, 4294901760
  %v2926 = vsub.f32 %v2762, %v2925
  %2927 = vmatmul.f32.gmra.mxu0 %v2926
  %v2928 = vpop.f32.mrf.mxu0
  %v2929 = vadd.f32 %v2881, %v2928
  %v2930 = vand.u32 %v2765, 4294901760
  %v2931 = vsub.f32 %v2765, %v2930
  %2932 = vmatmul.f32.gmra.mxu0 %v2931
  %v2933 = vpop.f32.mrf.mxu0
  %v2934 = vadd.f32 %v2885, %v2933
  %v2935 = vand.u32 %v2768, 4294901760
  %v2936 = vsub.f32 %v2768, %v2935
  %2937 = vmatmul.f32.gmra.mxu0 %v2936
  %v2938 = vpop.f32.mrf.mxu0
  %v2939 = vadd.f32 %v2889, %v2938
  %2940 = vdwg.mxu0
  %2941 = vmatpush.msra.mxu0 0.0
  %2942 = vmatpush.msra.mxu0 0.0
  %2943 = vmatpush.msra.mxu0 0.0
  %2944 = vmatpush.msra.mxu0 0.0
  %2945 = vmatpush.msra.mxu0 0.0
  %2946 = vmatpush.msra.mxu0 0.0
  %2947 = vmatpush.msra.mxu0 0.0
  %2948 = vmatpush.msra.mxu0 0.0
  %2949 = vmatpush.msra.mxu0 0.0
  %2950 = vmatpush.msra.mxu0 0.0
  %2951 = vmatpush.msra.mxu0 0.0
  %2952 = vmatpush.msra.mxu0 0.0
  %v2953 = vand.u32 %v2771, 4294901760
  %2954 = vmatpush.msra.mxu0 %v2953
  %v2955 = vand.u32 %v2747, 4294901760
  %2956 = vmatpush.msra.mxu0 %v2955
  %v2957 = vand.u32 %v2746, 4294901760
  %2958 = vmatpush.msra.mxu0 %v2957
  %v2959 = vand.u32 %v2745, 4294901760
  %2960 = vmatpush.msra.mxu0 %v2959
  %v2961 = vand.u32 %v2756, 4294901760
  %v2962 = vsub.f32 %v2756, %v2961
  %v2963 = vand.u32 %v2962, 4294901760
  %2964 = vmatmul.f32.gmra.mxu0 %v2963
  %v2965 = vpop.f32.mrf.mxu0
  %v2966 = vadd.f32 %v2919, %v2965
  %v2967 = vand.u32 %v2759, 4294901760
  %v2968 = vsub.f32 %v2759, %v2967
  %v2969 = vand.u32 %v2968, 4294901760
  %2970 = vmatmul.f32.gmra.mxu0 %v2969
  %v2971 = vpop.f32.mrf.mxu0
  %v2972 = vadd.f32 %v2924, %v2971
  %v2973 = vand.u32 %v2762, 4294901760
  %v2974 = vsub.f32 %v2762, %v2973
  %v2975 = vand.u32 %v2974, 4294901760
  %2976 = vmatmul.f32.gmra.mxu0 %v2975
  %v2977 = vpop.f32.mrf.mxu0
  %v2978 = vadd.f32 %v2929, %v2977
  %v2979 = vand.u32 %v2765, 4294901760
  %v2980 = vsub.f32 %v2765, %v2979
  %v2981 = vand.u32 %v2980, 4294901760
  %2982 = vmatmul.f32.gmra.mxu0 %v2981
  %v2983 = vpop.f32.mrf.mxu0
  %v2984 = vadd.f32 %v2934, %v2983
  %v2985 = vand.u32 %v2768, 4294901760
  %v2986 = vsub.f32 %v2768, %v2985
  %v2987 = vand.u32 %v2986, 4294901760
  %2988 = vmatmul.f32.gmra.mxu0 %v2987
  %v2989 = vpop.f32.mrf.mxu0
  %v2990 = vadd.f32 %v2939, %v2989
  %2991 = vdwg.mxu0
  %2992 = vmatpush.msra.mxu0 0.0
  %2993 = vmatpush.msra.mxu0 0.0
  %2994 = vmatpush.msra.mxu0 0.0
  %2995 = vmatpush.msra.mxu0 0.0
  %2996 = vmatpush.msra.mxu0 0.0
  %2997 = vmatpush.msra.mxu0 0.0
  %2998 = vmatpush.msra.mxu0 0.0
  %2999 = vmatpush.msra.mxu0 0.0
  %3000 = vmatpush.msra.mxu0 0.0
  %3001 = vmatpush.msra.mxu0 0.0
  %3002 = vmatpush.msra.mxu0 0.0
  %3003 = vmatpush.msra.mxu0 0.0
  %v3004 = vand.u32 %v2771, 4294901760
  %v3005 = vsub.f32 %v2771, %v3004
  %v3006 = vand.u32 %v3005, 4294901760
  %3007 = vmatpush.msra.mxu0 %v3006
  %v3008 = vand.u32 %v2747, 4294901760
  %v3009 = vsub.f32 %v2747, %v3008
  %v3010 = vand.u32 %v3009, 4294901760
  %3011 = vmatpush.msra.mxu0 %v3010
  %v3012 = vand.u32 %v2746, 4294901760
  %v3013 = vsub.f32 %v2746, %v3012
  %v3014 = vand.u32 %v3013, 4294901760
  %3015 = vmatpush.msra.mxu0 %v3014
  %v3016 = vand.u32 %v2745, 4294901760
  %v3017 = vsub.f32 %v2745, %v3016
  %v3018 = vand.u32 %v3017, 4294901760
  %3019 = vmatpush.msra.mxu0 %v3018
  %v3020 = vand.u32 %v2756, 4294901760
  %3021 = vmatmul.f32.gmra.mxu0 %v3020
  %v3022 = vpop.f32.mrf.mxu0
  %v3023 = vadd.f32 %v2966, %v3022
  %v3024 = vand.u32 %v2759, 4294901760
  %3025 = vmatmul.f32.gmra.mxu0 %v3024
  %v3026 = vpop.f32.mrf.mxu0
  %v3027 = vadd.f32 %v2972, %v3026
  %v3028 = vand.u32 %v2762, 4294901760
  %3029 = vmatmul.f32.gmra.mxu0 %v3028
  %v3030 = vpop.f32.mrf.mxu0
  %v3031 = vadd.f32 %v2978, %v3030
  %v3032 = vand.u32 %v2765, 4294901760
  %3033 = vmatmul.f32.gmra.mxu0 %v3032
  %v3034 = vpop.f32.mrf.mxu0
  %v3035 = vadd.f32 %v2984, %v3034
  %v3036 = vand.u32 %v2768, 4294901760
  %3037 = vmatmul.f32.gmra.mxu0 %v3036
  %v3038 = vpop.f32.mrf.mxu0
  %v3039 = vadd.f32 %v2990, %v3038
  %3040 = vdwg.mxu0
  %3041 = vmatpush.msra.mxu0 0.0
  %3042 = vmatpush.msra.mxu0 0.0
  %3043 = vmatpush.msra.mxu0 0.0
  %3044 = vmatpush.msra.mxu0 0.0
  %3045 = vmatpush.msra.mxu0 0.0
  %3046 = vmatpush.msra.mxu0 0.0
  %3047 = vmatpush.msra.mxu0 0.0
  %3048 = vmatpush.msra.mxu0 0.0
  %3049 = vmatpush.msra.mxu0 0.0
  %3050 = vmatpush.msra.mxu0 0.0
  %3051 = vmatpush.msra.mxu0 0.0
  %3052 = vmatpush.msra.mxu0 0.0
  %v3053 = vand.u32 %v2771, 4294901760
  %3054 = vmatpush.msra.mxu0 %v3053
  %v3055 = vand.u32 %v2747, 4294901760
  %3056 = vmatpush.msra.mxu0 %v3055
  %v3057 = vand.u32 %v2746, 4294901760
  %3058 = vmatpush.msra.mxu0 %v3057
  %v3059 = vand.u32 %v2745, 4294901760
  %3060 = vmatpush.msra.mxu0 %v3059
  %v3061 = vand.u32 %v2756, 4294901760
  %3062 = vmatmul.f32.gmra.mxu0 %v3061
  %v3063 = vpop.f32.mrf.mxu0
  %v3064 = vadd.f32 %v3023, %v3063
  %v3065 = vand.u32 %v2759, 4294901760
  %3066 = vmatmul.f32.gmra.mxu0 %v3065
  %v3067 = vpop.f32.mrf.mxu0
  %v3068 = vadd.f32 %v3027, %v3067
  %v3069 = vand.u32 %v2762, 4294901760
  %3070 = vmatmul.f32.gmra.mxu0 %v3069
  %v3071 = vpop.f32.mrf.mxu0
  %v3072 = vadd.f32 %v3031, %v3071
  %v3073 = vand.u32 %v2765, 4294901760
  %3074 = vmatmul.f32.gmra.mxu0 %v3073
  %v3075 = vpop.f32.mrf.mxu0
  %v3076 = vadd.f32 %v3035, %v3075
  %v3077 = vand.u32 %v2768, 4294901760
  %3078 = vmatmul.f32.gmra.mxu0 %v3077
  %v3079 = vpop.f32.mrf.mxu0
  %v3080 = vadd.f32 %v3039, %v3079
  %3081 = vdwg.mxu0
  %v3082 = vadd.f32 %v2174, %v3064
  %v3083 = vadd.f32 %v2175, %v3068
  %v3084 = vadd.f32 %v2176, %v3072
  %v3085 = vadd.f32 %v2177, %v3076
  %v3086 = vadd.f32 %v2178, %v3080
  %s3087 = scalar_lea.vmem %s5, 64
  %v3088 = vld [vmem:[%s3087] sm:$0xff]
  %v3089 = vld [vmem:[%s3087 + $0x8] sm:$0xff]
  %v3090 = vld [vmem:[%s3087 + $0x10] sm:$0xff]
  %v3091 = vld [vmem:[%s3087 + $0x18] sm:$0xff]
  %3092 = vmatpush.msra.mxu0 0.0
  %3093 = vmatpush.msra.mxu0 0.0
  %3094 = vmatpush.msra.mxu0 0.0
  %3095 = vmatpush.msra.mxu0 0.0
  %3096 = vmatpush.msra.mxu0 0.0
  %3097 = vmatpush.msra.mxu0 0.0
  %3098 = vmatpush.msra.mxu0 0.0
  %3099 = vmatpush.msra.mxu0 0.0
  %3100 = vmatpush.msra.mxu0 0.0
  %3101 = vmatpush.msra.mxu0 0.0
  %3102 = vmatpush.msra.mxu0 0.0
  %3103 = vmatpush.msra.mxu0 0.0
  %v3104 = vand.u32 %v3091, 4294901760
  %3105 = vmatpush.msra.mxu0 %v3104
  %v3106 = vand.u32 %v3090, 4294901760
  %3107 = vmatpush.msra.mxu0 %v3106
  %v3108 = vand.u32 %v3089, 4294901760
  %3109 = vmatpush.msra.mxu0 %v3108
  %v3110 = vand.u32 %v3088, 4294901760
  %3111 = vmatpush.msra.mxu0 %v3110
  %v3112 = vand.u32 %v1240, 4294901760
  %v3113 = vsub.f32 %v1240, %v3112
  %v3114 = vand.u32 %v3113, 4294901760
  %v3115 = vsub.f32 %v3113, %v3114
  %v3116 = vand.u32 %v3115, 4294901760
  %3117 = vmatmul.f32.gmra.mxu0 %v3116
  %v3118 = vpop.f32.mrf.mxu0
  %v3119 = vadd.f32 0.0, %v3118
  %v3120 = vand.u32 %v1243, 4294901760
  %v3121 = vsub.f32 %v1243, %v3120
  %v3122 = vand.u32 %v3121, 4294901760
  %v3123 = vsub.f32 %v3121, %v3122
  %v3124 = vand.u32 %v3123, 4294901760
  %3125 = vmatmul.f32.gmra.mxu0 %v3124
  %v3126 = vpop.f32.mrf.mxu0
  %v3127 = vadd.f32 0.0, %v3126
  %v3128 = vand.u32 %v1246, 4294901760
  %v3129 = vsub.f32 %v1246, %v3128
  %v3130 = vand.u32 %v3129, 4294901760
  %v3131 = vsub.f32 %v3129, %v3130
  %v3132 = vand.u32 %v3131, 4294901760
  %3133 = vmatmul.f32.gmra.mxu0 %v3132
  %v3134 = vpop.f32.mrf.mxu0
  %v3135 = vadd.f32 0.0, %v3134
  %v3136 = vand.u32 %v1249, 4294901760
  %v3137 = vsub.f32 %v1249, %v3136
  %v3138 = vand.u32 %v3137, 4294901760
  %v3139 = vsub.f32 %v3137, %v3138
  %v3140 = vand.u32 %v3139, 4294901760
  %3141 = vmatmul.f32.gmra.mxu0 %v3140
  %v3142 = vpop.f32.mrf.mxu0
  %v3143 = vadd.f32 0.0, %v3142
  %3144 = vdwg.mxu0
  %3145 = vmatpush.msra.mxu0 0.0
  %3146 = vmatpush.msra.mxu0 0.0
  %3147 = vmatpush.msra.mxu0 0.0
  %3148 = vmatpush.msra.mxu0 0.0
  %3149 = vmatpush.msra.mxu0 0.0
  %3150 = vmatpush.msra.mxu0 0.0
  %3151 = vmatpush.msra.mxu0 0.0
  %3152 = vmatpush.msra.mxu0 0.0
  %3153 = vmatpush.msra.mxu0 0.0
  %3154 = vmatpush.msra.mxu0 0.0
  %3155 = vmatpush.msra.mxu0 0.0
  %3156 = vmatpush.msra.mxu0 0.0
  %v3157 = vand.u32 %v3091, 4294901760
  %v3158 = vsub.f32 %v3091, %v3157
  %v3159 = vand.u32 %v3158, 4294901760
  %v3160 = vsub.f32 %v3158, %v3159
  %v3161 = vand.u32 %v3160, 4294901760
  %3162 = vmatpush.msra.mxu0 %v3161
  %v3163 = vand.u32 %v3090, 4294901760
  %v3164 = vsub.f32 %v3090, %v3163
  %v3165 = vand.u32 %v3164, 4294901760
  %v3166 = vsub.f32 %v3164, %v3165
  %v3167 = vand.u32 %v3166, 4294901760
  %3168 = vmatpush.msra.mxu0 %v3167
  %v3169 = vand.u32 %v3089, 4294901760
  %v3170 = vsub.f32 %v3089, %v3169
  %v3171 = vand.u32 %v3170, 4294901760
  %v3172 = vsub.f32 %v3170, %v3171
  %v3173 = vand.u32 %v3172, 4294901760
  %3174 = vmatpush.msra.mxu0 %v3173
  %v3175 = vand.u32 %v3088, 4294901760
  %v3176 = vsub.f32 %v3088, %v3175
  %v3177 = vand.u32 %v3176, 4294901760
  %v3178 = vsub.f32 %v3176, %v3177
  %v3179 = vand.u32 %v3178, 4294901760
  %3180 = vmatpush.msra.mxu0 %v3179
  %v3181 = vand.u32 %v1240, 4294901760
  %3182 = vmatmul.f32.gmra.mxu0 %v3181
  %v3183 = vpop.f32.mrf.mxu0
  %v3184 = vadd.f32 %v3119, %v3183
  %v3185 = vand.u32 %v1243, 4294901760
  %3186 = vmatmul.f32.gmra.mxu0 %v3185
  %v3187 = vpop.f32.mrf.mxu0
  %v3188 = vadd.f32 %v3127, %v3187
  %v3189 = vand.u32 %v1246, 4294901760
  %3190 = vmatmul.f32.gmra.mxu0 %v3189
  %v3191 = vpop.f32.mrf.mxu0
  %v3192 = vadd.f32 %v3135, %v3191
  %v3193 = vand.u32 %v1249, 4294901760
  %3194 = vmatmul.f32.gmra.mxu0 %v3193
  %v3195 = vpop.f32.mrf.mxu0
  %v3196 = vadd.f32 %v3143, %v3195
  %3197 = vdwg.mxu0
  %3198 = vmatpush.msra.mxu0 0.0
  %3199 = vmatpush.msra.mxu0 0.0
  %3200 = vmatpush.msra.mxu0 0.0
  %3201 = vmatpush.msra.mxu0 0.0
  %3202 = vmatpush.msra.mxu0 0.0
  %3203 = vmatpush.msra.mxu0 0.0
  %3204 = vmatpush.msra.mxu0 0.0
  %3205 = vmatpush.msra.mxu0 0.0
  %3206 = vmatpush.msra.mxu0 0.0
  %3207 = vmatpush.msra.mxu0 0.0
  %3208 = vmatpush.msra.mxu0 0.0
  %3209 = vmatpush.msra.mxu0 0.0
  %v3210 = vand.u32 %v3091, 4294901760
  %v3211 = vsub.f32 %v3091, %v3210
  %3212 = vmatpush.msra.mxu0 %v3211
  %v3213 = vand.u32 %v3090, 4294901760
  %v3214 = vsub.f32 %v3090, %v3213
  %3215 = vmatpush.msra.mxu0 %v3214
  %v3216 = vand.u32 %v3089, 4294901760
  %v3217 = vsub.f32 %v3089, %v3216
  %3218 = vmatpush.msra.mxu0 %v3217
  %v3219 = vand.u32 %v3088, 4294901760
  %v3220 = vsub.f32 %v3088, %v3219
  %3221 = vmatpush.msra.mxu0 %v3220
  %v3222 = vand.u32 %v1240, 4294901760
  %v3223 = vsub.f32 %v1240, %v3222
  %3224 = vmatmul.f32.gmra.mxu0 %v3223
  %v3225 = vpop.f32.mrf.mxu0
  %v3226 = vadd.f32 %v3184, %v3225
  %v3227 = vand.u32 %v1243, 4294901760
  %v3228 = vsub.f32 %v1243, %v3227
  %3229 = vmatmul.f32.gmra.mxu0 %v3228
  %v3230 = vpop.f32.mrf.mxu0
  %v3231 = vadd.f32 %v3188, %v3230
  %v3232 = vand.u32 %v1246, 4294901760
  %v3233 = vsub.f32 %v1246, %v3232
  %3234 = vmatmul.f32.gmra.mxu0 %v3233
  %v3235 = vpop.f32.mrf.mxu0
  %v3236 = vadd.f32 %v3192, %v3235
  %v3237 = vand.u32 %v1249, 4294901760
  %v3238 = vsub.f32 %v1249, %v3237
  %3239 = vmatmul.f32.gmra.mxu0 %v3238
  %v3240 = vpop.f32.mrf.mxu0
  %v3241 = vadd.f32 %v3196, %v3240
  %3242 = vdwg.mxu0
  %3243 = vmatpush.msra.mxu0 0.0
  %3244 = vmatpush.msra.mxu0 0.0
  %3245 = vmatpush.msra.mxu0 0.0
  %3246 = vmatpush.msra.mxu0 0.0
  %3247 = vmatpush.msra.mxu0 0.0
  %3248 = vmatpush.msra.mxu0 0.0
  %3249 = vmatpush.msra.mxu0 0.0
  %3250 = vmatpush.msra.mxu0 0.0
  %3251 = vmatpush.msra.mxu0 0.0
  %3252 = vmatpush.msra.mxu0 0.0
  %3253 = vmatpush.msra.mxu0 0.0
  %3254 = vmatpush.msra.mxu0 0.0
  %v3255 = vand.u32 %v3091, 4294901760
  %3256 = vmatpush.msra.mxu0 %v3255
  %v3257 = vand.u32 %v3090, 4294901760
  %3258 = vmatpush.msra.mxu0 %v3257
  %v3259 = vand.u32 %v3089, 4294901760
  %3260 = vmatpush.msra.mxu0 %v3259
  %v3261 = vand.u32 %v3088, 4294901760
  %3262 = vmatpush.msra.mxu0 %v3261
  %v3263 = vand.u32 %v1240, 4294901760
  %v3264 = vsub.f32 %v1240, %v3263
  %v3265 = vand.u32 %v3264, 4294901760
  %3266 = vmatmul.f32.gmra.mxu0 %v3265
  %v3267 = vpop.f32.mrf.mxu0
  %v3268 = vadd.f32 %v3226, %v3267
  %v3269 = vand.u32 %v1243, 4294901760
  %v3270 = vsub.f32 %v1243, %v3269
  %v3271 = vand.u32 %v3270, 4294901760
  %3272 = vmatmul.f32.gmra.mxu0 %v3271
  %v3273 = vpop.f32.mrf.mxu0
  %v3274 = vadd.f32 %v3231, %v3273
  %v3275 = vand.u32 %v1246, 4294901760
  %v3276 = vsub.f32 %v1246, %v3275
  %v3277 = vand.u32 %v3276, 4294901760
  %3278 = vmatmul.f32.gmra.mxu0 %v3277
  %v3279 = vpop.f32.mrf.mxu0
  %v3280 = vadd.f32 %v3236, %v3279
  %v3281 = vand.u32 %v1249, 4294901760
  %v3282 = vsub.f32 %v1249, %v3281
  %v3283 = vand.u32 %v3282, 4294901760
  %3284 = vmatmul.f32.gmra.mxu0 %v3283
  %v3285 = vpop.f32.mrf.mxu0
  %v3286 = vadd.f32 %v3241, %v3285
  %3287 = vdwg.mxu0
  %3288 = vmatpush.msra.mxu0 0.0
  %3289 = vmatpush.msra.mxu0 0.0
  %3290 = vmatpush.msra.mxu0 0.0
  %3291 = vmatpush.msra.mxu0 0.0
  %3292 = vmatpush.msra.mxu0 0.0
  %3293 = vmatpush.msra.mxu0 0.0
  %3294 = vmatpush.msra.mxu0 0.0
  %3295 = vmatpush.msra.mxu0 0.0
  %3296 = vmatpush.msra.mxu0 0.0
  %3297 = vmatpush.msra.mxu0 0.0
  %3298 = vmatpush.msra.mxu0 0.0
  %3299 = vmatpush.msra.mxu0 0.0
  %v3300 = vand.u32 %v3091, 4294901760
  %v3301 = vsub.f32 %v3091, %v3300
  %v3302 = vand.u32 %v3301, 4294901760
  %3303 = vmatpush.msra.mxu0 %v3302
  %v3304 = vand.u32 %v3090, 4294901760
  %v3305 = vsub.f32 %v3090, %v3304
  %v3306 = vand.u32 %v3305, 4294901760
  %3307 = vmatpush.msra.mxu0 %v3306
  %v3308 = vand.u32 %v3089, 4294901760
  %v3309 = vsub.f32 %v3089, %v3308
  %v3310 = vand.u32 %v3309, 4294901760
  %3311 = vmatpush.msra.mxu0 %v3310
  %v3312 = vand.u32 %v3088, 4294901760
  %v3313 = vsub.f32 %v3088, %v3312
  %v3314 = vand.u32 %v3313, 4294901760
  %3315 = vmatpush.msra.mxu0 %v3314
  %v3316 = vand.u32 %v1240, 4294901760
  %3317 = vmatmul.f32.gmra.mxu0 %v3316
  %v3318 = vpop.f32.mrf.mxu0
  %v3319 = vadd.f32 %v3268, %v3318
  %v3320 = vand.u32 %v1243, 4294901760
  %3321 = vmatmul.f32.gmra.mxu0 %v3320
  %v3322 = vpop.f32.mrf.mxu0
  %v3323 = vadd.f32 %v3274, %v3322
  %v3324 = vand.u32 %v1246, 4294901760
  %3325 = vmatmul.f32.gmra.mxu0 %v3324
  %v3326 = vpop.f32.mrf.mxu0
  %v3327 = vadd.f32 %v3280, %v3326
  %v3328 = vand.u32 %v1249, 4294901760
  %3329 = vmatmul.f32.gmra.mxu0 %v3328
  %v3330 = vpop.f32.mrf.mxu0
  %v3331 = vadd.f32 %v3286, %v3330
  %3332 = vdwg.mxu0
  %3333 = vmatpush.msra.mxu0 0.0
  %3334 = vmatpush.msra.mxu0 0.0
  %3335 = vmatpush.msra.mxu0 0.0
  %3336 = vmatpush.msra.mxu0 0.0
  %3337 = vmatpush.msra.mxu0 0.0
  %3338 = vmatpush.msra.mxu0 0.0
  %3339 = vmatpush.msra.mxu0 0.0
  %3340 = vmatpush.msra.mxu0 0.0
  %3341 = vmatpush.msra.mxu0 0.0
  %3342 = vmatpush.msra.mxu0 0.0
  %3343 = vmatpush.msra.mxu0 0.0
  %3344 = vmatpush.msra.mxu0 0.0
  %v3345 = vand.u32 %v3091, 4294901760
  %3346 = vmatpush.msra.mxu0 %v3345
  %v3347 = vand.u32 %v3090, 4294901760
  %3348 = vmatpush.msra.mxu0 %v3347
  %v3349 = vand.u32 %v3089, 4294901760
  %3350 = vmatpush.msra.mxu0 %v3349
  %v3351 = vand.u32 %v3088, 4294901760
  %3352 = vmatpush.msra.mxu0 %v3351
  %v3353 = vand.u32 %v1240, 4294901760
  %3354 = vmatmul.f32.gmra.mxu0 %v3353
  %v3355 = vpop.f32.mrf.mxu0
  %v3356 = vadd.f32 %v3319, %v3355
  %v3357 = vand.u32 %v1243, 4294901760
  %3358 = vmatmul.f32.gmra.mxu0 %v3357
  %v3359 = vpop.f32.mrf.mxu0
  %v3360 = vadd.f32 %v3323, %v3359
  %v3361 = vand.u32 %v1246, 4294901760
  %3362 = vmatmul.f32.gmra.mxu0 %v3361
  %v3363 = vpop.f32.mrf.mxu0
  %v3364 = vadd.f32 %v3327, %v3363
  %v3365 = vand.u32 %v1249, 4294901760
  %3366 = vmatmul.f32.gmra.mxu0 %v3365
  %v3367 = vpop.f32.mrf.mxu0
  %v3368 = vadd.f32 %v3331, %v3367
  %3369 = vdwg.mxu0
  %s3370 = scalar_lea.vmem %s6, 64
  %v3371 = vld [vmem:[%s3370] sm:$0xff]
  %v3372 = vld [vmem:[%s3370 + $0x8] sm:$0xff]
  %v3373 = vld [vmem:[%s3370 + $0x10] sm:$0xff]
  %v3374 = vld [vmem:[%s3370 + $0x18] sm:$0xff]
  %3375 = vmatpush.msra.mxu0 0.0
  %3376 = vmatpush.msra.mxu0 0.0
  %3377 = vmatpush.msra.mxu0 0.0
  %3378 = vmatpush.msra.mxu0 0.0
  %3379 = vmatpush.msra.mxu0 0.0
  %3380 = vmatpush.msra.mxu0 0.0
  %3381 = vmatpush.msra.mxu0 0.0
  %3382 = vmatpush.msra.mxu0 0.0
  %3383 = vmatpush.msra.mxu0 0.0
  %3384 = vmatpush.msra.mxu0 0.0
  %3385 = vmatpush.msra.mxu0 0.0
  %3386 = vmatpush.msra.mxu0 0.0
  %v3387 = vand.u32 %v3374, 4294901760
  %3388 = vmatpush.msra.mxu0 %v3387
  %v3389 = vand.u32 %v3373, 4294901760
  %3390 = vmatpush.msra.mxu0 %v3389
  %v3391 = vand.u32 %v3372, 4294901760
  %3392 = vmatpush.msra.mxu0 %v3391
  %v3393 = vand.u32 %v3371, 4294901760
  %3394 = vmatpush.msra.mxu0 %v3393
  %v3395 = vand.u32 %v1240, 4294901760
  %v3396 = vsub.f32 %v1240, %v3395
  %v3397 = vand.u32 %v3396, 4294901760
  %v3398 = vsub.f32 %v3396, %v3397
  %v3399 = vand.u32 %v3398, 4294901760
  %3400 = vmatmul.f32.gmra.mxu0 %v3399
  %v3401 = vpop.f32.mrf.mxu0
  %v3402 = vadd.f32 0.0, %v3401
  %v3403 = vand.u32 %v1243, 4294901760
  %v3404 = vsub.f32 %v1243, %v3403
  %v3405 = vand.u32 %v3404, 4294901760
  %v3406 = vsub.f32 %v3404, %v3405
  %v3407 = vand.u32 %v3406, 4294901760
  %3408 = vmatmul.f32.gmra.mxu0 %v3407
  %v3409 = vpop.f32.mrf.mxu0
  %v3410 = vadd.f32 0.0, %v3409
  %v3411 = vand.u32 %v1246, 4294901760
  %v3412 = vsub.f32 %v1246, %v3411
  %v3413 = vand.u32 %v3412, 4294901760
  %v3414 = vsub.f32 %v3412, %v3413
  %v3415 = vand.u32 %v3414, 4294901760
  %3416 = vmatmul.f32.gmra.mxu0 %v3415
  %v3417 = vpop.f32.mrf.mxu0
  %v3418 = vadd.f32 0.0, %v3417
  %v3419 = vand.u32 %v1249, 4294901760
  %v3420 = vsub.f32 %v1249, %v3419
  %v3421 = vand.u32 %v3420, 4294901760
  %v3422 = vsub.f32 %v3420, %v3421
  %v3423 = vand.u32 %v3422, 4294901760
  %3424 = vmatmul.f32.gmra.mxu0 %v3423
  %v3425 = vpop.f32.mrf.mxu0
  %v3426 = vadd.f32 0.0, %v3425
  %3427 = vdwg.mxu0
  %3428 = vmatpush.msra.mxu0 0.0
  %3429 = vmatpush.msra.mxu0 0.0
  %3430 = vmatpush.msra.mxu0 0.0
  %3431 = vmatpush.msra.mxu0 0.0
  %3432 = vmatpush.msra.mxu0 0.0
  %3433 = vmatpush.msra.mxu0 0.0
  %3434 = vmatpush.msra.mxu0 0.0
  %3435 = vmatpush.msra.mxu0 0.0
  %3436 = vmatpush.msra.mxu0 0.0
  %3437 = vmatpush.msra.mxu0 0.0
  %3438 = vmatpush.msra.mxu0 0.0
  %3439 = vmatpush.msra.mxu0 0.0
  %v3440 = vand.u32 %v3374, 4294901760
  %v3441 = vsub.f32 %v3374, %v3440
  %v3442 = vand.u32 %v3441, 4294901760
  %v3443 = vsub.f32 %v3441, %v3442
  %v3444 = vand.u32 %v3443, 4294901760
  %3445 = vmatpush.msra.mxu0 %v3444
  %v3446 = vand.u32 %v3373, 4294901760
  %v3447 = vsub.f32 %v3373, %v3446
  %v3448 = vand.u32 %v3447, 4294901760
  %v3449 = vsub.f32 %v3447, %v3448
  %v3450 = vand.u32 %v3449, 4294901760
  %3451 = vmatpush.msra.mxu0 %v3450
  %v3452 = vand.u32 %v3372, 4294901760
  %v3453 = vsub.f32 %v3372, %v3452
  %v3454 = vand.u32 %v3453, 4294901760
  %v3455 = vsub.f32 %v3453, %v3454
  %v3456 = vand.u32 %v3455, 4294901760
  %3457 = vmatpush.msra.mxu0 %v3456
  %v3458 = vand.u32 %v3371, 4294901760
  %v3459 = vsub.f32 %v3371, %v3458
  %v3460 = vand.u32 %v3459, 4294901760
  %v3461 = vsub.f32 %v3459, %v3460
  %v3462 = vand.u32 %v3461, 4294901760
  %3463 = vmatpush.msra.mxu0 %v3462
  %v3464 = vand.u32 %v1240, 4294901760
  %3465 = vmatmul.f32.gmra.mxu0 %v3464
  %v3466 = vpop.f32.mrf.mxu0
  %v3467 = vadd.f32 %v3402, %v3466
  %v3468 = vand.u32 %v1243, 4294901760
  %3469 = vmatmul.f32.gmra.mxu0 %v3468
  %v3470 = vpop.f32.mrf.mxu0
  %v3471 = vadd.f32 %v3410, %v3470
  %v3472 = vand.u32 %v1246, 4294901760
  %3473 = vmatmul.f32.gmra.mxu0 %v3472
  %v3474 = vpop.f32.mrf.mxu0
  %v3475 = vadd.f32 %v3418, %v3474
  %v3476 = vand.u32 %v1249, 4294901760
  %3477 = vmatmul.f32.gmra.mxu0 %v3476
  %v3478 = vpop.f32.mrf.mxu0
  %v3479 = vadd.f32 %v3426, %v3478
  %3480 = vdwg.mxu0
  %3481 = vmatpush.msra.mxu0 0.0
  %3482 = vmatpush.msra.mxu0 0.0
  %3483 = vmatpush.msra.mxu0 0.0
  %3484 = vmatpush.msra.mxu0 0.0
  %3485 = vmatpush.msra.mxu0 0.0
  %3486 = vmatpush.msra.mxu0 0.0
  %3487 = vmatpush.msra.mxu0 0.0
  %3488 = vmatpush.msra.mxu0 0.0
  %3489 = vmatpush.msra.mxu0 0.0
  %3490 = vmatpush.msra.mxu0 0.0
  %3491 = vmatpush.msra.mxu0 0.0
  %3492 = vmatpush.msra.mxu0 0.0
  %v3493 = vand.u32 %v3374, 4294901760
  %v3494 = vsub.f32 %v3374, %v3493
  %3495 = vmatpush.msra.mxu0 %v3494
  %v3496 = vand.u32 %v3373, 4294901760
  %v3497 = vsub.f32 %v3373, %v3496
  %3498 = vmatpush.msra.mxu0 %v3497
  %v3499 = vand.u32 %v3372, 4294901760
  %v3500 = vsub.f32 %v3372, %v3499
  %3501 = vmatpush.msra.mxu0 %v3500
  %v3502 = vand.u32 %v3371, 4294901760
  %v3503 = vsub.f32 %v3371, %v3502
  %3504 = vmatpush.msra.mxu0 %v3503
  %v3505 = vand.u32 %v1240, 4294901760
  %v3506 = vsub.f32 %v1240, %v3505
  %3507 = vmatmul.f32.gmra.mxu0 %v3506
  %v3508 = vpop.f32.mrf.mxu0
  %v3509 = vadd.f32 %v3467, %v3508
  %v3510 = vand.u32 %v1243, 4294901760
  %v3511 = vsub.f32 %v1243, %v3510
  %3512 = vmatmul.f32.gmra.mxu0 %v3511
  %v3513 = vpop.f32.mrf.mxu0
  %v3514 = vadd.f32 %v3471, %v3513
  %v3515 = vand.u32 %v1246, 4294901760
  %v3516 = vsub.f32 %v1246, %v3515
  %3517 = vmatmul.f32.gmra.mxu0 %v3516
  %v3518 = vpop.f32.mrf.mxu0
  %v3519 = vadd.f32 %v3475, %v3518
  %v3520 = vand.u32 %v1249, 4294901760
  %v3521 = vsub.f32 %v1249, %v3520
  %3522 = vmatmul.f32.gmra.mxu0 %v3521
  %v3523 = vpop.f32.mrf.mxu0
  %v3524 = vadd.f32 %v3479, %v3523
  %3525 = vdwg.mxu0
  %3526 = vmatpush.msra.mxu0 0.0
  %3527 = vmatpush.msra.mxu0 0.0
  %3528 = vmatpush.msra.mxu0 0.0
  %3529 = vmatpush.msra.mxu0 0.0
  %3530 = vmatpush.msra.mxu0 0.0
  %3531 = vmatpush.msra.mxu0 0.0
  %3532 = vmatpush.msra.mxu0 0.0
  %3533 = vmatpush.msra.mxu0 0.0
  %3534 = vmatpush.msra.mxu0 0.0
  %3535 = vmatpush.msra.mxu0 0.0
  %3536 = vmatpush.msra.mxu0 0.0
  %3537 = vmatpush.msra.mxu0 0.0
  %v3538 = vand.u32 %v3374, 4294901760
  %3539 = vmatpush.msra.mxu0 %v3538
  %v3540 = vand.u32 %v3373, 4294901760
  %3541 = vmatpush.msra.mxu0 %v3540
  %v3542 = vand.u32 %v3372, 4294901760
  %3543 = vmatpush.msra.mxu0 %v3542
  %v3544 = vand.u32 %v3371, 4294901760
  %3545 = vmatpush.msra.mxu0 %v3544
  %v3546 = vand.u32 %v1240, 4294901760
  %v3547 = vsub.f32 %v1240, %v3546
  %v3548 = vand.u32 %v3547, 4294901760
  %3549 = vmatmul.f32.gmra.mxu0 %v3548
  %v3550 = vpop.f32.mrf.mxu0
  %v3551 = vadd.f32 %v3509, %v3550
  %v3552 = vand.u32 %v1243, 4294901760
  %v3553 = vsub.f32 %v1243, %v3552
  %v3554 = vand.u32 %v3553, 4294901760
  %3555 = vmatmul.f32.gmra.mxu0 %v3554
  %v3556 = vpop.f32.mrf.mxu0
  %v3557 = vadd.f32 %v3514, %v3556
  %v3558 = vand.u32 %v1246, 4294901760
  %v3559 = vsub.f32 %v1246, %v3558
  %v3560 = vand.u32 %v3559, 4294901760
  %3561 = vmatmul.f32.gmra.mxu0 %v3560
  %v3562 = vpop.f32.mrf.mxu0
  %v3563 = vadd.f32 %v3519, %v3562
  %v3564 = vand.u32 %v1249, 4294901760
  %v3565 = vsub.f32 %v1249, %v3564
  %v3566 = vand.u32 %v3565, 4294901760
  %3567 = vmatmul.f32.gmra.mxu0 %v3566
  %v3568 = vpop.f32.mrf.mxu0
  %v3569 = vadd.f32 %v3524, %v3568
  %3570 = vdwg.mxu0
  %3571 = vmatpush.msra.mxu0 0.0
  %3572 = vmatpush.msra.mxu0 0.0
  %3573 = vmatpush.msra.mxu0 0.0
  %3574 = vmatpush.msra.mxu0 0.0
  %3575 = vmatpush.msra.mxu0 0.0
  %3576 = vmatpush.msra.mxu0 0.0
  %3577 = vmatpush.msra.mxu0 0.0
  %3578 = vmatpush.msra.mxu0 0.0
  %3579 = vmatpush.msra.mxu0 0.0
  %3580 = vmatpush.msra.mxu0 0.0
  %3581 = vmatpush.msra.mxu0 0.0
  %3582 = vmatpush.msra.mxu0 0.0
  %v3583 = vand.u32 %v3374, 4294901760
  %v3584 = vsub.f32 %v3374, %v3583
  %v3585 = vand.u32 %v3584, 4294901760
  %3586 = vmatpush.msra.mxu0 %v3585
  %v3587 = vand.u32 %v3373, 4294901760
  %v3588 = vsub.f32 %v3373, %v3587
  %v3589 = vand.u32 %v3588, 4294901760
  %3590 = vmatpush.msra.mxu0 %v3589
  %v3591 = vand.u32 %v3372, 4294901760
  %v3592 = vsub.f32 %v3372, %v3591
  %v3593 = vand.u32 %v3592, 4294901760
  %3594 = vmatpush.msra.mxu0 %v3593
  %v3595 = vand.u32 %v3371, 4294901760
  %v3596 = vsub.f32 %v3371, %v3595
  %v3597 = vand.u32 %v3596, 4294901760
  %3598 = vmatpush.msra.mxu0 %v3597
  %v3599 = vand.u32 %v1240, 4294901760
  %3600 = vmatmul.f32.gmra.mxu0 %v3599
  %v3601 = vpop.f32.mrf.mxu0
  %v3602 = vadd.f32 %v3551, %v3601
  %v3603 = vand.u32 %v1243, 4294901760
  %3604 = vmatmul.f32.gmra.mxu0 %v3603
  %v3605 = vpop.f32.mrf.mxu0
  %v3606 = vadd.f32 %v3557, %v3605
  %v3607 = vand.u32 %v1246, 4294901760
  %3608 = vmatmul.f32.gmra.mxu0 %v3607
  %v3609 = vpop.f32.mrf.mxu0
  %v3610 = vadd.f32 %v3563, %v3609
  %v3611 = vand.u32 %v1249, 4294901760
  %3612 = vmatmul.f32.gmra.mxu0 %v3611
  %v3613 = vpop.f32.mrf.mxu0
  %v3614 = vadd.f32 %v3569, %v3613
  %3615 = vdwg.mxu0
  %3616 = vmatpush.msra.mxu0 0.0
  %3617 = vmatpush.msra.mxu0 0.0
  %3618 = vmatpush.msra.mxu0 0.0
  %3619 = vmatpush.msra.mxu0 0.0
  %3620 = vmatpush.msra.mxu0 0.0
  %3621 = vmatpush.msra.mxu0 0.0
  %3622 = vmatpush.msra.mxu0 0.0
  %3623 = vmatpush.msra.mxu0 0.0
  %3624 = vmatpush.msra.mxu0 0.0
  %3625 = vmatpush.msra.mxu0 0.0
  %3626 = vmatpush.msra.mxu0 0.0
  %3627 = vmatpush.msra.mxu0 0.0
  %v3628 = vand.u32 %v3374, 4294901760
  %3629 = vmatpush.msra.mxu0 %v3628
  %v3630 = vand.u32 %v3373, 4294901760
  %3631 = vmatpush.msra.mxu0 %v3630
  %v3632 = vand.u32 %v3372, 4294901760
  %3633 = vmatpush.msra.mxu0 %v3632
  %v3634 = vand.u32 %v3371, 4294901760
  %3635 = vmatpush.msra.mxu0 %v3634
  %v3636 = vand.u32 %v1240, 4294901760
  %3637 = vmatmul.f32.gmra.mxu0 %v3636
  %v3638 = vpop.f32.mrf.mxu0
  %v3639 = vadd.f32 %v3602, %v3638
  %v3640 = vand.u32 %v1243, 4294901760
  %3641 = vmatmul.f32.gmra.mxu0 %v3640
  %v3642 = vpop.f32.mrf.mxu0
  %v3643 = vadd.f32 %v3606, %v3642
  %v3644 = vand.u32 %v1246, 4294901760
  %3645 = vmatmul.f32.gmra.mxu0 %v3644
  %v3646 = vpop.f32.mrf.mxu0
  %v3647 = vadd.f32 %v3610, %v3646
  %v3648 = vand.u32 %v1249, 4294901760
  %3649 = vmatmul.f32.gmra.mxu0 %v3648
  %v3650 = vpop.f32.mrf.mxu0
  %v3651 = vadd.f32 %v3614, %v3650
  %3652 = vdwg.mxu0
  %v3653 = vmax.f32 %v3356, %v3639
  %v3654 = vmax.f32 %v3360, %v3643
  %v3655 = vmax.f32 %v3364, %v3647
  %v3656 = vmax.f32 %v3368, %v3651
  %s3657 = scalar_lea.vmem %s7, 80
  %v3658 = vld [vmem:[%s3657] sm:$0xff]
  %v3659 = vld [vmem:[%s3657 + $0x8] sm:$0xff]
  %v3660 = vld [vmem:[%s3657 + $0x10] sm:$0xff]
  %v3661 = vld [vmem:[%s3657 + $0x18] sm:$0xff]
  %v3662 = vld [vmem:[%s3657 + $0x20] sm:$0xff]
  %v3664 = vsel %vm1820, %v3658, 0
  %v3667 = vsel %vm1820, %v3659, 0
  %v3670 = vsel %vm1820, %v3660, 0
  %v3673 = vsel %vm1820, %v3661, 0
  %v3676 = vsel %vm1820, %v3662, 0
  %v3679 = vsel %vm1836, %v3656, 0
  %3681 = vmatpush.msra.mxu0 0.0
  %3682 = vmatpush.msra.mxu0 0.0
  %3683 = vmatpush.msra.mxu0 0.0
  %3684 = vmatpush.msra.mxu0 0.0
  %3685 = vmatpush.msra.mxu0 0.0
  %3686 = vmatpush.msra.mxu0 0.0
  %3687 = vmatpush.msra.mxu0 0.0
  %3688 = vmatpush.msra.mxu0 0.0
  %3689 = vmatpush.msra.mxu0 0.0
  %3690 = vmatpush.msra.mxu0 0.0
  %3691 = vmatpush.msra.mxu0 0.0
  %3692 = vmatpush.msra.mxu0 0.0
  %v3693 = vand.u32 %v3679, 4294901760
  %3694 = vmatpush.msra.mxu0 %v3693
  %v3695 = vand.u32 %v3655, 4294901760
  %3696 = vmatpush.msra.mxu0 %v3695
  %v3697 = vand.u32 %v3654, 4294901760
  %3698 = vmatpush.msra.mxu0 %v3697
  %v3699 = vand.u32 %v3653, 4294901760
  %3700 = vmatpush.msra.mxu0 %v3699
  %v3701 = vand.u32 %v3664, 4294901760
  %v3702 = vsub.f32 %v3664, %v3701
  %v3703 = vand.u32 %v3702, 4294901760
  %v3704 = vsub.f32 %v3702, %v3703
  %v3705 = vand.u32 %v3704, 4294901760
  %3706 = vmatmul.f32.gmra.mxu0 %v3705
  %v3707 = vpop.f32.mrf.mxu0
  %v3708 = vadd.f32 0.0, %v3707
  %v3709 = vand.u32 %v3667, 4294901760
  %v3710 = vsub.f32 %v3667, %v3709
  %v3711 = vand.u32 %v3710, 4294901760
  %v3712 = vsub.f32 %v3710, %v3711
  %v3713 = vand.u32 %v3712, 4294901760
  %3714 = vmatmul.f32.gmra.mxu0 %v3713
  %v3715 = vpop.f32.mrf.mxu0
  %v3716 = vadd.f32 0.0, %v3715
  %v3717 = vand.u32 %v3670, 4294901760
  %v3718 = vsub.f32 %v3670, %v3717
  %v3719 = vand.u32 %v3718, 4294901760
  %v3720 = vsub.f32 %v3718, %v3719
  %v3721 = vand.u32 %v3720, 4294901760
  %3722 = vmatmul.f32.gmra.mxu0 %v3721
  %v3723 = vpop.f32.mrf.mxu0
  %v3724 = vadd.f32 0.0, %v3723
  %v3725 = vand.u32 %v3673, 4294901760
  %v3726 = vsub.f32 %v3673, %v3725
  %v3727 = vand.u32 %v3726, 4294901760
  %v3728 = vsub.f32 %v3726, %v3727
  %v3729 = vand.u32 %v3728, 4294901760
  %3730 = vmatmul.f32.gmra.mxu0 %v3729
  %v3731 = vpop.f32.mrf.mxu0
  %v3732 = vadd.f32 0.0, %v3731
  %v3733 = vand.u32 %v3676, 4294901760
  %v3734 = vsub.f32 %v3676, %v3733
  %v3735 = vand.u32 %v3734, 4294901760
  %v3736 = vsub.f32 %v3734, %v3735
  %v3737 = vand.u32 %v3736, 4294901760
  %3738 = vmatmul.f32.gmra.mxu0 %v3737
  %v3739 = vpop.f32.mrf.mxu0
  %v3740 = vadd.f32 0.0, %v3739
  %3741 = vdwg.mxu0
  %3742 = vmatpush.msra.mxu0 0.0
  %3743 = vmatpush.msra.mxu0 0.0
  %3744 = vmatpush.msra.mxu0 0.0
  %3745 = vmatpush.msra.mxu0 0.0
  %3746 = vmatpush.msra.mxu0 0.0
  %3747 = vmatpush.msra.mxu0 0.0
  %3748 = vmatpush.msra.mxu0 0.0
  %3749 = vmatpush.msra.mxu0 0.0
  %3750 = vmatpush.msra.mxu0 0.0
  %3751 = vmatpush.msra.mxu0 0.0
  %3752 = vmatpush.msra.mxu0 0.0
  %3753 = vmatpush.msra.mxu0 0.0
  %v3754 = vand.u32 %v3679, 4294901760
  %v3755 = vsub.f32 %v3679, %v3754
  %v3756 = vand.u32 %v3755, 4294901760
  %v3757 = vsub.f32 %v3755, %v3756
  %v3758 = vand.u32 %v3757, 4294901760
  %3759 = vmatpush.msra.mxu0 %v3758
  %v3760 = vand.u32 %v3655, 4294901760
  %v3761 = vsub.f32 %v3655, %v3760
  %v3762 = vand.u32 %v3761, 4294901760
  %v3763 = vsub.f32 %v3761, %v3762
  %v3764 = vand.u32 %v3763, 4294901760
  %3765 = vmatpush.msra.mxu0 %v3764
  %v3766 = vand.u32 %v3654, 4294901760
  %v3767 = vsub.f32 %v3654, %v3766
  %v3768 = vand.u32 %v3767, 4294901760
  %v3769 = vsub.f32 %v3767, %v3768
  %v3770 = vand.u32 %v3769, 4294901760
  %3771 = vmatpush.msra.mxu0 %v3770
  %v3772 = vand.u32 %v3653, 4294901760
  %v3773 = vsub.f32 %v3653, %v3772
  %v3774 = vand.u32 %v3773, 4294901760
  %v3775 = vsub.f32 %v3773, %v3774
  %v3776 = vand.u32 %v3775, 4294901760
  %3777 = vmatpush.msra.mxu0 %v3776
  %v3778 = vand.u32 %v3664, 4294901760
  %3779 = vmatmul.f32.gmra.mxu0 %v3778
  %v3780 = vpop.f32.mrf.mxu0
  %v3781 = vadd.f32 %v3708, %v3780
  %v3782 = vand.u32 %v3667, 4294901760
  %3783 = vmatmul.f32.gmra.mxu0 %v3782
  %v3784 = vpop.f32.mrf.mxu0
  %v3785 = vadd.f32 %v3716, %v3784
  %v3786 = vand.u32 %v3670, 4294901760
  %3787 = vmatmul.f32.gmra.mxu0 %v3786
  %v3788 = vpop.f32.mrf.mxu0
  %v3789 = vadd.f32 %v3724, %v3788
  %v3790 = vand.u32 %v3673, 4294901760
  %3791 = vmatmul.f32.gmra.mxu0 %v3790
  %v3792 = vpop.f32.mrf.mxu0
  %v3793 = vadd.f32 %v3732, %v3792
  %v3794 = vand.u32 %v3676, 4294901760
  %3795 = vmatmul.f32.gmra.mxu0 %v3794
  %v3796 = vpop.f32.mrf.mxu0
  %v3797 = vadd.f32 %v3740, %v3796
  %3798 = vdwg.mxu0
  %3799 = vmatpush.msra.mxu0 0.0
  %3800 = vmatpush.msra.mxu0 0.0
  %3801 = vmatpush.msra.mxu0 0.0
  %3802 = vmatpush.msra.mxu0 0.0
  %3803 = vmatpush.msra.mxu0 0.0
  %3804 = vmatpush.msra.mxu0 0.0
  %3805 = vmatpush.msra.mxu0 0.0
  %3806 = vmatpush.msra.mxu0 0.0
  %3807 = vmatpush.msra.mxu0 0.0
  %3808 = vmatpush.msra.mxu0 0.0
  %3809 = vmatpush.msra.mxu0 0.0
  %3810 = vmatpush.msra.mxu0 0.0
  %v3811 = vand.u32 %v3679, 4294901760
  %v3812 = vsub.f32 %v3679, %v3811
  %3813 = vmatpush.msra.mxu0 %v3812
  %v3814 = vand.u32 %v3655, 4294901760
  %v3815 = vsub.f32 %v3655, %v3814
  %3816 = vmatpush.msra.mxu0 %v3815
  %v3817 = vand.u32 %v3654, 4294901760
  %v3818 = vsub.f32 %v3654, %v3817
  %3819 = vmatpush.msra.mxu0 %v3818
  %v3820 = vand.u32 %v3653, 4294901760
  %v3821 = vsub.f32 %v3653, %v3820
  %3822 = vmatpush.msra.mxu0 %v3821
  %v3823 = vand.u32 %v3664, 4294901760
  %v3824 = vsub.f32 %v3664, %v3823
  %3825 = vmatmul.f32.gmra.mxu0 %v3824
  %v3826 = vpop.f32.mrf.mxu0
  %v3827 = vadd.f32 %v3781, %v3826
  %v3828 = vand.u32 %v3667, 4294901760
  %v3829 = vsub.f32 %v3667, %v3828
  %3830 = vmatmul.f32.gmra.mxu0 %v3829
  %v3831 = vpop.f32.mrf.mxu0
  %v3832 = vadd.f32 %v3785, %v3831
  %v3833 = vand.u32 %v3670, 4294901760
  %v3834 = vsub.f32 %v3670, %v3833
  %3835 = vmatmul.f32.gmra.mxu0 %v3834
  %v3836 = vpop.f32.mrf.mxu0
  %v3837 = vadd.f32 %v3789, %v3836
  %v3838 = vand.u32 %v3673, 4294901760
  %v3839 = vsub.f32 %v3673, %v3838
  %3840 = vmatmul.f32.gmra.mxu0 %v3839
  %v3841 = vpop.f32.mrf.mxu0
  %v3842 = vadd.f32 %v3793, %v3841
  %v3843 = vand.u32 %v3676, 4294901760
  %v3844 = vsub.f32 %v3676, %v3843
  %3845 = vmatmul.f32.gmra.mxu0 %v3844
  %v3846 = vpop.f32.mrf.mxu0
  %v3847 = vadd.f32 %v3797, %v3846
  %3848 = vdwg.mxu0
  %3849 = vmatpush.msra.mxu0 0.0
  %3850 = vmatpush.msra.mxu0 0.0
  %3851 = vmatpush.msra.mxu0 0.0
  %3852 = vmatpush.msra.mxu0 0.0
  %3853 = vmatpush.msra.mxu0 0.0
  %3854 = vmatpush.msra.mxu0 0.0
  %3855 = vmatpush.msra.mxu0 0.0
  %3856 = vmatpush.msra.mxu0 0.0
  %3857 = vmatpush.msra.mxu0 0.0
  %3858 = vmatpush.msra.mxu0 0.0
  %3859 = vmatpush.msra.mxu0 0.0
  %3860 = vmatpush.msra.mxu0 0.0
  %v3861 = vand.u32 %v3679, 4294901760
  %3862 = vmatpush.msra.mxu0 %v3861
  %v3863 = vand.u32 %v3655, 4294901760
  %3864 = vmatpush.msra.mxu0 %v3863
  %v3865 = vand.u32 %v3654, 4294901760
  %3866 = vmatpush.msra.mxu0 %v3865
  %v3867 = vand.u32 %v3653, 4294901760
  %3868 = vmatpush.msra.mxu0 %v3867
  %v3869 = vand.u32 %v3664, 4294901760
  %v3870 = vsub.f32 %v3664, %v3869
  %v3871 = vand.u32 %v3870, 4294901760
  %3872 = vmatmul.f32.gmra.mxu0 %v3871
  %v3873 = vpop.f32.mrf.mxu0
  %v3874 = vadd.f32 %v3827, %v3873
  %v3875 = vand.u32 %v3667, 4294901760
  %v3876 = vsub.f32 %v3667, %v3875
  %v3877 = vand.u32 %v3876, 4294901760
  %3878 = vmatmul.f32.gmra.mxu0 %v3877
  %v3879 = vpop.f32.mrf.mxu0
  %v3880 = vadd.f32 %v3832, %v3879
  %v3881 = vand.u32 %v3670, 4294901760
  %v3882 = vsub.f32 %v3670, %v3881
  %v3883 = vand.u32 %v3882, 4294901760
  %3884 = vmatmul.f32.gmra.mxu0 %v3883
  %v3885 = vpop.f32.mrf.mxu0
  %v3886 = vadd.f32 %v3837, %v3885
  %v3887 = vand.u32 %v3673, 4294901760
  %v3888 = vsub.f32 %v3673, %v3887
  %v3889 = vand.u32 %v3888, 4294901760
  %3890 = vmatmul.f32.gmra.mxu0 %v3889
  %v3891 = vpop.f32.mrf.mxu0
  %v3892 = vadd.f32 %v3842, %v3891
  %v3893 = vand.u32 %v3676, 4294901760
  %v3894 = vsub.f32 %v3676, %v3893
  %v3895 = vand.u32 %v3894, 4294901760
  %3896 = vmatmul.f32.gmra.mxu0 %v3895
  %v3897 = vpop.f32.mrf.mxu0
  %v3898 = vadd.f32 %v3847, %v3897
  %3899 = vdwg.mxu0
  %3900 = vmatpush.msra.mxu0 0.0
  %3901 = vmatpush.msra.mxu0 0.0
  %3902 = vmatpush.msra.mxu0 0.0
  %3903 = vmatpush.msra.mxu0 0.0
  %3904 = vmatpush.msra.mxu0 0.0
  %3905 = vmatpush.msra.mxu0 0.0
  %3906 = vmatpush.msra.mxu0 0.0
  %3907 = vmatpush.msra.mxu0 0.0
  %3908 = vmatpush.msra.mxu0 0.0
  %3909 = vmatpush.msra.mxu0 0.0
  %3910 = vmatpush.msra.mxu0 0.0
  %3911 = vmatpush.msra.mxu0 0.0
  %v3912 = vand.u32 %v3679, 4294901760
  %v3913 = vsub.f32 %v3679, %v3912
  %v3914 = vand.u32 %v3913, 4294901760
  %3915 = vmatpush.msra.mxu0 %v3914
  %v3916 = vand.u32 %v3655, 4294901760
  %v3917 = vsub.f32 %v3655, %v3916
  %v3918 = vand.u32 %v3917, 4294901760
  %3919 = vmatpush.msra.mxu0 %v3918
  %v3920 = vand.u32 %v3654, 4294901760
  %v3921 = vsub.f32 %v3654, %v3920
  %v3922 = vand.u32 %v3921, 4294901760
  %3923 = vmatpush.msra.mxu0 %v3922
  %v3924 = vand.u32 %v3653, 4294901760
  %v3925 = vsub.f32 %v3653, %v3924
  %v3926 = vand.u32 %v3925, 4294901760
  %3927 = vmatpush.msra.mxu0 %v3926
  %v3928 = vand.u32 %v3664, 4294901760
  %3929 = vmatmul.f32.gmra.mxu0 %v3928
  %v3930 = vpop.f32.mrf.mxu0
  %v3931 = vadd.f32 %v3874, %v3930
  %v3932 = vand.u32 %v3667, 4294901760
  %3933 = vmatmul.f32.gmra.mxu0 %v3932
  %v3934 = vpop.f32.mrf.mxu0
  %v3935 = vadd.f32 %v3880, %v3934
  %v3936 = vand.u32 %v3670, 4294901760
  %3937 = vmatmul.f32.gmra.mxu0 %v3936
  %v3938 = vpop.f32.mrf.mxu0
  %v3939 = vadd.f32 %v3886, %v3938
  %v3940 = vand.u32 %v3673, 4294901760
  %3941 = vmatmul.f32.gmra.mxu0 %v3940
  %v3942 = vpop.f32.mrf.mxu0
  %v3943 = vadd.f32 %v3892, %v3942
  %v3944 = vand.u32 %v3676, 4294901760
  %3945 = vmatmul.f32.gmra.mxu0 %v3944
  %v3946 = vpop.f32.mrf.mxu0
  %v3947 = vadd.f32 %v3898, %v3946
  %3948 = vdwg.mxu0
  %3949 = vmatpush.msra.mxu0 0.0
  %3950 = vmatpush.msra.mxu0 0.0
  %3951 = vmatpush.msra.mxu0 0.0
  %3952 = vmatpush.msra.mxu0 0.0
  %3953 = vmatpush.msra.mxu0 0.0
  %3954 = vmatpush.msra.mxu0 0.0
  %3955 = vmatpush.msra.mxu0 0.0
  %3956 = vmatpush.msra.mxu0 0.0
  %3957 = vmatpush.msra.mxu0 0.0
  %3958 = vmatpush.msra.mxu0 0.0
  %3959 = vmatpush.msra.mxu0 0.0
  %3960 = vmatpush.msra.mxu0 0.0
  %v3961 = vand.u32 %v3679, 4294901760
  %3962 = vmatpush.msra.mxu0 %v3961
  %v3963 = vand.u32 %v3655, 4294901760
  %3964 = vmatpush.msra.mxu0 %v3963
  %v3965 = vand.u32 %v3654, 4294901760
  %3966 = vmatpush.msra.mxu0 %v3965
  %v3967 = vand.u32 %v3653, 4294901760
  %3968 = vmatpush.msra.mxu0 %v3967
  %v3969 = vand.u32 %v3664, 4294901760
  %3970 = vmatmul.f32.gmra.mxu0 %v3969
  %v3971 = vpop.f32.mrf.mxu0
  %v3972 = vadd.f32 %v3931, %v3971
  %v3973 = vand.u32 %v3667, 4294901760
  %3974 = vmatmul.f32.gmra.mxu0 %v3973
  %v3975 = vpop.f32.mrf.mxu0
  %v3976 = vadd.f32 %v3935, %v3975
  %v3977 = vand.u32 %v3670, 4294901760
  %3978 = vmatmul.f32.gmra.mxu0 %v3977
  %v3979 = vpop.f32.mrf.mxu0
  %v3980 = vadd.f32 %v3939, %v3979
  %v3981 = vand.u32 %v3673, 4294901760
  %3982 = vmatmul.f32.gmra.mxu0 %v3981
  %v3983 = vpop.f32.mrf.mxu0
  %v3984 = vadd.f32 %v3943, %v3983
  %v3985 = vand.u32 %v3676, 4294901760
  %3986 = vmatmul.f32.gmra.mxu0 %v3985
  %v3987 = vpop.f32.mrf.mxu0
  %v3988 = vadd.f32 %v3947, %v3987
  %3989 = vdwg.mxu0
  %v3990 = vadd.f32 %v3082, %v3972
  %v3991 = vadd.f32 %v3083, %v3976
  %v3992 = vadd.f32 %v3084, %v3980
  %v3993 = vadd.f32 %v3085, %v3984
  %v3994 = vadd.f32 %v3086, %v3988
  %v3995 = vmul.f32 %v3990, 0.5
  %v3996 = vmul.f32 %v3991, 0.5
  %v3997 = vmul.f32 %v3992, 0.5
  %v3998 = vmul.f32 %v3993, 0.5
  %v3999 = vmul.f32 %v3994, 0.5
  %v4000 = vtanh.pop %v3995
  %v4001 = vtanh.pop %v3996
  %v4002 = vtanh.pop %v3997
  %v4003 = vtanh.pop %v3998
  %v4004 = vtanh.pop %v3999
  %v4005 = vmul.f32 %v4000, 0.5
  %v4006 = vmul.f32 %v4001, 0.5
  %v4007 = vmul.f32 %v4002, 0.5
  %v4008 = vmul.f32 %v4003, 0.5
  %v4009 = vmul.f32 %v4004, 0.5
  %v4010 = vadd.f32 %v4005, 0.5
  %v4011 = vadd.f32 %v4006, 0.5
  %v4012 = vadd.f32 %v4007, 0.5
  %v4013 = vadd.f32 %v4008, 0.5
  %v4014 = vadd.f32 %v4009, 0.5
  %v4015 = vld [vmem:[%s9] sm:$0xff]
  %v4016 = vld [vmem:[%s9 + $0x8] sm:$0xff]
  %vm4017 = vcmask 326656
  %v4019 = vsel %vm4017, %v4015, 0
  %v4022 = vsel %vm4017, %v4016, 0
  %4024 = vmatpush.msra.mxu0 0.0
  %4025 = vmatpush.msra.mxu0 0.0
  %4026 = vmatpush.msra.mxu0 0.0
  %4027 = vmatpush.msra.mxu0 0.0
  %4028 = vmatpush.msra.mxu0 0.0
  %4029 = vmatpush.msra.mxu0 0.0
  %4030 = vmatpush.msra.mxu0 0.0
  %4031 = vmatpush.msra.mxu0 0.0
  %4032 = vmatpush.msra.mxu0 0.0
  %4033 = vmatpush.msra.mxu0 0.0
  %4034 = vmatpush.msra.mxu0 0.0
  %v4035 = vand.u32 %v4014, 4294901760
  %4036 = vmatpush.msra.mxu0 %v4035
  %v4037 = vand.u32 %v4013, 4294901760
  %4038 = vmatpush.msra.mxu0 %v4037
  %v4039 = vand.u32 %v4012, 4294901760
  %4040 = vmatpush.msra.mxu0 %v4039
  %v4041 = vand.u32 %v4011, 4294901760
  %4042 = vmatpush.msra.mxu0 %v4041
  %v4043 = vand.u32 %v4010, 4294901760
  %4044 = vmatpush.msra.mxu0 %v4043
  %v4045 = vand.u32 %v4019, 4294901760
  %v4046 = vsub.f32 %v4019, %v4045
  %v4047 = vand.u32 %v4046, 4294901760
  %v4048 = vsub.f32 %v4046, %v4047
  %v4049 = vand.u32 %v4048, 4294901760
  %4050 = vmatmul.f32.gmra.mxu0 %v4049
  %v4051 = vpop.f32.mrf.mxu0
  %v4052 = vadd.f32 0.0, %v4051
  %v4053 = vand.u32 %v4022, 4294901760
  %v4054 = vsub.f32 %v4022, %v4053
  %v4055 = vand.u32 %v4054, 4294901760
  %v4056 = vsub.f32 %v4054, %v4055
  %v4057 = vand.u32 %v4056, 4294901760
  %4058 = vmatmul.f32.gmra.mxu0 %v4057
  %v4059 = vpop.f32.mrf.mxu0
  %v4060 = vadd.f32 0.0, %v4059
  %4061 = vdwg.mxu0
  %4062 = vmatpush.msra.mxu0 0.0
  %4063 = vmatpush.msra.mxu0 0.0
  %4064 = vmatpush.msra.mxu0 0.0
  %4065 = vmatpush.msra.mxu0 0.0
  %4066 = vmatpush.msra.mxu0 0.0
  %4067 = vmatpush.msra.mxu0 0.0
  %4068 = vmatpush.msra.mxu0 0.0
  %4069 = vmatpush.msra.mxu0 0.0
  %4070 = vmatpush.msra.mxu0 0.0
  %4071 = vmatpush.msra.mxu0 0.0
  %4072 = vmatpush.msra.mxu0 0.0
  %v4073 = vand.u32 %v4014, 4294901760
  %v4074 = vsub.f32 %v4014, %v4073
  %v4075 = vand.u32 %v4074, 4294901760
  %v4076 = vsub.f32 %v4074, %v4075
  %v4077 = vand.u32 %v4076, 4294901760
  %4078 = vmatpush.msra.mxu0 %v4077
  %v4079 = vand.u32 %v4013, 4294901760
  %v4080 = vsub.f32 %v4013, %v4079
  %v4081 = vand.u32 %v4080, 4294901760
  %v4082 = vsub.f32 %v4080, %v4081
  %v4083 = vand.u32 %v4082, 4294901760
  %4084 = vmatpush.msra.mxu0 %v4083
  %v4085 = vand.u32 %v4012, 4294901760
  %v4086 = vsub.f32 %v4012, %v4085
  %v4087 = vand.u32 %v4086, 4294901760
  %v4088 = vsub.f32 %v4086, %v4087
  %v4089 = vand.u32 %v4088, 4294901760
  %4090 = vmatpush.msra.mxu0 %v4089
  %v4091 = vand.u32 %v4011, 4294901760
  %v4092 = vsub.f32 %v4011, %v4091
  %v4093 = vand.u32 %v4092, 4294901760
  %v4094 = vsub.f32 %v4092, %v4093
  %v4095 = vand.u32 %v4094, 4294901760
  %4096 = vmatpush.msra.mxu0 %v4095
  %v4097 = vand.u32 %v4010, 4294901760
  %v4098 = vsub.f32 %v4010, %v4097
  %v4099 = vand.u32 %v4098, 4294901760
  %v4100 = vsub.f32 %v4098, %v4099
  %v4101 = vand.u32 %v4100, 4294901760
  %4102 = vmatpush.msra.mxu0 %v4101
  %v4103 = vand.u32 %v4019, 4294901760
  %4104 = vmatmul.f32.gmra.mxu0 %v4103
  %v4105 = vpop.f32.mrf.mxu0
  %v4106 = vadd.f32 %v4052, %v4105
  %v4107 = vand.u32 %v4022, 4294901760
  %4108 = vmatmul.f32.gmra.mxu0 %v4107
  %v4109 = vpop.f32.mrf.mxu0
  %v4110 = vadd.f32 %v4060, %v4109
  %4111 = vdwg.mxu0
  %4112 = vmatpush.msra.mxu0 0.0
  %4113 = vmatpush.msra.mxu0 0.0
  %4114 = vmatpush.msra.mxu0 0.0
  %4115 = vmatpush.msra.mxu0 0.0
  %4116 = vmatpush.msra.mxu0 0.0
  %4117 = vmatpush.msra.mxu0 0.0
  %4118 = vmatpush.msra.mxu0 0.0
  %4119 = vmatpush.msra.mxu0 0.0
  %4120 = vmatpush.msra.mxu0 0.0
  %4121 = vmatpush.msra.mxu0 0.0
  %4122 = vmatpush.msra.mxu0 0.0
  %v4123 = vand.u32 %v4014, 4294901760
  %v4124 = vsub.f32 %v4014, %v4123
  %4125 = vmatpush.msra.mxu0 %v4124
  %v4126 = vand.u32 %v4013, 4294901760
  %v4127 = vsub.f32 %v4013, %v4126
  %4128 = vmatpush.msra.mxu0 %v4127
  %v4129 = vand.u32 %v4012, 4294901760
  %v4130 = vsub.f32 %v4012, %v4129
  %4131 = vmatpush.msra.mxu0 %v4130
  %v4132 = vand.u32 %v4011, 4294901760
  %v4133 = vsub.f32 %v4011, %v4132
  %4134 = vmatpush.msra.mxu0 %v4133
  %v4135 = vand.u32 %v4010, 4294901760
  %v4136 = vsub.f32 %v4010, %v4135
  %4137 = vmatpush.msra.mxu0 %v4136
  %v4138 = vand.u32 %v4019, 4294901760
  %v4139 = vsub.f32 %v4019, %v4138
  %4140 = vmatmul.f32.gmra.mxu0 %v4139
  %v4141 = vpop.f32.mrf.mxu0
  %v4142 = vadd.f32 %v4106, %v4141
  %v4143 = vand.u32 %v4022, 4294901760
  %v4144 = vsub.f32 %v4022, %v4143
  %4145 = vmatmul.f32.gmra.mxu0 %v4144
  %v4146 = vpop.f32.mrf.mxu0
  %v4147 = vadd.f32 %v4110, %v4146
  %4148 = vdwg.mxu0
  %4149 = vmatpush.msra.mxu0 0.0
  %4150 = vmatpush.msra.mxu0 0.0
  %4151 = vmatpush.msra.mxu0 0.0
  %4152 = vmatpush.msra.mxu0 0.0
  %4153 = vmatpush.msra.mxu0 0.0
  %4154 = vmatpush.msra.mxu0 0.0
  %4155 = vmatpush.msra.mxu0 0.0
  %4156 = vmatpush.msra.mxu0 0.0
  %4157 = vmatpush.msra.mxu0 0.0
  %4158 = vmatpush.msra.mxu0 0.0
  %4159 = vmatpush.msra.mxu0 0.0
  %v4160 = vand.u32 %v4014, 4294901760
  %4161 = vmatpush.msra.mxu0 %v4160
  %v4162 = vand.u32 %v4013, 4294901760
  %4163 = vmatpush.msra.mxu0 %v4162
  %v4164 = vand.u32 %v4012, 4294901760
  %4165 = vmatpush.msra.mxu0 %v4164
  %v4166 = vand.u32 %v4011, 4294901760
  %4167 = vmatpush.msra.mxu0 %v4166
  %v4168 = vand.u32 %v4010, 4294901760
  %4169 = vmatpush.msra.mxu0 %v4168
  %v4170 = vand.u32 %v4019, 4294901760
  %v4171 = vsub.f32 %v4019, %v4170
  %v4172 = vand.u32 %v4171, 4294901760
  %4173 = vmatmul.f32.gmra.mxu0 %v4172
  %v4174 = vpop.f32.mrf.mxu0
  %v4175 = vadd.f32 %v4142, %v4174
  %v4176 = vand.u32 %v4022, 4294901760
  %v4177 = vsub.f32 %v4022, %v4176
  %v4178 = vand.u32 %v4177, 4294901760
  %4179 = vmatmul.f32.gmra.mxu0 %v4178
  %v4180 = vpop.f32.mrf.mxu0
  %v4181 = vadd.f32 %v4147, %v4180
  %4182 = vdwg.mxu0
  %4183 = vmatpush.msra.mxu0 0.0
  %4184 = vmatpush.msra.mxu0 0.0
  %4185 = vmatpush.msra.mxu0 0.0
  %4186 = vmatpush.msra.mxu0 0.0
  %4187 = vmatpush.msra.mxu0 0.0
  %4188 = vmatpush.msra.mxu0 0.0
  %4189 = vmatpush.msra.mxu0 0.0
  %4190 = vmatpush.msra.mxu0 0.0
  %4191 = vmatpush.msra.mxu0 0.0
  %4192 = vmatpush.msra.mxu0 0.0
  %4193 = vmatpush.msra.mxu0 0.0
  %v4194 = vand.u32 %v4014, 4294901760
  %v4195 = vsub.f32 %v4014, %v4194
  %v4196 = vand.u32 %v4195, 4294901760
  %4197 = vmatpush.msra.mxu0 %v4196
  %v4198 = vand.u32 %v4013, 4294901760
  %v4199 = vsub.f32 %v4013, %v4198
  %v4200 = vand.u32 %v4199, 4294901760
  %4201 = vmatpush.msra.mxu0 %v4200
  %v4202 = vand.u32 %v4012, 4294901760
  %v4203 = vsub.f32 %v4012, %v4202
  %v4204 = vand.u32 %v4203, 4294901760
  %4205 = vmatpush.msra.mxu0 %v4204
  %v4206 = vand.u32 %v4011, 4294901760
  %v4207 = vsub.f32 %v4011, %v4206
  %v4208 = vand.u32 %v4207, 4294901760
  %4209 = vmatpush.msra.mxu0 %v4208
  %v4210 = vand.u32 %v4010, 4294901760
  %v4211 = vsub.f32 %v4010, %v4210
  %v4212 = vand.u32 %v4211, 4294901760
  %4213 = vmatpush.msra.mxu0 %v4212
  %v4214 = vand.u32 %v4019, 4294901760
  %4215 = vmatmul.f32.gmra.mxu0 %v4214
  %v4216 = vpop.f32.mrf.mxu0
  %v4217 = vadd.f32 %v4175, %v4216
  %v4218 = vand.u32 %v4022, 4294901760
  %4219 = vmatmul.f32.gmra.mxu0 %v4218
  %v4220 = vpop.f32.mrf.mxu0
  %v4221 = vadd.f32 %v4181, %v4220
  %4222 = vdwg.mxu0
  %4223 = vmatpush.msra.mxu0 0.0
  %4224 = vmatpush.msra.mxu0 0.0
  %4225 = vmatpush.msra.mxu0 0.0
  %4226 = vmatpush.msra.mxu0 0.0
  %4227 = vmatpush.msra.mxu0 0.0
  %4228 = vmatpush.msra.mxu0 0.0
  %4229 = vmatpush.msra.mxu0 0.0
  %4230 = vmatpush.msra.mxu0 0.0
  %4231 = vmatpush.msra.mxu0 0.0
  %4232 = vmatpush.msra.mxu0 0.0
  %4233 = vmatpush.msra.mxu0 0.0
  %v4234 = vand.u32 %v4014, 4294901760
  %4235 = vmatpush.msra.mxu0 %v4234
  %v4236 = vand.u32 %v4013, 4294901760
  %4237 = vmatpush.msra.mxu0 %v4236
  %v4238 = vand.u32 %v4012, 4294901760
  %4239 = vmatpush.msra.mxu0 %v4238
  %v4240 = vand.u32 %v4011, 4294901760
  %4241 = vmatpush.msra.mxu0 %v4240
  %v4242 = vand.u32 %v4010, 4294901760
  %4243 = vmatpush.msra.mxu0 %v4242
  %v4244 = vand.u32 %v4019, 4294901760
  %4245 = vmatmul.f32.gmra.mxu0 %v4244
  %v4246 = vpop.f32.mrf.mxu0
  %v4247 = vadd.f32 %v4217, %v4246
  %v4248 = vand.u32 %v4022, 4294901760
  %4249 = vmatmul.f32.gmra.mxu0 %v4248
  %v4250 = vpop.f32.mrf.mxu0
  %v4251 = vadd.f32 %v4221, %v4250
  %4252 = vdwg.mxu0
  %v4253 = vld [vmem:[%s10] sm:$0xff]
  %v4254 = vld [vmem:[%s10 + $0x8] sm:$0xff]
  %v4256 = vsel %vm4017, %v4253, 0
  %v4259 = vsel %vm4017, %v4254, 0
  %4261 = vmatpush.msra.mxu0 0.0
  %4262 = vmatpush.msra.mxu0 0.0
  %4263 = vmatpush.msra.mxu0 0.0
  %4264 = vmatpush.msra.mxu0 0.0
  %4265 = vmatpush.msra.mxu0 0.0
  %4266 = vmatpush.msra.mxu0 0.0
  %4267 = vmatpush.msra.mxu0 0.0
  %4268 = vmatpush.msra.mxu0 0.0
  %4269 = vmatpush.msra.mxu0 0.0
  %4270 = vmatpush.msra.mxu0 0.0
  %4271 = vmatpush.msra.mxu0 0.0
  %v4272 = vand.u32 %v4014, 4294901760
  %4273 = vmatpush.msra.mxu0 %v4272
  %v4274 = vand.u32 %v4013, 4294901760
  %4275 = vmatpush.msra.mxu0 %v4274
  %v4276 = vand.u32 %v4012, 4294901760
  %4277 = vmatpush.msra.mxu0 %v4276
  %v4278 = vand.u32 %v4011, 4294901760
  %4279 = vmatpush.msra.mxu0 %v4278
  %v4280 = vand.u32 %v4010, 4294901760
  %4281 = vmatpush.msra.mxu0 %v4280
  %v4282 = vand.u32 %v4256, 4294901760
  %v4283 = vsub.f32 %v4256, %v4282
  %v4284 = vand.u32 %v4283, 4294901760
  %v4285 = vsub.f32 %v4283, %v4284
  %v4286 = vand.u32 %v4285, 4294901760
  %4287 = vmatmul.f32.gmra.mxu0 %v4286
  %v4288 = vpop.f32.mrf.mxu0
  %v4289 = vadd.f32 0.0, %v4288
  %v4290 = vand.u32 %v4259, 4294901760
  %v4291 = vsub.f32 %v4259, %v4290
  %v4292 = vand.u32 %v4291, 4294901760
  %v4293 = vsub.f32 %v4291, %v4292
  %v4294 = vand.u32 %v4293, 4294901760
  %4295 = vmatmul.f32.gmra.mxu0 %v4294
  %v4296 = vpop.f32.mrf.mxu0
  %v4297 = vadd.f32 0.0, %v4296
  %4298 = vdwg.mxu0
  %4299 = vmatpush.msra.mxu0 0.0
  %4300 = vmatpush.msra.mxu0 0.0
  %4301 = vmatpush.msra.mxu0 0.0
  %4302 = vmatpush.msra.mxu0 0.0
  %4303 = vmatpush.msra.mxu0 0.0
  %4304 = vmatpush.msra.mxu0 0.0
  %4305 = vmatpush.msra.mxu0 0.0
  %4306 = vmatpush.msra.mxu0 0.0
  %4307 = vmatpush.msra.mxu0 0.0
  %4308 = vmatpush.msra.mxu0 0.0
  %4309 = vmatpush.msra.mxu0 0.0
  %v4310 = vand.u32 %v4014, 4294901760
  %v4311 = vsub.f32 %v4014, %v4310
  %v4312 = vand.u32 %v4311, 4294901760
  %v4313 = vsub.f32 %v4311, %v4312
  %v4314 = vand.u32 %v4313, 4294901760
  %4315 = vmatpush.msra.mxu0 %v4314
  %v4316 = vand.u32 %v4013, 4294901760
  %v4317 = vsub.f32 %v4013, %v4316
  %v4318 = vand.u32 %v4317, 4294901760
  %v4319 = vsub.f32 %v4317, %v4318
  %v4320 = vand.u32 %v4319, 4294901760
  %4321 = vmatpush.msra.mxu0 %v4320
  %v4322 = vand.u32 %v4012, 4294901760
  %v4323 = vsub.f32 %v4012, %v4322
  %v4324 = vand.u32 %v4323, 4294901760
  %v4325 = vsub.f32 %v4323, %v4324
  %v4326 = vand.u32 %v4325, 4294901760
  %4327 = vmatpush.msra.mxu0 %v4326
  %v4328 = vand.u32 %v4011, 4294901760
  %v4329 = vsub.f32 %v4011, %v4328
  %v4330 = vand.u32 %v4329, 4294901760
  %v4331 = vsub.f32 %v4329, %v4330
  %v4332 = vand.u32 %v4331, 4294901760
  %4333 = vmatpush.msra.mxu0 %v4332
  %v4334 = vand.u32 %v4010, 4294901760
  %v4335 = vsub.f32 %v4010, %v4334
  %v4336 = vand.u32 %v4335, 4294901760
  %v4337 = vsub.f32 %v4335, %v4336
  %v4338 = vand.u32 %v4337, 4294901760
  %4339 = vmatpush.msra.mxu0 %v4338
  %v4340 = vand.u32 %v4256, 4294901760
  %4341 = vmatmul.f32.gmra.mxu0 %v4340
  %v4342 = vpop.f32.mrf.mxu0
  %v4343 = vadd.f32 %v4289, %v4342
  %v4344 = vand.u32 %v4259, 4294901760
  %4345 = vmatmul.f32.gmra.mxu0 %v4344
  %v4346 = vpop.f32.mrf.mxu0
  %v4347 = vadd.f32 %v4297, %v4346
  %4348 = vdwg.mxu0
  %4349 = vmatpush.msra.mxu0 0.0
  %4350 = vmatpush.msra.mxu0 0.0
  %4351 = vmatpush.msra.mxu0 0.0
  %4352 = vmatpush.msra.mxu0 0.0
  %4353 = vmatpush.msra.mxu0 0.0
  %4354 = vmatpush.msra.mxu0 0.0
  %4355 = vmatpush.msra.mxu0 0.0
  %4356 = vmatpush.msra.mxu0 0.0
  %4357 = vmatpush.msra.mxu0 0.0
  %4358 = vmatpush.msra.mxu0 0.0
  %4359 = vmatpush.msra.mxu0 0.0
  %v4360 = vand.u32 %v4014, 4294901760
  %v4361 = vsub.f32 %v4014, %v4360
  %4362 = vmatpush.msra.mxu0 %v4361
  %v4363 = vand.u32 %v4013, 4294901760
  %v4364 = vsub.f32 %v4013, %v4363
  %4365 = vmatpush.msra.mxu0 %v4364
  %v4366 = vand.u32 %v4012, 4294901760
  %v4367 = vsub.f32 %v4012, %v4366
  %4368 = vmatpush.msra.mxu0 %v4367
  %v4369 = vand.u32 %v4011, 4294901760
  %v4370 = vsub.f32 %v4011, %v4369
  %4371 = vmatpush.msra.mxu0 %v4370
  %v4372 = vand.u32 %v4010, 4294901760
  %v4373 = vsub.f32 %v4010, %v4372
  %4374 = vmatpush.msra.mxu0 %v4373
  %v4375 = vand.u32 %v4256, 4294901760
  %v4376 = vsub.f32 %v4256, %v4375
  %4377 = vmatmul.f32.gmra.mxu0 %v4376
  %v4378 = vpop.f32.mrf.mxu0
  %v4379 = vadd.f32 %v4343, %v4378
  %v4380 = vand.u32 %v4259, 4294901760
  %v4381 = vsub.f32 %v4259, %v4380
  %4382 = vmatmul.f32.gmra.mxu0 %v4381
  %v4383 = vpop.f32.mrf.mxu0
  %v4384 = vadd.f32 %v4347, %v4383
  %4385 = vdwg.mxu0
  %4386 = vmatpush.msra.mxu0 0.0
  %4387 = vmatpush.msra.mxu0 0.0
  %4388 = vmatpush.msra.mxu0 0.0
  %4389 = vmatpush.msra.mxu0 0.0
  %4390 = vmatpush.msra.mxu0 0.0
  %4391 = vmatpush.msra.mxu0 0.0
  %4392 = vmatpush.msra.mxu0 0.0
  %4393 = vmatpush.msra.mxu0 0.0
  %4394 = vmatpush.msra.mxu0 0.0
  %4395 = vmatpush.msra.mxu0 0.0
  %4396 = vmatpush.msra.mxu0 0.0
  %v4397 = vand.u32 %v4014, 4294901760
  %4398 = vmatpush.msra.mxu0 %v4397
  %v4399 = vand.u32 %v4013, 4294901760
  %4400 = vmatpush.msra.mxu0 %v4399
  %v4401 = vand.u32 %v4012, 4294901760
  %4402 = vmatpush.msra.mxu0 %v4401
  %v4403 = vand.u32 %v4011, 4294901760
  %4404 = vmatpush.msra.mxu0 %v4403
  %v4405 = vand.u32 %v4010, 4294901760
  %4406 = vmatpush.msra.mxu0 %v4405
  %v4407 = vand.u32 %v4256, 4294901760
  %v4408 = vsub.f32 %v4256, %v4407
  %v4409 = vand.u32 %v4408, 4294901760
  %4410 = vmatmul.f32.gmra.mxu0 %v4409
  %v4411 = vpop.f32.mrf.mxu0
  %v4412 = vadd.f32 %v4379, %v4411
  %v4413 = vand.u32 %v4259, 4294901760
  %v4414 = vsub.f32 %v4259, %v4413
  %v4415 = vand.u32 %v4414, 4294901760
  %4416 = vmatmul.f32.gmra.mxu0 %v4415
  %v4417 = vpop.f32.mrf.mxu0
  %v4418 = vadd.f32 %v4384, %v4417
  %4419 = vdwg.mxu0
  %4420 = vmatpush.msra.mxu0 0.0
  %4421 = vmatpush.msra.mxu0 0.0
  %4422 = vmatpush.msra.mxu0 0.0
  %4423 = vmatpush.msra.mxu0 0.0
  %4424 = vmatpush.msra.mxu0 0.0
  %4425 = vmatpush.msra.mxu0 0.0
  %4426 = vmatpush.msra.mxu0 0.0
  %4427 = vmatpush.msra.mxu0 0.0
  %4428 = vmatpush.msra.mxu0 0.0
  %4429 = vmatpush.msra.mxu0 0.0
  %4430 = vmatpush.msra.mxu0 0.0
  %v4431 = vand.u32 %v4014, 4294901760
  %v4432 = vsub.f32 %v4014, %v4431
  %v4433 = vand.u32 %v4432, 4294901760
  %4434 = vmatpush.msra.mxu0 %v4433
  %v4435 = vand.u32 %v4013, 4294901760
  %v4436 = vsub.f32 %v4013, %v4435
  %v4437 = vand.u32 %v4436, 4294901760
  %4438 = vmatpush.msra.mxu0 %v4437
  %v4439 = vand.u32 %v4012, 4294901760
  %v4440 = vsub.f32 %v4012, %v4439
  %v4441 = vand.u32 %v4440, 4294901760
  %4442 = vmatpush.msra.mxu0 %v4441
  %v4443 = vand.u32 %v4011, 4294901760
  %v4444 = vsub.f32 %v4011, %v4443
  %v4445 = vand.u32 %v4444, 4294901760
  %4446 = vmatpush.msra.mxu0 %v4445
  %v4447 = vand.u32 %v4010, 4294901760
  %v4448 = vsub.f32 %v4010, %v4447
  %v4449 = vand.u32 %v4448, 4294901760
  %4450 = vmatpush.msra.mxu0 %v4449
  %v4451 = vand.u32 %v4256, 4294901760
  %4452 = vmatmul.f32.gmra.mxu0 %v4451
  %v4453 = vpop.f32.mrf.mxu0
  %v4454 = vadd.f32 %v4412, %v4453
  %v4455 = vand.u32 %v4259, 4294901760
  %4456 = vmatmul.f32.gmra.mxu0 %v4455
  %v4457 = vpop.f32.mrf.mxu0
  %v4458 = vadd.f32 %v4418, %v4457
  %4459 = vdwg.mxu0
  %4460 = vmatpush.msra.mxu0 0.0
  %4461 = vmatpush.msra.mxu0 0.0
  %4462 = vmatpush.msra.mxu0 0.0
  %4463 = vmatpush.msra.mxu0 0.0
  %4464 = vmatpush.msra.mxu0 0.0
  %4465 = vmatpush.msra.mxu0 0.0
  %4466 = vmatpush.msra.mxu0 0.0
  %4467 = vmatpush.msra.mxu0 0.0
  %4468 = vmatpush.msra.mxu0 0.0
  %4469 = vmatpush.msra.mxu0 0.0
  %4470 = vmatpush.msra.mxu0 0.0
  %v4471 = vand.u32 %v4014, 4294901760
  %4472 = vmatpush.msra.mxu0 %v4471
  %v4473 = vand.u32 %v4013, 4294901760
  %4474 = vmatpush.msra.mxu0 %v4473
  %v4475 = vand.u32 %v4012, 4294901760
  %4476 = vmatpush.msra.mxu0 %v4475
  %v4477 = vand.u32 %v4011, 4294901760
  %4478 = vmatpush.msra.mxu0 %v4477
  %v4479 = vand.u32 %v4010, 4294901760
  %4480 = vmatpush.msra.mxu0 %v4479
  %v4481 = vand.u32 %v4256, 4294901760
  %4482 = vmatmul.f32.gmra.mxu0 %v4481
  %v4483 = vpop.f32.mrf.mxu0
  %v4484 = vadd.f32 %v4454, %v4483
  %v4485 = vand.u32 %v4259, 4294901760
  %4486 = vmatmul.f32.gmra.mxu0 %v4485
  %v4487 = vpop.f32.mrf.mxu0
  %v4488 = vadd.f32 %v4458, %v4487
  %4489 = vdwg.mxu0
  %v4490 = vmax.f32 %v4247, %v4484
  %v4491 = vmax.f32 %v4251, %v4488
  %v4492 = vld [vmem:[%s14] sm:$0xff]
  %v4493 = vld [vmem:[%s14 + $0x8] sm:$0xff]
  %v4494 = vld [vmem:[%s14 + $0x10] sm:$0xff]
  %v4495 = vld [vmem:[%s14 + $0x18] sm:$0xff]
  %v4496 = vld [vmem:[%s11] sm:$0xff]
  %v4497 = vld [vmem:[%s11 + $0x8] sm:$0x3f]
  %vm4498 = vcmask 113664
  %v4500 = vsel %vm4498, %v4490, 0
  %v4503 = vsel %vm4498, %v4491, 0
  %vm4505 = vcmask 1045504
  %v4507 = vsel %vm4505, %v4497, 0
  %4509 = vmatpush.msra.mxu0 0.0
  %4510 = vmatpush.msra.mxu0 0.0
  %4511 = vmatpush.msra.mxu0 0.0
  %4512 = vmatpush.msra.mxu0 0.0
  %4513 = vmatpush.msra.mxu0 0.0
  %4514 = vmatpush.msra.mxu0 0.0
  %4515 = vmatpush.msra.mxu0 0.0
  %4516 = vmatpush.msra.mxu0 0.0
  %4517 = vmatpush.msra.mxu0 0.0
  %4518 = vmatpush.msra.mxu0 0.0
  %4519 = vmatpush.msra.mxu0 0.0
  %4520 = vmatpush.msra.mxu0 0.0
  %4521 = vmatpush.msra.mxu0 0.0
  %4522 = vmatpush.msra.mxu0 0.0
  %v4523 = vand.u32 %v4507, 4294901760
  %4524 = vmatpush.msra.mxu0 %v4523
  %v4525 = vand.u32 %v4496, 4294901760
  %4526 = vmatpush.msra.mxu0 %v4525
  %v4527 = vand.u32 %v4500, 4294901760
  %v4528 = vsub.f32 %v4500, %v4527
  %v4529 = vand.u32 %v4528, 4294901760
  %v4530 = vsub.f32 %v4528, %v4529
  %v4531 = vand.u32 %v4530, 4294901760
  %4532 = vmatmul.f32.gmra.mxu0 %v4531
  %v4533 = vpop.f32.mrf.mxu0
  %v4534 = vadd.f32 0.0, %v4533
  %v4535 = vand.u32 %v4503, 4294901760
  %v4536 = vsub.f32 %v4503, %v4535
  %v4537 = vand.u32 %v4536, 4294901760
  %v4538 = vsub.f32 %v4536, %v4537
  %v4539 = vand.u32 %v4538, 4294901760
  %4540 = vmatmul.f32.gmra.mxu0 %v4539
  %v4541 = vpop.f32.mrf.mxu0
  %v4542 = vadd.f32 0.0, %v4541
  %4543 = vdwg.mxu0
  %4544 = vmatpush.msra.mxu0 0.0
  %4545 = vmatpush.msra.mxu0 0.0
  %4546 = vmatpush.msra.mxu0 0.0
  %4547 = vmatpush.msra.mxu0 0.0
  %4548 = vmatpush.msra.mxu0 0.0
  %4549 = vmatpush.msra.mxu0 0.0
  %4550 = vmatpush.msra.mxu0 0.0
  %4551 = vmatpush.msra.mxu0 0.0
  %4552 = vmatpush.msra.mxu0 0.0
  %4553 = vmatpush.msra.mxu0 0.0
  %4554 = vmatpush.msra.mxu0 0.0
  %4555 = vmatpush.msra.mxu0 0.0
  %4556 = vmatpush.msra.mxu0 0.0
  %4557 = vmatpush.msra.mxu0 0.0
  %v4558 = vand.u32 %v4507, 4294901760
  %v4559 = vsub.f32 %v4507, %v4558
  %v4560 = vand.u32 %v4559, 4294901760
  %v4561 = vsub.f32 %v4559, %v4560
  %v4562 = vand.u32 %v4561, 4294901760
  %4563 = vmatpush.msra.mxu0 %v4562
  %v4564 = vand.u32 %v4496, 4294901760
  %v4565 = vsub.f32 %v4496, %v4564
  %v4566 = vand.u32 %v4565, 4294901760
  %v4567 = vsub.f32 %v4565, %v4566
  %v4568 = vand.u32 %v4567, 4294901760
  %4569 = vmatpush.msra.mxu0 %v4568
  %v4570 = vand.u32 %v4500, 4294901760
  %4571 = vmatmul.f32.gmra.mxu0 %v4570
  %v4572 = vpop.f32.mrf.mxu0
  %v4573 = vadd.f32 %v4534, %v4572
  %v4574 = vand.u32 %v4503, 4294901760
  %4575 = vmatmul.f32.gmra.mxu0 %v4574
  %v4576 = vpop.f32.mrf.mxu0
  %v4577 = vadd.f32 %v4542, %v4576
  %4578 = vdwg.mxu0
  %4579 = vmatpush.msra.mxu0 0.0
  %4580 = vmatpush.msra.mxu0 0.0
  %4581 = vmatpush.msra.mxu0 0.0
  %4582 = vmatpush.msra.mxu0 0.0
  %4583 = vmatpush.msra.mxu0 0.0
  %4584 = vmatpush.msra.mxu0 0.0
  %4585 = vmatpush.msra.mxu0 0.0
  %4586 = vmatpush.msra.mxu0 0.0
  %4587 = vmatpush.msra.mxu0 0.0
  %4588 = vmatpush.msra.mxu0 0.0
  %4589 = vmatpush.msra.mxu0 0.0
  %4590 = vmatpush.msra.mxu0 0.0
  %4591 = vmatpush.msra.mxu0 0.0
  %4592 = vmatpush.msra.mxu0 0.0
  %v4593 = vand.u32 %v4507, 4294901760
  %v4594 = vsub.f32 %v4507, %v4593
  %4595 = vmatpush.msra.mxu0 %v4594
  %v4596 = vand.u32 %v4496, 4294901760
  %v4597 = vsub.f32 %v4496, %v4596
  %4598 = vmatpush.msra.mxu0 %v4597
  %v4599 = vand.u32 %v4500, 4294901760
  %v4600 = vsub.f32 %v4500, %v4599
  %4601 = vmatmul.f32.gmra.mxu0 %v4600
  %v4602 = vpop.f32.mrf.mxu0
  %v4603 = vadd.f32 %v4573, %v4602
  %v4604 = vand.u32 %v4503, 4294901760
  %v4605 = vsub.f32 %v4503, %v4604
  %4606 = vmatmul.f32.gmra.mxu0 %v4605
  %v4607 = vpop.f32.mrf.mxu0
  %v4608 = vadd.f32 %v4577, %v4607
  %4609 = vdwg.mxu0
  %4610 = vmatpush.msra.mxu0 0.0
  %4611 = vmatpush.msra.mxu0 0.0
  %4612 = vmatpush.msra.mxu0 0.0
  %4613 = vmatpush.msra.mxu0 0.0
  %4614 = vmatpush.msra.mxu0 0.0
  %4615 = vmatpush.msra.mxu0 0.0
  %4616 = vmatpush.msra.mxu0 0.0
  %4617 = vmatpush.msra.mxu0 0.0
  %4618 = vmatpush.msra.mxu0 0.0
  %4619 = vmatpush.msra.mxu0 0.0
  %4620 = vmatpush.msra.mxu0 0.0
  %4621 = vmatpush.msra.mxu0 0.0
  %4622 = vmatpush.msra.mxu0 0.0
  %4623 = vmatpush.msra.mxu0 0.0
  %v4624 = vand.u32 %v4507, 4294901760
  %4625 = vmatpush.msra.mxu0 %v4624
  %v4626 = vand.u32 %v4496, 4294901760
  %4627 = vmatpush.msra.mxu0 %v4626
  %v4628 = vand.u32 %v4500, 4294901760
  %v4629 = vsub.f32 %v4500, %v4628
  %v4630 = vand.u32 %v4629, 4294901760
  %4631 = vmatmul.f32.gmra.mxu0 %v4630
  %v4632 = vpop.f32.mrf.mxu0
  %v4633 = vadd.f32 %v4603, %v4632
  %v4634 = vand.u32 %v4503, 4294901760
  %v4635 = vsub.f32 %v4503, %v4634
  %v4636 = vand.u32 %v4635, 4294901760
  %4637 = vmatmul.f32.gmra.mxu0 %v4636
  %v4638 = vpop.f32.mrf.mxu0
  %v4639 = vadd.f32 %v4608, %v4638
  %4640 = vdwg.mxu0
  %4641 = vmatpush.msra.mxu0 0.0
  %4642 = vmatpush.msra.mxu0 0.0
  %4643 = vmatpush.msra.mxu0 0.0
  %4644 = vmatpush.msra.mxu0 0.0
  %4645 = vmatpush.msra.mxu0 0.0
  %4646 = vmatpush.msra.mxu0 0.0
  %4647 = vmatpush.msra.mxu0 0.0
  %4648 = vmatpush.msra.mxu0 0.0
  %4649 = vmatpush.msra.mxu0 0.0
  %4650 = vmatpush.msra.mxu0 0.0
  %4651 = vmatpush.msra.mxu0 0.0
  %4652 = vmatpush.msra.mxu0 0.0
  %4653 = vmatpush.msra.mxu0 0.0
  %4654 = vmatpush.msra.mxu0 0.0
  %v4655 = vand.u32 %v4507, 4294901760
  %v4656 = vsub.f32 %v4507, %v4655
  %v4657 = vand.u32 %v4656, 4294901760
  %4658 = vmatpush.msra.mxu0 %v4657
  %v4659 = vand.u32 %v4496, 4294901760
  %v4660 = vsub.f32 %v4496, %v4659
  %v4661 = vand.u32 %v4660, 4294901760
  %4662 = vmatpush.msra.mxu0 %v4661
  %v4663 = vand.u32 %v4500, 4294901760
  %4664 = vmatmul.f32.gmra.mxu0 %v4663
  %v4665 = vpop.f32.mrf.mxu0
  %v4666 = vadd.f32 %v4633, %v4665
  %v4667 = vand.u32 %v4503, 4294901760
  %4668 = vmatmul.f32.gmra.mxu0 %v4667
  %v4669 = vpop.f32.mrf.mxu0
  %v4670 = vadd.f32 %v4639, %v4669
  %4671 = vdwg.mxu0
  %4672 = vmatpush.msra.mxu0 0.0
  %4673 = vmatpush.msra.mxu0 0.0
  %4674 = vmatpush.msra.mxu0 0.0
  %4675 = vmatpush.msra.mxu0 0.0
  %4676 = vmatpush.msra.mxu0 0.0
  %4677 = vmatpush.msra.mxu0 0.0
  %4678 = vmatpush.msra.mxu0 0.0
  %4679 = vmatpush.msra.mxu0 0.0
  %4680 = vmatpush.msra.mxu0 0.0
  %4681 = vmatpush.msra.mxu0 0.0
  %4682 = vmatpush.msra.mxu0 0.0
  %4683 = vmatpush.msra.mxu0 0.0
  %4684 = vmatpush.msra.mxu0 0.0
  %4685 = vmatpush.msra.mxu0 0.0
  %v4686 = vand.u32 %v4507, 4294901760
  %4687 = vmatpush.msra.mxu0 %v4686
  %v4688 = vand.u32 %v4496, 4294901760
  %4689 = vmatpush.msra.mxu0 %v4688
  %v4690 = vand.u32 %v4500, 4294901760
  %4691 = vmatmul.f32.gmra.mxu0 %v4690
  %v4692 = vpop.f32.mrf.mxu0
  %v4693 = vadd.f32 %v4666, %v4692
  %v4694 = vand.u32 %v4503, 4294901760
  %4695 = vmatmul.f32.gmra.mxu0 %v4694
  %v4696 = vpop.f32.mrf.mxu0
  %v4697 = vadd.f32 %v4670, %v4696
  %4698 = vdwg.mxu0
  %v4699 = vld [vmem:[%s12] sm:$0xff]
  %v4700 = vld [vmem:[%s12 + $0x8] sm:$0x3f]
  %v4702 = vsel %vm4505, %v4700, 0
  %4704 = vmatpush.msra.mxu0 0.0
  %4705 = vmatpush.msra.mxu0 0.0
  %4706 = vmatpush.msra.mxu0 0.0
  %4707 = vmatpush.msra.mxu0 0.0
  %4708 = vmatpush.msra.mxu0 0.0
  %4709 = vmatpush.msra.mxu0 0.0
  %4710 = vmatpush.msra.mxu0 0.0
  %4711 = vmatpush.msra.mxu0 0.0
  %4712 = vmatpush.msra.mxu0 0.0
  %4713 = vmatpush.msra.mxu0 0.0
  %4714 = vmatpush.msra.mxu0 0.0
  %4715 = vmatpush.msra.mxu0 0.0
  %4716 = vmatpush.msra.mxu0 0.0
  %4717 = vmatpush.msra.mxu0 0.0
  %v4718 = vand.u32 %v4702, 4294901760
  %4719 = vmatpush.msra.mxu0 %v4718
  %v4720 = vand.u32 %v4699, 4294901760
  %4721 = vmatpush.msra.mxu0 %v4720
  %v4722 = vand.u32 %v4500, 4294901760
  %v4723 = vsub.f32 %v4500, %v4722
  %v4724 = vand.u32 %v4723, 4294901760
  %v4725 = vsub.f32 %v4723, %v4724
  %v4726 = vand.u32 %v4725, 4294901760
  %4727 = vmatmul.f32.gmra.mxu0 %v4726
  %v4728 = vpop.f32.mrf.mxu0
  %v4729 = vadd.f32 0.0, %v4728
  %v4730 = vand.u32 %v4503, 4294901760
  %v4731 = vsub.f32 %v4503, %v4730
  %v4732 = vand.u32 %v4731, 4294901760
  %v4733 = vsub.f32 %v4731, %v4732
  %v4734 = vand.u32 %v4733, 4294901760
  %4735 = vmatmul.f32.gmra.mxu0 %v4734
  %v4736 = vpop.f32.mrf.mxu0
  %v4737 = vadd.f32 0.0, %v4736
  %4738 = vdwg.mxu0
  %4739 = vmatpush.msra.mxu0 0.0
  %4740 = vmatpush.msra.mxu0 0.0
  %4741 = vmatpush.msra.mxu0 0.0
  %4742 = vmatpush.msra.mxu0 0.0
  %4743 = vmatpush.msra.mxu0 0.0
  %4744 = vmatpush.msra.mxu0 0.0
  %4745 = vmatpush.msra.mxu0 0.0
  %4746 = vmatpush.msra.mxu0 0.0
  %4747 = vmatpush.msra.mxu0 0.0
  %4748 = vmatpush.msra.mxu0 0.0
  %4749 = vmatpush.msra.mxu0 0.0
  %4750 = vmatpush.msra.mxu0 0.0
  %4751 = vmatpush.msra.mxu0 0.0
  %4752 = vmatpush.msra.mxu0 0.0
  %v4753 = vand.u32 %v4702, 4294901760
  %v4754 = vsub.f32 %v4702, %v4753
  %v4755 = vand.u32 %v4754, 4294901760
  %v4756 = vsub.f32 %v4754, %v4755
  %v4757 = vand.u32 %v4756, 4294901760
  %4758 = vmatpush.msra.mxu0 %v4757
  %v4759 = vand.u32 %v4699, 4294901760
  %v4760 = vsub.f32 %v4699, %v4759
  %v4761 = vand.u32 %v4760, 4294901760
  %v4762 = vsub.f32 %v4760, %v4761
  %v4763 = vand.u32 %v4762, 4294901760
  %4764 = vmatpush.msra.mxu0 %v4763
  %v4765 = vand.u32 %v4500, 4294901760
  %4766 = vmatmul.f32.gmra.mxu0 %v4765
  %v4767 = vpop.f32.mrf.mxu0
  %v4768 = vadd.f32 %v4729, %v4767
  %v4769 = vand.u32 %v4503, 4294901760
  %4770 = vmatmul.f32.gmra.mxu0 %v4769
  %v4771 = vpop.f32.mrf.mxu0
  %v4772 = vadd.f32 %v4737, %v4771
  %4773 = vdwg.mxu0
  %4774 = vmatpush.msra.mxu0 0.0
  %4775 = vmatpush.msra.mxu0 0.0
  %4776 = vmatpush.msra.mxu0 0.0
  %4777 = vmatpush.msra.mxu0 0.0
  %4778 = vmatpush.msra.mxu0 0.0
  %4779 = vmatpush.msra.mxu0 0.0
  %4780 = vmatpush.msra.mxu0 0.0
  %4781 = vmatpush.msra.mxu0 0.0
  %4782 = vmatpush.msra.mxu0 0.0
  %4783 = vmatpush.msra.mxu0 0.0
  %4784 = vmatpush.msra.mxu0 0.0
  %4785 = vmatpush.msra.mxu0 0.0
  %4786 = vmatpush.msra.mxu0 0.0
  %4787 = vmatpush.msra.mxu0 0.0
  %v4788 = vand.u32 %v4702, 4294901760
  %v4789 = vsub.f32 %v4702, %v4788
  %4790 = vmatpush.msra.mxu0 %v4789
  %v4791 = vand.u32 %v4699, 4294901760
  %v4792 = vsub.f32 %v4699, %v4791
  %4793 = vmatpush.msra.mxu0 %v4792
  %v4794 = vand.u32 %v4500, 4294901760
  %v4795 = vsub.f32 %v4500, %v4794
  %4796 = vmatmul.f32.gmra.mxu0 %v4795
  %v4797 = vpop.f32.mrf.mxu0
  %v4798 = vadd.f32 %v4768, %v4797
  %v4799 = vand.u32 %v4503, 4294901760
  %v4800 = vsub.f32 %v4503, %v4799
  %4801 = vmatmul.f32.gmra.mxu0 %v4800
  %v4802 = vpop.f32.mrf.mxu0
  %v4803 = vadd.f32 %v4772, %v4802
  %4804 = vdwg.mxu0
  %4805 = vmatpush.msra.mxu0 0.0
  %4806 = vmatpush.msra.mxu0 0.0
  %4807 = vmatpush.msra.mxu0 0.0
  %4808 = vmatpush.msra.mxu0 0.0
  %4809 = vmatpush.msra.mxu0 0.0
  %4810 = vmatpush.msra.mxu0 0.0
  %4811 = vmatpush.msra.mxu0 0.0
  %4812 = vmatpush.msra.mxu0 0.0
  %4813 = vmatpush.msra.mxu0 0.0
  %4814 = vmatpush.msra.mxu0 0.0
  %4815 = vmatpush.msra.mxu0 0.0
  %4816 = vmatpush.msra.mxu0 0.0
  %4817 = vmatpush.msra.mxu0 0.0
  %4818 = vmatpush.msra.mxu0 0.0
  %v4819 = vand.u32 %v4702, 4294901760
  %4820 = vmatpush.msra.mxu0 %v4819
  %v4821 = vand.u32 %v4699, 4294901760
  %4822 = vmatpush.msra.mxu0 %v4821
  %v4823 = vand.u32 %v4500, 4294901760
  %v4824 = vsub.f32 %v4500, %v4823
  %v4825 = vand.u32 %v4824, 4294901760
  %4826 = vmatmul.f32.gmra.mxu0 %v4825
  %v4827 = vpop.f32.mrf.mxu0
  %v4828 = vadd.f32 %v4798, %v4827
  %v4829 = vand.u32 %v4503, 4294901760
  %v4830 = vsub.f32 %v4503, %v4829
  %v4831 = vand.u32 %v4830, 4294901760
  %4832 = vmatmul.f32.gmra.mxu0 %v4831
  %v4833 = vpop.f32.mrf.mxu0
  %v4834 = vadd.f32 %v4803, %v4833
  %4835 = vdwg.mxu0
  %4836 = vmatpush.msra.mxu0 0.0
  %4837 = vmatpush.msra.mxu0 0.0
  %4838 = vmatpush.msra.mxu0 0.0
  %4839 = vmatpush.msra.mxu0 0.0
  %4840 = vmatpush.msra.mxu0 0.0
  %4841 = vmatpush.msra.mxu0 0.0
  %4842 = vmatpush.msra.mxu0 0.0
  %4843 = vmatpush.msra.mxu0 0.0
  %4844 = vmatpush.msra.mxu0 0.0
  %4845 = vmatpush.msra.mxu0 0.0
  %4846 = vmatpush.msra.mxu0 0.0
  %4847 = vmatpush.msra.mxu0 0.0
  %4848 = vmatpush.msra.mxu0 0.0
  %4849 = vmatpush.msra.mxu0 0.0
  %v4850 = vand.u32 %v4702, 4294901760
  %v4851 = vsub.f32 %v4702, %v4850
  %v4852 = vand.u32 %v4851, 4294901760
  %4853 = vmatpush.msra.mxu0 %v4852
  %v4854 = vand.u32 %v4699, 4294901760
  %v4855 = vsub.f32 %v4699, %v4854
  %v4856 = vand.u32 %v4855, 4294901760
  %4857 = vmatpush.msra.mxu0 %v4856
  %v4858 = vand.u32 %v4500, 4294901760
  %4859 = vmatmul.f32.gmra.mxu0 %v4858
  %v4860 = vpop.f32.mrf.mxu0
  %v4861 = vadd.f32 %v4828, %v4860
  %v4862 = vand.u32 %v4503, 4294901760
  %4863 = vmatmul.f32.gmra.mxu0 %v4862
  %v4864 = vpop.f32.mrf.mxu0
  %v4865 = vadd.f32 %v4834, %v4864
  %4866 = vdwg.mxu0
  %4867 = vmatpush.msra.mxu0 0.0
  %4868 = vmatpush.msra.mxu0 0.0
  %4869 = vmatpush.msra.mxu0 0.0
  %4870 = vmatpush.msra.mxu0 0.0
  %4871 = vmatpush.msra.mxu0 0.0
  %4872 = vmatpush.msra.mxu0 0.0
  %4873 = vmatpush.msra.mxu0 0.0
  %4874 = vmatpush.msra.mxu0 0.0
  %4875 = vmatpush.msra.mxu0 0.0
  %4876 = vmatpush.msra.mxu0 0.0
  %4877 = vmatpush.msra.mxu0 0.0
  %4878 = vmatpush.msra.mxu0 0.0
  %4879 = vmatpush.msra.mxu0 0.0
  %4880 = vmatpush.msra.mxu0 0.0
  %v4881 = vand.u32 %v4702, 4294901760
  %4882 = vmatpush.msra.mxu0 %v4881
  %v4883 = vand.u32 %v4699, 4294901760
  %4884 = vmatpush.msra.mxu0 %v4883
  %v4885 = vand.u32 %v4500, 4294901760
  %4886 = vmatmul.f32.gmra.mxu0 %v4885
  %v4887 = vpop.f32.mrf.mxu0
  %v4888 = vadd.f32 %v4861, %v4887
  %v4889 = vand.u32 %v4503, 4294901760
  %4890 = vmatmul.f32.gmra.mxu0 %v4889
  %v4891 = vpop.f32.mrf.mxu0
  %v4892 = vadd.f32 %v4865, %v4891
  %4893 = vdwg.mxu0
  %v4894 = vmax.f32 %v4693, %v4888
  %v4895 = vmax.f32 %v4697, %v4892
  %v4896 = vld [vmem:[%s13] sm:$0xff]
  %v4897 = vld [vmem:[%s13 + $0x8] sm:$0xff]
  %v4898 = vld [vmem:[%s13 + $0x10] sm:$0xff]
  %v4899 = vld [vmem:[%s13 + $0x18] sm:$0xff]
  %vm4900 = vcmask 130048
  %v4902 = vsel %vm4900, %v4896, 0
  %v4905 = vsel %vm4900, %v4897, 0
  %v4908 = vsel %vm4900, %v4898, 0
  %v4911 = vsel %vm4900, %v4899, 0
  %4913 = vmatpush.msra.mxu0 0.0
  %4914 = vmatpush.msra.mxu0 0.0
  %4915 = vmatpush.msra.mxu0 0.0
  %4916 = vmatpush.msra.mxu0 0.0
  %4917 = vmatpush.msra.mxu0 0.0
  %4918 = vmatpush.msra.mxu0 0.0
  %4919 = vmatpush.msra.mxu0 0.0
  %4920 = vmatpush.msra.mxu0 0.0
  %4921 = vmatpush.msra.mxu0 0.0
  %4922 = vmatpush.msra.mxu0 0.0
  %4923 = vmatpush.msra.mxu0 0.0
  %4924 = vmatpush.msra.mxu0 0.0
  %4925 = vmatpush.msra.mxu0 0.0
  %4926 = vmatpush.msra.mxu0 0.0
  %v4927 = vand.u32 %v4895, 4294901760
  %4928 = vmatpush.msra.mxu0 %v4927
  %v4929 = vand.u32 %v4894, 4294901760
  %4930 = vmatpush.msra.mxu0 %v4929
  %v4931 = vand.u32 %v4902, 4294901760
  %v4932 = vsub.f32 %v4902, %v4931
  %v4933 = vand.u32 %v4932, 4294901760
  %v4934 = vsub.f32 %v4932, %v4933
  %v4935 = vand.u32 %v4934, 4294901760
  %4936 = vmatmul.f32.gmra.mxu0 %v4935
  %v4937 = vpop.f32.mrf.mxu0
  %v4938 = vadd.f32 0.0, %v4937
  %v4939 = vand.u32 %v4905, 4294901760
  %v4940 = vsub.f32 %v4905, %v4939
  %v4941 = vand.u32 %v4940, 4294901760
  %v4942 = vsub.f32 %v4940, %v4941
  %v4943 = vand.u32 %v4942, 4294901760
  %4944 = vmatmul.f32.gmra.mxu0 %v4943
  %v4945 = vpop.f32.mrf.mxu0
  %v4946 = vadd.f32 0.0, %v4945
  %v4947 = vand.u32 %v4908, 4294901760
  %v4948 = vsub.f32 %v4908, %v4947
  %v4949 = vand.u32 %v4948, 4294901760
  %v4950 = vsub.f32 %v4948, %v4949
  %v4951 = vand.u32 %v4950, 4294901760
  %4952 = vmatmul.f32.gmra.mxu0 %v4951
  %v4953 = vpop.f32.mrf.mxu0
  %v4954 = vadd.f32 0.0, %v4953
  %v4955 = vand.u32 %v4911, 4294901760
  %v4956 = vsub.f32 %v4911, %v4955
  %v4957 = vand.u32 %v4956, 4294901760
  %v4958 = vsub.f32 %v4956, %v4957
  %v4959 = vand.u32 %v4958, 4294901760
  %4960 = vmatmul.f32.gmra.mxu0 %v4959
  %v4961 = vpop.f32.mrf.mxu0
  %v4962 = vadd.f32 0.0, %v4961
  %4963 = vdwg.mxu0
  %4964 = vmatpush.msra.mxu0 0.0
  %4965 = vmatpush.msra.mxu0 0.0
  %4966 = vmatpush.msra.mxu0 0.0
  %4967 = vmatpush.msra.mxu0 0.0
  %4968 = vmatpush.msra.mxu0 0.0
  %4969 = vmatpush.msra.mxu0 0.0
  %4970 = vmatpush.msra.mxu0 0.0
  %4971 = vmatpush.msra.mxu0 0.0
  %4972 = vmatpush.msra.mxu0 0.0
  %4973 = vmatpush.msra.mxu0 0.0
  %4974 = vmatpush.msra.mxu0 0.0
  %4975 = vmatpush.msra.mxu0 0.0
  %4976 = vmatpush.msra.mxu0 0.0
  %4977 = vmatpush.msra.mxu0 0.0
  %v4978 = vand.u32 %v4895, 4294901760
  %v4979 = vsub.f32 %v4895, %v4978
  %v4980 = vand.u32 %v4979, 4294901760
  %v4981 = vsub.f32 %v4979, %v4980
  %v4982 = vand.u32 %v4981, 4294901760
  %4983 = vmatpush.msra.mxu0 %v4982
  %v4984 = vand.u32 %v4894, 4294901760
  %v4985 = vsub.f32 %v4894, %v4984
  %v4986 = vand.u32 %v4985, 4294901760
  %v4987 = vsub.f32 %v4985, %v4986
  %v4988 = vand.u32 %v4987, 4294901760
  %4989 = vmatpush.msra.mxu0 %v4988
  %v4990 = vand.u32 %v4902, 4294901760
  %4991 = vmatmul.f32.gmra.mxu0 %v4990
  %v4992 = vpop.f32.mrf.mxu0
  %v4993 = vadd.f32 %v4938, %v4992
  %v4994 = vand.u32 %v4905, 4294901760
  %4995 = vmatmul.f32.gmra.mxu0 %v4994
  %v4996 = vpop.f32.mrf.mxu0
  %v4997 = vadd.f32 %v4946, %v4996
  %v4998 = vand.u32 %v4908, 4294901760
  %4999 = vmatmul.f32.gmra.mxu0 %v4998
  %v5000 = vpop.f32.mrf.mxu0
  %v5001 = vadd.f32 %v4954, %v5000
  %v5002 = vand.u32 %v4911, 4294901760
  %5003 = vmatmul.f32.gmra.mxu0 %v5002
  %v5004 = vpop.f32.mrf.mxu0
  %v5005 = vadd.f32 %v4962, %v5004
  %5006 = vdwg.mxu0
  %5007 = vmatpush.msra.mxu0 0.0
  %5008 = vmatpush.msra.mxu0 0.0
  %5009 = vmatpush.msra.mxu0 0.0
  %5010 = vmatpush.msra.mxu0 0.0
  %5011 = vmatpush.msra.mxu0 0.0
  %5012 = vmatpush.msra.mxu0 0.0
  %5013 = vmatpush.msra.mxu0 0.0
  %5014 = vmatpush.msra.mxu0 0.0
  %5015 = vmatpush.msra.mxu0 0.0
  %5016 = vmatpush.msra.mxu0 0.0
  %5017 = vmatpush.msra.mxu0 0.0
  %5018 = vmatpush.msra.mxu0 0.0
  %5019 = vmatpush.msra.mxu0 0.0
  %5020 = vmatpush.msra.mxu0 0.0
  %v5021 = vand.u32 %v4895, 4294901760
  %v5022 = vsub.f32 %v4895, %v5021
  %5023 = vmatpush.msra.mxu0 %v5022
  %v5024 = vand.u32 %v4894, 4294901760
  %v5025 = vsub.f32 %v4894, %v5024
  %5026 = vmatpush.msra.mxu0 %v5025
  %v5027 = vand.u32 %v4902, 4294901760
  %v5028 = vsub.f32 %v4902, %v5027
  %5029 = vmatmul.f32.gmra.mxu0 %v5028
  %v5030 = vpop.f32.mrf.mxu0
  %v5031 = vadd.f32 %v4993, %v5030
  %v5032 = vand.u32 %v4905, 4294901760
  %v5033 = vsub.f32 %v4905, %v5032
  %5034 = vmatmul.f32.gmra.mxu0 %v5033
  %v5035 = vpop.f32.mrf.mxu0
  %v5036 = vadd.f32 %v4997, %v5035
  %v5037 = vand.u32 %v4908, 4294901760
  %v5038 = vsub.f32 %v4908, %v5037
  %5039 = vmatmul.f32.gmra.mxu0 %v5038
  %v5040 = vpop.f32.mrf.mxu0
  %v5041 = vadd.f32 %v5001, %v5040
  %v5042 = vand.u32 %v4911, 4294901760
  %v5043 = vsub.f32 %v4911, %v5042
  %5044 = vmatmul.f32.gmra.mxu0 %v5043
  %v5045 = vpop.f32.mrf.mxu0
  %v5046 = vadd.f32 %v5005, %v5045
  %5047 = vdwg.mxu0
  %5048 = vmatpush.msra.mxu0 0.0
  %5049 = vmatpush.msra.mxu0 0.0
  %5050 = vmatpush.msra.mxu0 0.0
  %5051 = vmatpush.msra.mxu0 0.0
  %5052 = vmatpush.msra.mxu0 0.0
  %5053 = vmatpush.msra.mxu0 0.0
  %5054 = vmatpush.msra.mxu0 0.0
  %5055 = vmatpush.msra.mxu0 0.0
  %5056 = vmatpush.msra.mxu0 0.0
  %5057 = vmatpush.msra.mxu0 0.0
  %5058 = vmatpush.msra.mxu0 0.0
  %5059 = vmatpush.msra.mxu0 0.0
  %5060 = vmatpush.msra.mxu0 0.0
  %5061 = vmatpush.msra.mxu0 0.0
  %v5062 = vand.u32 %v4895, 4294901760
  %5063 = vmatpush.msra.mxu0 %v5062
  %v5064 = vand.u32 %v4894, 4294901760
  %5065 = vmatpush.msra.mxu0 %v5064
  %v5066 = vand.u32 %v4902, 4294901760
  %v5067 = vsub.f32 %v4902, %v5066
  %v5068 = vand.u32 %v5067, 4294901760
  %5069 = vmatmul.f32.gmra.mxu0 %v5068
  %v5070 = vpop.f32.mrf.mxu0
  %v5071 = vadd.f32 %v5031, %v5070
  %v5072 = vand.u32 %v4905, 4294901760
  %v5073 = vsub.f32 %v4905, %v5072
  %v5074 = vand.u32 %v5073, 4294901760
  %5075 = vmatmul.f32.gmra.mxu0 %v5074
  %v5076 = vpop.f32.mrf.mxu0
  %v5077 = vadd.f32 %v5036, %v5076
  %v5078 = vand.u32 %v4908, 4294901760
  %v5079 = vsub.f32 %v4908, %v5078
  %v5080 = vand.u32 %v5079, 4294901760
  %5081 = vmatmul.f32.gmra.mxu0 %v5080
  %v5082 = vpop.f32.mrf.mxu0
  %v5083 = vadd.f32 %v5041, %v5082
  %v5084 = vand.u32 %v4911, 4294901760
  %v5085 = vsub.f32 %v4911, %v5084
  %v5086 = vand.u32 %v5085, 4294901760
  %5087 = vmatmul.f32.gmra.mxu0 %v5086
  %v5088 = vpop.f32.mrf.mxu0
  %v5089 = vadd.f32 %v5046, %v5088
  %5090 = vdwg.mxu0
  %5091 = vmatpush.msra.mxu0 0.0
  %5092 = vmatpush.msra.mxu0 0.0
  %5093 = vmatpush.msra.mxu0 0.0
  %5094 = vmatpush.msra.mxu0 0.0
  %5095 = vmatpush.msra.mxu0 0.0
  %5096 = vmatpush.msra.mxu0 0.0
  %5097 = vmatpush.msra.mxu0 0.0
  %5098 = vmatpush.msra.mxu0 0.0
  %5099 = vmatpush.msra.mxu0 0.0
  %5100 = vmatpush.msra.mxu0 0.0
  %5101 = vmatpush.msra.mxu0 0.0
  %5102 = vmatpush.msra.mxu0 0.0
  %5103 = vmatpush.msra.mxu0 0.0
  %5104 = vmatpush.msra.mxu0 0.0
  %v5105 = vand.u32 %v4895, 4294901760
  %v5106 = vsub.f32 %v4895, %v5105
  %v5107 = vand.u32 %v5106, 4294901760
  %5108 = vmatpush.msra.mxu0 %v5107
  %v5109 = vand.u32 %v4894, 4294901760
  %v5110 = vsub.f32 %v4894, %v5109
  %v5111 = vand.u32 %v5110, 4294901760
  %5112 = vmatpush.msra.mxu0 %v5111
  %v5113 = vand.u32 %v4902, 4294901760
  %5114 = vmatmul.f32.gmra.mxu0 %v5113
  %v5115 = vpop.f32.mrf.mxu0
  %v5116 = vadd.f32 %v5071, %v5115
  %v5117 = vand.u32 %v4905, 4294901760
  %5118 = vmatmul.f32.gmra.mxu0 %v5117
  %v5119 = vpop.f32.mrf.mxu0
  %v5120 = vadd.f32 %v5077, %v5119
  %v5121 = vand.u32 %v4908, 4294901760
  %5122 = vmatmul.f32.gmra.mxu0 %v5121
  %v5123 = vpop.f32.mrf.mxu0
  %v5124 = vadd.f32 %v5083, %v5123
  %v5125 = vand.u32 %v4911, 4294901760
  %5126 = vmatmul.f32.gmra.mxu0 %v5125
  %v5127 = vpop.f32.mrf.mxu0
  %v5128 = vadd.f32 %v5089, %v5127
  %5129 = vdwg.mxu0
  %5130 = vmatpush.msra.mxu0 0.0
  %5131 = vmatpush.msra.mxu0 0.0
  %5132 = vmatpush.msra.mxu0 0.0
  %5133 = vmatpush.msra.mxu0 0.0
  %5134 = vmatpush.msra.mxu0 0.0
  %5135 = vmatpush.msra.mxu0 0.0
  %5136 = vmatpush.msra.mxu0 0.0
  %5137 = vmatpush.msra.mxu0 0.0
  %5138 = vmatpush.msra.mxu0 0.0
  %5139 = vmatpush.msra.mxu0 0.0
  %5140 = vmatpush.msra.mxu0 0.0
  %5141 = vmatpush.msra.mxu0 0.0
  %5142 = vmatpush.msra.mxu0 0.0
  %5143 = vmatpush.msra.mxu0 0.0
  %v5144 = vand.u32 %v4895, 4294901760
  %5145 = vmatpush.msra.mxu0 %v5144
  %v5146 = vand.u32 %v4894, 4294901760
  %5147 = vmatpush.msra.mxu0 %v5146
  %v5148 = vand.u32 %v4902, 4294901760
  %5149 = vmatmul.f32.gmra.mxu0 %v5148
  %v5150 = vpop.f32.mrf.mxu0
  %v5151 = vadd.f32 %v5116, %v5150
  %v5152 = vand.u32 %v4905, 4294901760
  %5153 = vmatmul.f32.gmra.mxu0 %v5152
  %v5154 = vpop.f32.mrf.mxu0
  %v5155 = vadd.f32 %v5120, %v5154
  %v5156 = vand.u32 %v4908, 4294901760
  %5157 = vmatmul.f32.gmra.mxu0 %v5156
  %v5158 = vpop.f32.mrf.mxu0
  %v5159 = vadd.f32 %v5124, %v5158
  %v5160 = vand.u32 %v4911, 4294901760
  %5161 = vmatmul.f32.gmra.mxu0 %v5160
  %v5162 = vpop.f32.mrf.mxu0
  %v5163 = vadd.f32 %v5128, %v5162
  %5164 = vdwg.mxu0
  %5166 = vset.pattern.permute.xlu0 0
  %5167 = vperm.xlu0 %5166, %v4492
  %v5168 = vpop.permute.xlu0 %5167
  %5171 = vset.pattern.permute.xlu0 0
  %5172 = vperm.xlu0 %5171, %v4493
  %v5173 = vpop.permute.xlu0 %5172
  %5176 = vset.pattern.permute.xlu0 0
  %5177 = vperm.xlu0 %5176, %v4494
  %v5178 = vpop.permute.xlu0 %5177
  %5181 = vset.pattern.permute.xlu0 0
  %5182 = vperm.xlu0 %5181, %v4495
  %v5183 = vpop.permute.xlu0 %5182
  %v5185 = vadd.f32 %v5168, %v5151
  %v5186 = vadd.f32 %v5173, %v5155
  %v5187 = vadd.f32 %v5178, %v5159
  %v5188 = vadd.f32 %v5183, %v5163
  %s5189 = scalar_lea.vmem %s11, 16
  %v5190 = vld [vmem:[%s5189] sm:$0xff]
  %v5191 = vld [vmem:[%s5189 + $0x8] sm:$0x3f]
  %v5193 = vsel %vm4505, %v5191, 0
  %5195 = vmatpush.msra.mxu0 0.0
  %5196 = vmatpush.msra.mxu0 0.0
  %5197 = vmatpush.msra.mxu0 0.0
  %5198 = vmatpush.msra.mxu0 0.0
  %5199 = vmatpush.msra.mxu0 0.0
  %5200 = vmatpush.msra.mxu0 0.0
  %5201 = vmatpush.msra.mxu0 0.0
  %5202 = vmatpush.msra.mxu0 0.0
  %5203 = vmatpush.msra.mxu0 0.0
  %5204 = vmatpush.msra.mxu0 0.0
  %5205 = vmatpush.msra.mxu0 0.0
  %5206 = vmatpush.msra.mxu0 0.0
  %5207 = vmatpush.msra.mxu0 0.0
  %5208 = vmatpush.msra.mxu0 0.0
  %v5209 = vand.u32 %v5193, 4294901760
  %5210 = vmatpush.msra.mxu0 %v5209
  %v5211 = vand.u32 %v5190, 4294901760
  %5212 = vmatpush.msra.mxu0 %v5211
  %v5213 = vand.u32 %v4500, 4294901760
  %v5214 = vsub.f32 %v4500, %v5213
  %v5215 = vand.u32 %v5214, 4294901760
  %v5216 = vsub.f32 %v5214, %v5215
  %v5217 = vand.u32 %v5216, 4294901760
  %5218 = vmatmul.f32.gmra.mxu0 %v5217
  %v5219 = vpop.f32.mrf.mxu0
  %v5220 = vadd.f32 0.0, %v5219
  %v5221 = vand.u32 %v4503, 4294901760
  %v5222 = vsub.f32 %v4503, %v5221
  %v5223 = vand.u32 %v5222, 4294901760
  %v5224 = vsub.f32 %v5222, %v5223
  %v5225 = vand.u32 %v5224, 4294901760
  %5226 = vmatmul.f32.gmra.mxu0 %v5225
  %v5227 = vpop.f32.mrf.mxu0
  %v5228 = vadd.f32 0.0, %v5227
  %5229 = vdwg.mxu0
  %5230 = vmatpush.msra.mxu0 0.0
  %5231 = vmatpush.msra.mxu0 0.0
  %5232 = vmatpush.msra.mxu0 0.0
  %5233 = vmatpush.msra.mxu0 0.0
  %5234 = vmatpush.msra.mxu0 0.0
  %5235 = vmatpush.msra.mxu0 0.0
  %5236 = vmatpush.msra.mxu0 0.0
  %5237 = vmatpush.msra.mxu0 0.0
  %5238 = vmatpush.msra.mxu0 0.0
  %5239 = vmatpush.msra.mxu0 0.0
  %5240 = vmatpush.msra.mxu0 0.0
  %5241 = vmatpush.msra.mxu0 0.0
  %5242 = vmatpush.msra.mxu0 0.0
  %5243 = vmatpush.msra.mxu0 0.0
  %v5244 = vand.u32 %v5193, 4294901760
  %v5245 = vsub.f32 %v5193, %v5244
  %v5246 = vand.u32 %v5245, 4294901760
  %v5247 = vsub.f32 %v5245, %v5246
  %v5248 = vand.u32 %v5247, 4294901760
  %5249 = vmatpush.msra.mxu0 %v5248
  %v5250 = vand.u32 %v5190, 4294901760
  %v5251 = vsub.f32 %v5190, %v5250
  %v5252 = vand.u32 %v5251, 4294901760
  %v5253 = vsub.f32 %v5251, %v5252
  %v5254 = vand.u32 %v5253, 4294901760
  %5255 = vmatpush.msra.mxu0 %v5254
  %v5256 = vand.u32 %v4500, 4294901760
  %5257 = vmatmul.f32.gmra.mxu0 %v5256
  %v5258 = vpop.f32.mrf.mxu0
  %v5259 = vadd.f32 %v5220, %v5258
  %v5260 = vand.u32 %v4503, 4294901760
  %5261 = vmatmul.f32.gmra.mxu0 %v5260
  %v5262 = vpop.f32.mrf.mxu0
  %v5263 = vadd.f32 %v5228, %v5262
  %5264 = vdwg.mxu0
  %5265 = vmatpush.msra.mxu0 0.0
  %5266 = vmatpush.msra.mxu0 0.0
  %5267 = vmatpush.msra.mxu0 0.0
  %5268 = vmatpush.msra.mxu0 0.0
  %5269 = vmatpush.msra.mxu0 0.0
  %5270 = vmatpush.msra.mxu0 0.0
  %5271 = vmatpush.msra.mxu0 0.0
  %5272 = vmatpush.msra.mxu0 0.0
  %5273 = vmatpush.msra.mxu0 0.0
  %5274 = vmatpush.msra.mxu0 0.0
  %5275 = vmatpush.msra.mxu0 0.0
  %5276 = vmatpush.msra.mxu0 0.0
  %5277 = vmatpush.msra.mxu0 0.0
  %5278 = vmatpush.msra.mxu0 0.0
  %v5279 = vand.u32 %v5193, 4294901760
  %v5280 = vsub.f32 %v5193, %v5279
  %5281 = vmatpush.msra.mxu0 %v5280
  %v5282 = vand.u32 %v5190, 4294901760
  %v5283 = vsub.f32 %v5190, %v5282
  %5284 = vmatpush.msra.mxu0 %v5283
  %v5285 = vand.u32 %v4500, 4294901760
  %v5286 = vsub.f32 %v4500, %v5285
  %5287 = vmatmul.f32.gmra.mxu0 %v5286
  %v5288 = vpop.f32.mrf.mxu0
  %v5289 = vadd.f32 %v5259, %v5288
  %v5290 = vand.u32 %v4503, 4294901760
  %v5291 = vsub.f32 %v4503, %v5290
  %5292 = vmatmul.f32.gmra.mxu0 %v5291
  %v5293 = vpop.f32.mrf.mxu0
  %v5294 = vadd.f32 %v5263, %v5293
  %5295 = vdwg.mxu0
  %5296 = vmatpush.msra.mxu0 0.0
  %5297 = vmatpush.msra.mxu0 0.0
  %5298 = vmatpush.msra.mxu0 0.0
  %5299 = vmatpush.msra.mxu0 0.0
  %5300 = vmatpush.msra.mxu0 0.0
  %5301 = vmatpush.msra.mxu0 0.0
  %5302 = vmatpush.msra.mxu0 0.0
  %5303 = vmatpush.msra.mxu0 0.0
  %5304 = vmatpush.msra.mxu0 0.0
  %5305 = vmatpush.msra.mxu0 0.0
  %5306 = vmatpush.msra.mxu0 0.0
  %5307 = vmatpush.msra.mxu0 0.0
  %5308 = vmatpush.msra.mxu0 0.0
  %5309 = vmatpush.msra.mxu0 0.0
  %v5310 = vand.u32 %v5193, 4294901760
  %5311 = vmatpush.msra.mxu0 %v5310
  %v5312 = vand.u32 %v5190, 4294901760
  %5313 = vmatpush.msra.mxu0 %v5312
  %v5314 = vand.u32 %v4500, 4294901760
  %v5315 = vsub.f32 %v4500, %v5314
  %v5316 = vand.u32 %v5315, 4294901760
  %5317 = vmatmul.f32.gmra.mxu0 %v5316
  %v5318 = vpop.f32.mrf.mxu0
  %v5319 = vadd.f32 %v5289, %v5318
  %v5320 = vand.u32 %v4503, 4294901760
  %v5321 = vsub.f32 %v4503, %v5320
  %v5322 = vand.u32 %v5321, 4294901760
  %5323 = vmatmul.f32.gmra.mxu0 %v5322
  %v5324 = vpop.f32.mrf.mxu0
  %v5325 = vadd.f32 %v5294, %v5324
  %5326 = vdwg.mxu0
  %5327 = vmatpush.msra.mxu0 0.0
  %5328 = vmatpush.msra.mxu0 0.0
  %5329 = vmatpush.msra.mxu0 0.0
  %5330 = vmatpush.msra.mxu0 0.0
  %5331 = vmatpush.msra.mxu0 0.0
  %5332 = vmatpush.msra.mxu0 0.0
  %5333 = vmatpush.msra.mxu0 0.0
  %5334 = vmatpush.msra.mxu0 0.0
  %5335 = vmatpush.msra.mxu0 0.0
  %5336 = vmatpush.msra.mxu0 0.0
  %5337 = vmatpush.msra.mxu0 0.0
  %5338 = vmatpush.msra.mxu0 0.0
  %5339 = vmatpush.msra.mxu0 0.0
  %5340 = vmatpush.msra.mxu0 0.0
  %v5341 = vand.u32 %v5193, 4294901760
  %v5342 = vsub.f32 %v5193, %v5341
  %v5343 = vand.u32 %v5342, 4294901760
  %5344 = vmatpush.msra.mxu0 %v5343
  %v5345 = vand.u32 %v5190, 4294901760
  %v5346 = vsub.f32 %v5190, %v5345
  %v5347 = vand.u32 %v5346, 4294901760
  %5348 = vmatpush.msra.mxu0 %v5347
  %v5349 = vand.u32 %v4500, 4294901760
  %5350 = vmatmul.f32.gmra.mxu0 %v5349
  %v5351 = vpop.f32.mrf.mxu0
  %v5352 = vadd.f32 %v5319, %v5351
  %v5353 = vand.u32 %v4503, 4294901760
  %5354 = vmatmul.f32.gmra.mxu0 %v5353
  %v5355 = vpop.f32.mrf.mxu0
  %v5356 = vadd.f32 %v5325, %v5355
  %5357 = vdwg.mxu0
  %5358 = vmatpush.msra.mxu0 0.0
  %5359 = vmatpush.msra.mxu0 0.0
  %5360 = vmatpush.msra.mxu0 0.0
  %5361 = vmatpush.msra.mxu0 0.0
  %5362 = vmatpush.msra.mxu0 0.0
  %5363 = vmatpush.msra.mxu0 0.0
  %5364 = vmatpush.msra.mxu0 0.0
  %5365 = vmatpush.msra.mxu0 0.0
  %5366 = vmatpush.msra.mxu0 0.0
  %5367 = vmatpush.msra.mxu0 0.0
  %5368 = vmatpush.msra.mxu0 0.0
  %5369 = vmatpush.msra.mxu0 0.0
  %5370 = vmatpush.msra.mxu0 0.0
  %5371 = vmatpush.msra.mxu0 0.0
  %v5372 = vand.u32 %v5193, 4294901760
  %5373 = vmatpush.msra.mxu0 %v5372
  %v5374 = vand.u32 %v5190, 4294901760
  %5375 = vmatpush.msra.mxu0 %v5374
  %v5376 = vand.u32 %v4500, 4294901760
  %5377 = vmatmul.f32.gmra.mxu0 %v5376
  %v5378 = vpop.f32.mrf.mxu0
  %v5379 = vadd.f32 %v5352, %v5378
  %v5380 = vand.u32 %v4503, 4294901760
  %5381 = vmatmul.f32.gmra.mxu0 %v5380
  %v5382 = vpop.f32.mrf.mxu0
  %v5383 = vadd.f32 %v5356, %v5382
  %5384 = vdwg.mxu0
  %s5385 = scalar_lea.vmem %s12, 16
  %v5386 = vld [vmem:[%s5385] sm:$0xff]
  %v5387 = vld [vmem:[%s5385 + $0x8] sm:$0x3f]
  %v5389 = vsel %vm4505, %v5387, 0
  %5391 = vmatpush.msra.mxu0 0.0
  %5392 = vmatpush.msra.mxu0 0.0
  %5393 = vmatpush.msra.mxu0 0.0
  %5394 = vmatpush.msra.mxu0 0.0
  %5395 = vmatpush.msra.mxu0 0.0
  %5396 = vmatpush.msra.mxu0 0.0
  %5397 = vmatpush.msra.mxu0 0.0
  %5398 = vmatpush.msra.mxu0 0.0
  %5399 = vmatpush.msra.mxu0 0.0
  %5400 = vmatpush.msra.mxu0 0.0
  %5401 = vmatpush.msra.mxu0 0.0
  %5402 = vmatpush.msra.mxu0 0.0
  %5403 = vmatpush.msra.mxu0 0.0
  %5404 = vmatpush.msra.mxu0 0.0
  %v5405 = vand.u32 %v5389, 4294901760
  %5406 = vmatpush.msra.mxu0 %v5405
  %v5407 = vand.u32 %v5386, 4294901760
  %5408 = vmatpush.msra.mxu0 %v5407
  %v5409 = vand.u32 %v4500, 4294901760
  %v5410 = vsub.f32 %v4500, %v5409
  %v5411 = vand.u32 %v5410, 4294901760
  %v5412 = vsub.f32 %v5410, %v5411
  %v5413 = vand.u32 %v5412, 4294901760
  %5414 = vmatmul.f32.gmra.mxu0 %v5413
  %v5415 = vpop.f32.mrf.mxu0
  %v5416 = vadd.f32 0.0, %v5415
  %v5417 = vand.u32 %v4503, 4294901760
  %v5418 = vsub.f32 %v4503, %v5417
  %v5419 = vand.u32 %v5418, 4294901760
  %v5420 = vsub.f32 %v5418, %v5419
  %v5421 = vand.u32 %v5420, 4294901760
  %5422 = vmatmul.f32.gmra.mxu0 %v5421
  %v5423 = vpop.f32.mrf.mxu0
  %v5424 = vadd.f32 0.0, %v5423
  %5425 = vdwg.mxu0
  %5426 = vmatpush.msra.mxu0 0.0
  %5427 = vmatpush.msra.mxu0 0.0
  %5428 = vmatpush.msra.mxu0 0.0
  %5429 = vmatpush.msra.mxu0 0.0
  %5430 = vmatpush.msra.mxu0 0.0
  %5431 = vmatpush.msra.mxu0 0.0
  %5432 = vmatpush.msra.mxu0 0.0
  %5433 = vmatpush.msra.mxu0 0.0
  %5434 = vmatpush.msra.mxu0 0.0
  %5435 = vmatpush.msra.mxu0 0.0
  %5436 = vmatpush.msra.mxu0 0.0
  %5437 = vmatpush.msra.mxu0 0.0
  %5438 = vmatpush.msra.mxu0 0.0
  %5439 = vmatpush.msra.mxu0 0.0
  %v5440 = vand.u32 %v5389, 4294901760
  %v5441 = vsub.f32 %v5389, %v5440
  %v5442 = vand.u32 %v5441, 4294901760
  %v5443 = vsub.f32 %v5441, %v5442
  %v5444 = vand.u32 %v5443, 4294901760
  %5445 = vmatpush.msra.mxu0 %v5444
  %v5446 = vand.u32 %v5386, 4294901760
  %v5447 = vsub.f32 %v5386, %v5446
  %v5448 = vand.u32 %v5447, 4294901760
  %v5449 = vsub.f32 %v5447, %v5448
  %v5450 = vand.u32 %v5449, 4294901760
  %5451 = vmatpush.msra.mxu0 %v5450
  %v5452 = vand.u32 %v4500, 4294901760
  %5453 = vmatmul.f32.gmra.mxu0 %v5452
  %v5454 = vpop.f32.mrf.mxu0
  %v5455 = vadd.f32 %v5416, %v5454
  %v5456 = vand.u32 %v4503, 4294901760
  %5457 = vmatmul.f32.gmra.mxu0 %v5456
  %v5458 = vpop.f32.mrf.mxu0
  %v5459 = vadd.f32 %v5424, %v5458
  %5460 = vdwg.mxu0
  %5461 = vmatpush.msra.mxu0 0.0
  %5462 = vmatpush.msra.mxu0 0.0
  %5463 = vmatpush.msra.mxu0 0.0
  %5464 = vmatpush.msra.mxu0 0.0
  %5465 = vmatpush.msra.mxu0 0.0
  %5466 = vmatpush.msra.mxu0 0.0
  %5467 = vmatpush.msra.mxu0 0.0
  %5468 = vmatpush.msra.mxu0 0.0
  %5469 = vmatpush.msra.mxu0 0.0
  %5470 = vmatpush.msra.mxu0 0.0
  %5471 = vmatpush.msra.mxu0 0.0
  %5472 = vmatpush.msra.mxu0 0.0
  %5473 = vmatpush.msra.mxu0 0.0
  %5474 = vmatpush.msra.mxu0 0.0
  %v5475 = vand.u32 %v5389, 4294901760
  %v5476 = vsub.f32 %v5389, %v5475
  %5477 = vmatpush.msra.mxu0 %v5476
  %v5478 = vand.u32 %v5386, 4294901760
  %v5479 = vsub.f32 %v5386, %v5478
  %5480 = vmatpush.msra.mxu0 %v5479
  %v5481 = vand.u32 %v4500, 4294901760
  %v5482 = vsub.f32 %v4500, %v5481
  %5483 = vmatmul.f32.gmra.mxu0 %v5482
  %v5484 = vpop.f32.mrf.mxu0
  %v5485 = vadd.f32 %v5455, %v5484
  %v5486 = vand.u32 %v4503, 4294901760
  %v5487 = vsub.f32 %v4503, %v5486
  %5488 = vmatmul.f32.gmra.mxu0 %v5487
  %v5489 = vpop.f32.mrf.mxu0
  %v5490 = vadd.f32 %v5459, %v5489
  %5491 = vdwg.mxu0
  %5492 = vmatpush.msra.mxu0 0.0
  %5493 = vmatpush.msra.mxu0 0.0
  %5494 = vmatpush.msra.mxu0 0.0
  %5495 = vmatpush.msra.mxu0 0.0
  %5496 = vmatpush.msra.mxu0 0.0
  %5497 = vmatpush.msra.mxu0 0.0
  %5498 = vmatpush.msra.mxu0 0.0
  %5499 = vmatpush.msra.mxu0 0.0
  %5500 = vmatpush.msra.mxu0 0.0
  %5501 = vmatpush.msra.mxu0 0.0
  %5502 = vmatpush.msra.mxu0 0.0
  %5503 = vmatpush.msra.mxu0 0.0
  %5504 = vmatpush.msra.mxu0 0.0
  %5505 = vmatpush.msra.mxu0 0.0
  %v5506 = vand.u32 %v5389, 4294901760
  %5507 = vmatpush.msra.mxu0 %v5506
  %v5508 = vand.u32 %v5386, 4294901760
  %5509 = vmatpush.msra.mxu0 %v5508
  %v5510 = vand.u32 %v4500, 4294901760
  %v5511 = vsub.f32 %v4500, %v5510
  %v5512 = vand.u32 %v5511, 4294901760
  %5513 = vmatmul.f32.gmra.mxu0 %v5512
  %v5514 = vpop.f32.mrf.mxu0
  %v5515 = vadd.f32 %v5485, %v5514
  %v5516 = vand.u32 %v4503, 4294901760
  %v5517 = vsub.f32 %v4503, %v5516
  %v5518 = vand.u32 %v5517, 4294901760
  %5519 = vmatmul.f32.gmra.mxu0 %v5518
  %v5520 = vpop.f32.mrf.mxu0
  %v5521 = vadd.f32 %v5490, %v5520
  %5522 = vdwg.mxu0
  %5523 = vmatpush.msra.mxu0 0.0
  %5524 = vmatpush.msra.mxu0 0.0
  %5525 = vmatpush.msra.mxu0 0.0
  %5526 = vmatpush.msra.mxu0 0.0
  %5527 = vmatpush.msra.mxu0 0.0
  %5528 = vmatpush.msra.mxu0 0.0
  %5529 = vmatpush.msra.mxu0 0.0
  %5530 = vmatpush.msra.mxu0 0.0
  %5531 = vmatpush.msra.mxu0 0.0
  %5532 = vmatpush.msra.mxu0 0.0
  %5533 = vmatpush.msra.mxu0 0.0
  %5534 = vmatpush.msra.mxu0 0.0
  %5535 = vmatpush.msra.mxu0 0.0
  %5536 = vmatpush.msra.mxu0 0.0
  %v5537 = vand.u32 %v5389, 4294901760
  %v5538 = vsub.f32 %v5389, %v5537
  %v5539 = vand.u32 %v5538, 4294901760
  %5540 = vmatpush.msra.mxu0 %v5539
  %v5541 = vand.u32 %v5386, 4294901760
  %v5542 = vsub.f32 %v5386, %v5541
  %v5543 = vand.u32 %v5542, 4294901760
  %5544 = vmatpush.msra.mxu0 %v5543
  %v5545 = vand.u32 %v4500, 4294901760
  %5546 = vmatmul.f32.gmra.mxu0 %v5545
  %v5547 = vpop.f32.mrf.mxu0
  %v5548 = vadd.f32 %v5515, %v5547
  %v5549 = vand.u32 %v4503, 4294901760
  %5550 = vmatmul.f32.gmra.mxu0 %v5549
  %v5551 = vpop.f32.mrf.mxu0
  %v5552 = vadd.f32 %v5521, %v5551
  %5553 = vdwg.mxu0
  %5554 = vmatpush.msra.mxu0 0.0
  %5555 = vmatpush.msra.mxu0 0.0
  %5556 = vmatpush.msra.mxu0 0.0
  %5557 = vmatpush.msra.mxu0 0.0
  %5558 = vmatpush.msra.mxu0 0.0
  %5559 = vmatpush.msra.mxu0 0.0
  %5560 = vmatpush.msra.mxu0 0.0
  %5561 = vmatpush.msra.mxu0 0.0
  %5562 = vmatpush.msra.mxu0 0.0
  %5563 = vmatpush.msra.mxu0 0.0
  %5564 = vmatpush.msra.mxu0 0.0
  %5565 = vmatpush.msra.mxu0 0.0
  %5566 = vmatpush.msra.mxu0 0.0
  %5567 = vmatpush.msra.mxu0 0.0
  %v5568 = vand.u32 %v5389, 4294901760
  %5569 = vmatpush.msra.mxu0 %v5568
  %v5570 = vand.u32 %v5386, 4294901760
  %5571 = vmatpush.msra.mxu0 %v5570
  %v5572 = vand.u32 %v4500, 4294901760
  %5573 = vmatmul.f32.gmra.mxu0 %v5572
  %v5574 = vpop.f32.mrf.mxu0
  %v5575 = vadd.f32 %v5548, %v5574
  %v5576 = vand.u32 %v4503, 4294901760
  %5577 = vmatmul.f32.gmra.mxu0 %v5576
  %v5578 = vpop.f32.mrf.mxu0
  %v5579 = vadd.f32 %v5552, %v5578
  %5580 = vdwg.mxu0
  %v5581 = vmax.f32 %v5379, %v5575
  %v5582 = vmax.f32 %v5383, %v5579
  %s5583 = scalar_lea.vmem %s13, 32
  %v5584 = vld [vmem:[%s5583] sm:$0xff]
  %v5585 = vld [vmem:[%s5583 + $0x8] sm:$0xff]
  %v5586 = vld [vmem:[%s5583 + $0x10] sm:$0xff]
  %v5587 = vld [vmem:[%s5583 + $0x18] sm:$0xff]
  %v5589 = vsel %vm4900, %v5584, 0
  %v5592 = vsel %vm4900, %v5585, 0
  %v5595 = vsel %vm4900, %v5586, 0
  %v5598 = vsel %vm4900, %v5587, 0
  %5600 = vmatpush.msra.mxu0 0.0
  %5601 = vmatpush.msra.mxu0 0.0
  %5602 = vmatpush.msra.mxu0 0.0
  %5603 = vmatpush.msra.mxu0 0.0
  %5604 = vmatpush.msra.mxu0 0.0
  %5605 = vmatpush.msra.mxu0 0.0
  %5606 = vmatpush.msra.mxu0 0.0
  %5607 = vmatpush.msra.mxu0 0.0
  %5608 = vmatpush.msra.mxu0 0.0
  %5609 = vmatpush.msra.mxu0 0.0
  %5610 = vmatpush.msra.mxu0 0.0
  %5611 = vmatpush.msra.mxu0 0.0
  %5612 = vmatpush.msra.mxu0 0.0
  %5613 = vmatpush.msra.mxu0 0.0
  %v5614 = vand.u32 %v5582, 4294901760
  %5615 = vmatpush.msra.mxu0 %v5614
  %v5616 = vand.u32 %v5581, 4294901760
  %5617 = vmatpush.msra.mxu0 %v5616
  %v5618 = vand.u32 %v5589, 4294901760
  %v5619 = vsub.f32 %v5589, %v5618
  %v5620 = vand.u32 %v5619, 4294901760
  %v5621 = vsub.f32 %v5619, %v5620
  %v5622 = vand.u32 %v5621, 4294901760
  %5623 = vmatmul.f32.gmra.mxu0 %v5622
  %v5624 = vpop.f32.mrf.mxu0
  %v5625 = vadd.f32 0.0, %v5624
  %v5626 = vand.u32 %v5592, 4294901760
  %v5627 = vsub.f32 %v5592, %v5626
  %v5628 = vand.u32 %v5627, 4294901760
  %v5629 = vsub.f32 %v5627, %v5628
  %v5630 = vand.u32 %v5629, 4294901760
  %5631 = vmatmul.f32.gmra.mxu0 %v5630
  %v5632 = vpop.f32.mrf.mxu0
  %v5633 = vadd.f32 0.0, %v5632
  %v5634 = vand.u32 %v5595, 4294901760
  %v5635 = vsub.f32 %v5595, %v5634
  %v5636 = vand.u32 %v5635, 4294901760
  %v5637 = vsub.f32 %v5635, %v5636
  %v5638 = vand.u32 %v5637, 4294901760
  %5639 = vmatmul.f32.gmra.mxu0 %v5638
  %v5640 = vpop.f32.mrf.mxu0
  %v5641 = vadd.f32 0.0, %v5640
  %v5642 = vand.u32 %v5598, 4294901760
  %v5643 = vsub.f32 %v5598, %v5642
  %v5644 = vand.u32 %v5643, 4294901760
  %v5645 = vsub.f32 %v5643, %v5644
  %v5646 = vand.u32 %v5645, 4294901760
  %5647 = vmatmul.f32.gmra.mxu0 %v5646
  %v5648 = vpop.f32.mrf.mxu0
  %v5649 = vadd.f32 0.0, %v5648
  %5650 = vdwg.mxu0
  %5651 = vmatpush.msra.mxu0 0.0
  %5652 = vmatpush.msra.mxu0 0.0
  %5653 = vmatpush.msra.mxu0 0.0
  %5654 = vmatpush.msra.mxu0 0.0
  %5655 = vmatpush.msra.mxu0 0.0
  %5656 = vmatpush.msra.mxu0 0.0
  %5657 = vmatpush.msra.mxu0 0.0
  %5658 = vmatpush.msra.mxu0 0.0
  %5659 = vmatpush.msra.mxu0 0.0
  %5660 = vmatpush.msra.mxu0 0.0
  %5661 = vmatpush.msra.mxu0 0.0
  %5662 = vmatpush.msra.mxu0 0.0
  %5663 = vmatpush.msra.mxu0 0.0
  %5664 = vmatpush.msra.mxu0 0.0
  %v5665 = vand.u32 %v5582, 4294901760
  %v5666 = vsub.f32 %v5582, %v5665
  %v5667 = vand.u32 %v5666, 4294901760
  %v5668 = vsub.f32 %v5666, %v5667
  %v5669 = vand.u32 %v5668, 4294901760
  %5670 = vmatpush.msra.mxu0 %v5669
  %v5671 = vand.u32 %v5581, 4294901760
  %v5672 = vsub.f32 %v5581, %v5671
  %v5673 = vand.u32 %v5672, 4294901760
  %v5674 = vsub.f32 %v5672, %v5673
  %v5675 = vand.u32 %v5674, 4294901760
  %5676 = vmatpush.msra.mxu0 %v5675
  %v5677 = vand.u32 %v5589, 4294901760
  %5678 = vmatmul.f32.gmra.mxu0 %v5677
  %v5679 = vpop.f32.mrf.mxu0
  %v5680 = vadd.f32 %v5625, %v5679
  %v5681 = vand.u32 %v5592, 4294901760
  %5682 = vmatmul.f32.gmra.mxu0 %v5681
  %v5683 = vpop.f32.mrf.mxu0
  %v5684 = vadd.f32 %v5633, %v5683
  %v5685 = vand.u32 %v5595, 4294901760
  %5686 = vmatmul.f32.gmra.mxu0 %v5685
  %v5687 = vpop.f32.mrf.mxu0
  %v5688 = vadd.f32 %v5641, %v5687
  %v5689 = vand.u32 %v5598, 4294901760
  %5690 = vmatmul.f32.gmra.mxu0 %v5689
  %v5691 = vpop.f32.mrf.mxu0
  %v5692 = vadd.f32 %v5649, %v5691
  %5693 = vdwg.mxu0
  %5694 = vmatpush.msra.mxu0 0.0
  %5695 = vmatpush.msra.mxu0 0.0
  %5696 = vmatpush.msra.mxu0 0.0
  %5697 = vmatpush.msra.mxu0 0.0
  %5698 = vmatpush.msra.mxu0 0.0
  %5699 = vmatpush.msra.mxu0 0.0
  %5700 = vmatpush.msra.mxu0 0.0
  %5701 = vmatpush.msra.mxu0 0.0
  %5702 = vmatpush.msra.mxu0 0.0
  %5703 = vmatpush.msra.mxu0 0.0
  %5704 = vmatpush.msra.mxu0 0.0
  %5705 = vmatpush.msra.mxu0 0.0
  %5706 = vmatpush.msra.mxu0 0.0
  %5707 = vmatpush.msra.mxu0 0.0
  %v5708 = vand.u32 %v5582, 4294901760
  %v5709 = vsub.f32 %v5582, %v5708
  %5710 = vmatpush.msra.mxu0 %v5709
  %v5711 = vand.u32 %v5581, 4294901760
  %v5712 = vsub.f32 %v5581, %v5711
  %5713 = vmatpush.msra.mxu0 %v5712
  %v5714 = vand.u32 %v5589, 4294901760
  %v5715 = vsub.f32 %v5589, %v5714
  %5716 = vmatmul.f32.gmra.mxu0 %v5715
  %v5717 = vpop.f32.mrf.mxu0
  %v5718 = vadd.f32 %v5680, %v5717
  %v5719 = vand.u32 %v5592, 4294901760
  %v5720 = vsub.f32 %v5592, %v5719
  %5721 = vmatmul.f32.gmra.mxu0 %v5720
  %v5722 = vpop.f32.mrf.mxu0
  %v5723 = vadd.f32 %v5684, %v5722
  %v5724 = vand.u32 %v5595, 4294901760
  %v5725 = vsub.f32 %v5595, %v5724
  %5726 = vmatmul.f32.gmra.mxu0 %v5725
  %v5727 = vpop.f32.mrf.mxu0
  %v5728 = vadd.f32 %v5688, %v5727
  %v5729 = vand.u32 %v5598, 4294901760
  %v5730 = vsub.f32 %v5598, %v5729
  %5731 = vmatmul.f32.gmra.mxu0 %v5730
  %v5732 = vpop.f32.mrf.mxu0
  %v5733 = vadd.f32 %v5692, %v5732
  %5734 = vdwg.mxu0
  %5735 = vmatpush.msra.mxu0 0.0
  %5736 = vmatpush.msra.mxu0 0.0
  %5737 = vmatpush.msra.mxu0 0.0
  %5738 = vmatpush.msra.mxu0 0.0
  %5739 = vmatpush.msra.mxu0 0.0
  %5740 = vmatpush.msra.mxu0 0.0
  %5741 = vmatpush.msra.mxu0 0.0
  %5742 = vmatpush.msra.mxu0 0.0
  %5743 = vmatpush.msra.mxu0 0.0
  %5744 = vmatpush.msra.mxu0 0.0
  %5745 = vmatpush.msra.mxu0 0.0
  %5746 = vmatpush.msra.mxu0 0.0
  %5747 = vmatpush.msra.mxu0 0.0
  %5748 = vmatpush.msra.mxu0 0.0
  %v5749 = vand.u32 %v5582, 4294901760
  %5750 = vmatpush.msra.mxu0 %v5749
  %v5751 = vand.u32 %v5581, 4294901760
  %5752 = vmatpush.msra.mxu0 %v5751
  %v5753 = vand.u32 %v5589, 4294901760
  %v5754 = vsub.f32 %v5589, %v5753
  %v5755 = vand.u32 %v5754, 4294901760
  %5756 = vmatmul.f32.gmra.mxu0 %v5755
  %v5757 = vpop.f32.mrf.mxu0
  %v5758 = vadd.f32 %v5718, %v5757
  %v5759 = vand.u32 %v5592, 4294901760
  %v5760 = vsub.f32 %v5592, %v5759
  %v5761 = vand.u32 %v5760, 4294901760
  %5762 = vmatmul.f32.gmra.mxu0 %v5761
  %v5763 = vpop.f32.mrf.mxu0
  %v5764 = vadd.f32 %v5723, %v5763
  %v5765 = vand.u32 %v5595, 4294901760
  %v5766 = vsub.f32 %v5595, %v5765
  %v5767 = vand.u32 %v5766, 4294901760
  %5768 = vmatmul.f32.gmra.mxu0 %v5767
  %v5769 = vpop.f32.mrf.mxu0
  %v5770 = vadd.f32 %v5728, %v5769
  %v5771 = vand.u32 %v5598, 4294901760
  %v5772 = vsub.f32 %v5598, %v5771
  %v5773 = vand.u32 %v5772, 4294901760
  %5774 = vmatmul.f32.gmra.mxu0 %v5773
  %v5775 = vpop.f32.mrf.mxu0
  %v5776 = vadd.f32 %v5733, %v5775
  %5777 = vdwg.mxu0
  %5778 = vmatpush.msra.mxu0 0.0
  %5779 = vmatpush.msra.mxu0 0.0
  %5780 = vmatpush.msra.mxu0 0.0
  %5781 = vmatpush.msra.mxu0 0.0
  %5782 = vmatpush.msra.mxu0 0.0
  %5783 = vmatpush.msra.mxu0 0.0
  %5784 = vmatpush.msra.mxu0 0.0
  %5785 = vmatpush.msra.mxu0 0.0
  %5786 = vmatpush.msra.mxu0 0.0
  %5787 = vmatpush.msra.mxu0 0.0
  %5788 = vmatpush.msra.mxu0 0.0
  %5789 = vmatpush.msra.mxu0 0.0
  %5790 = vmatpush.msra.mxu0 0.0
  %5791 = vmatpush.msra.mxu0 0.0
  %v5792 = vand.u32 %v5582, 4294901760
  %v5793 = vsub.f32 %v5582, %v5792
  %v5794 = vand.u32 %v5793, 4294901760
  %5795 = vmatpush.msra.mxu0 %v5794
  %v5796 = vand.u32 %v5581, 4294901760
  %v5797 = vsub.f32 %v5581, %v5796
  %v5798 = vand.u32 %v5797, 4294901760
  %5799 = vmatpush.msra.mxu0 %v5798
  %v5800 = vand.u32 %v5589, 4294901760
  %5801 = vmatmul.f32.gmra.mxu0 %v5800
  %v5802 = vpop.f32.mrf.mxu0
  %v5803 = vadd.f32 %v5758, %v5802
  %v5804 = vand.u32 %v5592, 4294901760
  %5805 = vmatmul.f32.gmra.mxu0 %v5804
  %v5806 = vpop.f32.mrf.mxu0
  %v5807 = vadd.f32 %v5764, %v5806
  %v5808 = vand.u32 %v5595, 4294901760
  %5809 = vmatmul.f32.gmra.mxu0 %v5808
  %v5810 = vpop.f32.mrf.mxu0
  %v5811 = vadd.f32 %v5770, %v5810
  %v5812 = vand.u32 %v5598, 4294901760
  %5813 = vmatmul.f32.gmra.mxu0 %v5812
  %v5814 = vpop.f32.mrf.mxu0
  %v5815 = vadd.f32 %v5776, %v5814
  %5816 = vdwg.mxu0
  %5817 = vmatpush.msra.mxu0 0.0
  %5818 = vmatpush.msra.mxu0 0.0
  %5819 = vmatpush.msra.mxu0 0.0
  %5820 = vmatpush.msra.mxu0 0.0
  %5821 = vmatpush.msra.mxu0 0.0
  %5822 = vmatpush.msra.mxu0 0.0
  %5823 = vmatpush.msra.mxu0 0.0
  %5824 = vmatpush.msra.mxu0 0.0
  %5825 = vmatpush.msra.mxu0 0.0
  %5826 = vmatpush.msra.mxu0 0.0
  %5827 = vmatpush.msra.mxu0 0.0
  %5828 = vmatpush.msra.mxu0 0.0
  %5829 = vmatpush.msra.mxu0 0.0
  %5830 = vmatpush.msra.mxu0 0.0
  %v5831 = vand.u32 %v5582, 4294901760
  %5832 = vmatpush.msra.mxu0 %v5831
  %v5833 = vand.u32 %v5581, 4294901760
  %5834 = vmatpush.msra.mxu0 %v5833
  %v5835 = vand.u32 %v5589, 4294901760
  %5836 = vmatmul.f32.gmra.mxu0 %v5835
  %v5837 = vpop.f32.mrf.mxu0
  %v5838 = vadd.f32 %v5803, %v5837
  %v5839 = vand.u32 %v5592, 4294901760
  %5840 = vmatmul.f32.gmra.mxu0 %v5839
  %v5841 = vpop.f32.mrf.mxu0
  %v5842 = vadd.f32 %v5807, %v5841
  %v5843 = vand.u32 %v5595, 4294901760
  %5844 = vmatmul.f32.gmra.mxu0 %v5843
  %v5845 = vpop.f32.mrf.mxu0
  %v5846 = vadd.f32 %v5811, %v5845
  %v5847 = vand.u32 %v5598, 4294901760
  %5848 = vmatmul.f32.gmra.mxu0 %v5847
  %v5849 = vpop.f32.mrf.mxu0
  %v5850 = vadd.f32 %v5815, %v5849
  %5851 = vdwg.mxu0
  %v5852 = vadd.f32 %v5185, %v5838
  %v5853 = vadd.f32 %v5186, %v5842
  %v5854 = vadd.f32 %v5187, %v5846
  %v5855 = vadd.f32 %v5188, %v5850
  %v5856 = vmul.f32 %v5852, 0.5
  %v5857 = vmul.f32 %v5853, 0.5
  %v5858 = vmul.f32 %v5854, 0.5
  %v5859 = vmul.f32 %v5855, 0.5
  %v5860 = vtanh.pop %v5856
  %v5861 = vtanh.pop %v5857
  %v5862 = vtanh.pop %v5858
  %v5863 = vtanh.pop %v5859
  %v5864 = vmul.f32 %v5860, 0.5
  %v5865 = vmul.f32 %v5861, 0.5
  %v5866 = vmul.f32 %v5862, 0.5
  %v5867 = vmul.f32 %v5863, 0.5
  %v5868 = vadd.f32 %v5864, 0.5
  %v5869 = vadd.f32 %v5865, 0.5
  %v5870 = vadd.f32 %v5866, 0.5
  %v5871 = vadd.f32 %v5867, 0.5
  %v5872 = vld [vmem:[%s15] sm:$0xff]
  %v5873 = vld [vmem:[%s15 + $0x8] sm:$0x3]
  %v5874 = vld [vmem:[%s16] sm:$0xff]
  %v5875 = vld [vmem:[%s16 + $0x8] sm:$0x3]
  %5877 = vset.pattern.permute.xlu0 0
  %5878 = vperm.xlu0 %5877, %v5874
  %v5879 = vpop.permute.xlu0 %5878
  %5882 = vset.pattern.permute.xlu0 0
  %5883 = vperm.xlu0 %5882, %v5875
  %v5884 = vpop.permute.xlu0 %5883
  %v5887 = vsel %vm1238, %v5872, 0
  %v5890 = vsel %vm1238, %v5873, 0
  %5892 = vmatpush.msra.mxu0 0.0
  %5893 = vmatpush.msra.mxu0 0.0
  %5894 = vmatpush.msra.mxu0 0.0
  %5895 = vmatpush.msra.mxu0 0.0
  %5896 = vmatpush.msra.mxu0 0.0
  %5897 = vmatpush.msra.mxu0 0.0
  %5898 = vmatpush.msra.mxu0 0.0
  %5899 = vmatpush.msra.mxu0 0.0
  %5900 = vmatpush.msra.mxu0 0.0
  %5901 = vmatpush.msra.mxu0 0.0
  %5902 = vmatpush.msra.mxu0 0.0
  %5903 = vmatpush.msra.mxu0 0.0
  %v5904 = vand.u32 %v5871, 4294901760
  %5905 = vmatpush.msra.mxu0 %v5904
  %v5906 = vand.u32 %v5870, 4294901760
  %5907 = vmatpush.msra.mxu0 %v5906
  %v5908 = vand.u32 %v5869, 4294901760
  %5909 = vmatpush.msra.mxu0 %v5908
  %v5910 = vand.u32 %v5868, 4294901760
  %5911 = vmatpush.msra.mxu0 %v5910
  %v5912 = vand.u32 %v5887, 4294901760
  %v5913 = vsub.f32 %v5887, %v5912
  %v5914 = vand.u32 %v5913, 4294901760
  %v5915 = vsub.f32 %v5913, %v5914
  %v5916 = vand.u32 %v5915, 4294901760
  %5917 = vmatmul.f32.gmra.mxu0 %v5916
  %v5918 = vpop.f32.mrf.mxu0
  %v5919 = vadd.f32 %v5879, %v5918
  %v5920 = vand.u32 %v5890, 4294901760
  %v5921 = vsub.f32 %v5890, %v5920
  %v5922 = vand.u32 %v5921, 4294901760
  %v5923 = vsub.f32 %v5921, %v5922
  %v5924 = vand.u32 %v5923, 4294901760
  %5925 = vmatmul.f32.gmra.mxu0 %v5924
  %v5926 = vpop.f32.mrf.mxu0
  %v5927 = vadd.f32 %v5884, %v5926
  %5928 = vdwg.mxu0
  %5929 = vmatpush.msra.mxu0 0.0
  %5930 = vmatpush.msra.mxu0 0.0
  %5931 = vmatpush.msra.mxu0 0.0
  %5932 = vmatpush.msra.mxu0 0.0
  %5933 = vmatpush.msra.mxu0 0.0
  %5934 = vmatpush.msra.mxu0 0.0
  %5935 = vmatpush.msra.mxu0 0.0
  %5936 = vmatpush.msra.mxu0 0.0
  %5937 = vmatpush.msra.mxu0 0.0
  %5938 = vmatpush.msra.mxu0 0.0
  %5939 = vmatpush.msra.mxu0 0.0
  %5940 = vmatpush.msra.mxu0 0.0
  %v5941 = vand.u32 %v5871, 4294901760
  %v5942 = vsub.f32 %v5871, %v5941
  %v5943 = vand.u32 %v5942, 4294901760
  %v5944 = vsub.f32 %v5942, %v5943
  %v5945 = vand.u32 %v5944, 4294901760
  %5946 = vmatpush.msra.mxu0 %v5945
  %v5947 = vand.u32 %v5870, 4294901760
  %v5948 = vsub.f32 %v5870, %v5947
  %v5949 = vand.u32 %v5948, 4294901760
  %v5950 = vsub.f32 %v5948, %v5949
  %v5951 = vand.u32 %v5950, 4294901760
  %5952 = vmatpush.msra.mxu0 %v5951
  %v5953 = vand.u32 %v5869, 4294901760
  %v5954 = vsub.f32 %v5869, %v5953
  %v5955 = vand.u32 %v5954, 4294901760
  %v5956 = vsub.f32 %v5954, %v5955
  %v5957 = vand.u32 %v5956, 4294901760
  %5958 = vmatpush.msra.mxu0 %v5957
  %v5959 = vand.u32 %v5868, 4294901760
  %v5960 = vsub.f32 %v5868, %v5959
  %v5961 = vand.u32 %v5960, 4294901760
  %v5962 = vsub.f32 %v5960, %v5961
  %v5963 = vand.u32 %v5962, 4294901760
  %5964 = vmatpush.msra.mxu0 %v5963
  %v5965 = vand.u32 %v5887, 4294901760
  %5966 = vmatmul.f32.gmra.mxu0 %v5965
  %v5967 = vpop.f32.mrf.mxu0
  %v5968 = vadd.f32 %v5919, %v5967
  %v5969 = vand.u32 %v5890, 4294901760
  %5970 = vmatmul.f32.gmra.mxu0 %v5969
  %v5971 = vpop.f32.mrf.mxu0
  %v5972 = vadd.f32 %v5927, %v5971
  %5973 = vdwg.mxu0
  %5974 = vmatpush.msra.mxu0 0.0
  %5975 = vmatpush.msra.mxu0 0.0
  %5976 = vmatpush.msra.mxu0 0.0
  %5977 = vmatpush.msra.mxu0 0.0
  %5978 = vmatpush.msra.mxu0 0.0
  %5979 = vmatpush.msra.mxu0 0.0
  %5980 = vmatpush.msra.mxu0 0.0
  %5981 = vmatpush.msra.mxu0 0.0
  %5982 = vmatpush.msra.mxu0 0.0
  %5983 = vmatpush.msra.mxu0 0.0
  %5984 = vmatpush.msra.mxu0 0.0
  %5985 = vmatpush.msra.mxu0 0.0
  %v5986 = vand.u32 %v5871, 4294901760
  %v5987 = vsub.f32 %v5871, %v5986
  %5988 = vmatpush.msra.mxu0 %v5987
  %v5989 = vand.u32 %v5870, 4294901760
  %v5990 = vsub.f32 %v5870, %v5989
  %5991 = vmatpush.msra.mxu0 %v5990
  %v5992 = vand.u32 %v5869, 4294901760
  %v5993 = vsub.f32 %v5869, %v5992
  %5994 = vmatpush.msra.mxu0 %v5993
  %v5995 = vand.u32 %v5868, 4294901760
  %v5996 = vsub.f32 %v5868, %v5995
  %5997 = vmatpush.msra.mxu0 %v5996
  %v5998 = vand.u32 %v5887, 4294901760
  %v5999 = vsub.f32 %v5887, %v5998
  %6000 = vmatmul.f32.gmra.mxu0 %v5999
  %v6001 = vpop.f32.mrf.mxu0
  %v6002 = vadd.f32 %v5968, %v6001
  %v6003 = vand.u32 %v5890, 4294901760
  %v6004 = vsub.f32 %v5890, %v6003
  %6005 = vmatmul.f32.gmra.mxu0 %v6004
  %v6006 = vpop.f32.mrf.mxu0
  %v6007 = vadd.f32 %v5972, %v6006
  %6008 = vdwg.mxu0
  %6009 = vmatpush.msra.mxu0 0.0
  %6010 = vmatpush.msra.mxu0 0.0
  %6011 = vmatpush.msra.mxu0 0.0
  %6012 = vmatpush.msra.mxu0 0.0
  %6013 = vmatpush.msra.mxu0 0.0
  %6014 = vmatpush.msra.mxu0 0.0
  %6015 = vmatpush.msra.mxu0 0.0
  %6016 = vmatpush.msra.mxu0 0.0
  %6017 = vmatpush.msra.mxu0 0.0
  %6018 = vmatpush.msra.mxu0 0.0
  %6019 = vmatpush.msra.mxu0 0.0
  %6020 = vmatpush.msra.mxu0 0.0
  %v6021 = vand.u32 %v5871, 4294901760
  %6022 = vmatpush.msra.mxu0 %v6021
  %v6023 = vand.u32 %v5870, 4294901760
  %6024 = vmatpush.msra.mxu0 %v6023
  %v6025 = vand.u32 %v5869, 4294901760
  %6026 = vmatpush.msra.mxu0 %v6025
  %v6027 = vand.u32 %v5868, 4294901760
  %6028 = vmatpush.msra.mxu0 %v6027
  %v6029 = vand.u32 %v5887, 4294901760
  %v6030 = vsub.f32 %v5887, %v6029
  %v6031 = vand.u32 %v6030, 4294901760
  %6032 = vmatmul.f32.gmra.mxu0 %v6031
  %v6033 = vpop.f32.mrf.mxu0
  %v6034 = vadd.f32 %v6002, %v6033
  %v6035 = vand.u32 %v5890, 4294901760
  %v6036 = vsub.f32 %v5890, %v6035
  %v6037 = vand.u32 %v6036, 4294901760
  %6038 = vmatmul.f32.gmra.mxu0 %v6037
  %v6039 = vpop.f32.mrf.mxu0
  %v6040 = vadd.f32 %v6007, %v6039
  %6041 = vdwg.mxu0
  %6042 = vmatpush.msra.mxu0 0.0
  %6043 = vmatpush.msra.mxu0 0.0
  %6044 = vmatpush.msra.mxu0 0.0
  %6045 = vmatpush.msra.mxu0 0.0
  %6046 = vmatpush.msra.mxu0 0.0
  %6047 = vmatpush.msra.mxu0 0.0
  %6048 = vmatpush.msra.mxu0 0.0
  %6049 = vmatpush.msra.mxu0 0.0
  %6050 = vmatpush.msra.mxu0 0.0
  %6051 = vmatpush.msra.mxu0 0.0
  %6052 = vmatpush.msra.mxu0 0.0
  %6053 = vmatpush.msra.mxu0 0.0
  %v6054 = vand.u32 %v5871, 4294901760
  %v6055 = vsub.f32 %v5871, %v6054
  %v6056 = vand.u32 %v6055, 4294901760
  %6057 = vmatpush.msra.mxu0 %v6056
  %v6058 = vand.u32 %v5870, 4294901760
  %v6059 = vsub.f32 %v5870, %v6058
  %v6060 = vand.u32 %v6059, 4294901760
  %6061 = vmatpush.msra.mxu0 %v6060
  %v6062 = vand.u32 %v5869, 4294901760
  %v6063 = vsub.f32 %v5869, %v6062
  %v6064 = vand.u32 %v6063, 4294901760
  %6065 = vmatpush.msra.mxu0 %v6064
  %v6066 = vand.u32 %v5868, 4294901760
  %v6067 = vsub.f32 %v5868, %v6066
  %v6068 = vand.u32 %v6067, 4294901760
  %6069 = vmatpush.msra.mxu0 %v6068
  %v6070 = vand.u32 %v5887, 4294901760
  %6071 = vmatmul.f32.gmra.mxu0 %v6070
  %v6072 = vpop.f32.mrf.mxu0
  %v6073 = vadd.f32 %v6034, %v6072
  %v6074 = vand.u32 %v5890, 4294901760
  %6075 = vmatmul.f32.gmra.mxu0 %v6074
  %v6076 = vpop.f32.mrf.mxu0
  %v6077 = vadd.f32 %v6040, %v6076
  %6078 = vdwg.mxu0
  %6079 = vmatpush.msra.mxu0 0.0
  %6080 = vmatpush.msra.mxu0 0.0
  %6081 = vmatpush.msra.mxu0 0.0
  %6082 = vmatpush.msra.mxu0 0.0
  %6083 = vmatpush.msra.mxu0 0.0
  %6084 = vmatpush.msra.mxu0 0.0
  %6085 = vmatpush.msra.mxu0 0.0
  %6086 = vmatpush.msra.mxu0 0.0
  %6087 = vmatpush.msra.mxu0 0.0
  %6088 = vmatpush.msra.mxu0 0.0
  %6089 = vmatpush.msra.mxu0 0.0
  %6090 = vmatpush.msra.mxu0 0.0
  %v6091 = vand.u32 %v5871, 4294901760
  %6092 = vmatpush.msra.mxu0 %v6091
  %v6093 = vand.u32 %v5870, 4294901760
  %6094 = vmatpush.msra.mxu0 %v6093
  %v6095 = vand.u32 %v5869, 4294901760
  %6096 = vmatpush.msra.mxu0 %v6095
  %v6097 = vand.u32 %v5868, 4294901760
  %6098 = vmatpush.msra.mxu0 %v6097
  %v6099 = vand.u32 %v5887, 4294901760
  %6100 = vmatmul.f32.gmra.mxu0 %v6099
  %v6101 = vpop.f32.mrf.mxu0
  %v6102 = vadd.f32 %v6073, %v6101
  %v6103 = vand.u32 %v5890, 4294901760
  %6104 = vmatmul.f32.gmra.mxu0 %v6103
  %v6105 = vpop.f32.mrf.mxu0
  %v6106 = vadd.f32 %v6077, %v6105
  %6107 = vdwg.mxu0
  %vm6108 = vcmask 15360
  %v6109 = vsel %vm6108, %v6102, -inf
  %vm6110 = vcmask 9216
  %v6111 = vsel %vm6110, %v6106, -inf
  %v6112 = vmax.f32 %v6109, %v6111
  %v6113 = vrot.slane %v6112, 4
  %v6114 = vmax.f32 %v6112, %v6113
  %v6115 = vrot.slane %v6114, 2
  %v6116 = vmax.f32 %v6114, %v6115
  %v6117 = vrot.slane %v6116, 1
  %v6118 = vmax.f32 %v6116, %v6117
  %v6119 = vsub.f32 %v6102, %v6118
  %v6120 = vsub.f32 %v6106, %v6118
  %v6121 = vmul.f32 %v6119, 1.442695
  %v6122 = vpow.pop %v6121
  %v6123 = vmul.f32 %v6120, 1.442695
  %v6124 = vpow.pop %v6123
  %v6125 = vsel %vm6108, %v6122, 0.0
  %v6126 = vsel %vm6110, %v6124, 0.0
  %v6127 = vadd.f32 %v6125, %v6126
  %v6128 = vrot.slane %v6127, 4
  %v6129 = vadd.f32 %v6127, %v6128
  %v6130 = vrot.slane %v6129, 2
  %v6131 = vadd.f32 %v6129, %v6130
  %v6132 = vrot.slane %v6131, 1
  %v6133 = vadd.f32 %v6131, %v6132
  %v6134 = vlog2.pop %v6133
  %v6135 = vmul.f32 %v6134, 0.6931472
  %v6136 = vsub.f32 %v6119, %v6135
  %v6137 = vsub.f32 %v6120, %v6135
  %6138 = vst.msk [vmem:[%s17] sm:$0xff] %vm6108, %v6136
  %6139 = vst.msk [vmem:[%s17 + $0x8] sm:$0x3] %vm6110, %v6137
  // Predicated region
  $region70: #{forward.1} parent=0 // pred_check
    _
  $region71: #{forward.1} parent=0 // pred_check_branch
    %6141 = sbr.rel (0) target = $region73
  $region72: #{forward.1} parent=0 // pred_region
    _
  $region73: #{forward.1} parent=0 // pred_fallthru
    _
  // Predicated region
  $region74: #{forward.1} parent=0 // pred_check
    _
  $region75: #{forward.1} parent=0 // pred_check_branch
    %6143 = sbr.rel (0) target = $region77
  $region76: #{forward.1} parent=0 // pred_region
    _
  $region77: #{forward.1} parent=0 // pred_fallthru
    _

</llo_original>
